<compile_context>
chip_gen: v6e
topology: v6e:2x2x1
jax: 0.10.0
libtpu: 0.0.40
codegen_flags: <defaults>
</compile_context>

<pallas_src>
import functools

import jax
import jax.numpy as jnp
from jax import lax
from jax.experimental import pallas as pl
from jax.experimental.pallas import tpu as pltpu


# ----------------------------- Pallas kernel --------------------------------

def _basic_block_kernel(xcol_ref, w1_ref, w2_ref, s1_ref, h1_ref, s2_ref, h2_ref,
                        wskip_ref, o_ref, y1s_ref, *, H, W, Cin, Cout, Cp):
    """One batch image per grid step.

    xcol_ref : (1, H*W, 9*Cin) f32   conv1 im2col, columns ordered (dy, dx, ci)
    w1_ref   : (9*Cin, Cp) f32       conv1 weights (rows ordered (dy, dx, ci))
    w2_ref   : (9*Cp, Cp)  bf16      conv2 weights (rows ordered (dy, dx, ci))
    s*/h*    : (1, Cp) f32           folded BN scale / (conv-bias + BN) shift
    wskip_ref: (9*Cin, Cp) f32       one-hot: centre-tap input channel ci -> lane ci
    o_ref    : (1, H*W, Cout) f32    dense block output (no lane padding in HBM)
    y1s_ref  : (3, H+2, W, Cp) bf16  VMEM scratch: 3 dx-pre-shifted copies of the
                                     1-pixel-haloed y1 (y1s[dx, r, c] == y1pad[r, c+dx])
    """
    HW = H * W
    xcol = xcol_ref[0]                                                # (HW, 9*Cin) f32

    # ---- conv1 + BN1 + ReLU: one MXU dot over the 36-column im2col -------------
    acc1 = jnp.dot(xcol, w1_ref[...], preferred_element_type=jnp.float32)
    y1 = jnp.maximum(acc1 * s1_ref[...] + h1_ref[...], 0.0)          # (HW, Cp) f32
    y1b = y1.astype(jnp.bfloat16).reshape(H, W, Cp)                  # cast ONCE

    # ---- stash y1 as 3 dx-pre-shifted bf16 copies; zero ONLY the halo ring ------
    zrow = jnp.zeros((1, W, Cp), jnp.bfloat16)
    zcol = jnp.zeros((H, 1, Cp), jnp.bfloat16)
    for dx in range(3):
        y1s_ref[dx, 0:1] = zrow                                      # top halo row
        y1s_ref[dx, H + 1:H + 2] = zrow                              # bottom halo row
    y1s_ref[1, 1:H + 1] = y1b                                        # centre (dx=1)
    y1s_ref[0, 1:H + 1, 0:1] = zcol                                  # left halo col
    y1s_ref[0, 1:H + 1, 1:W] = y1b[:, :W - 1]                        # shifted copy dx=0
    y1s_ref[2, 1:H + 1, W - 1:W] = zcol                              # right halo col
    y1s_ref[2, 1:H + 1, 0:W - 1] = y1b[:, 1:]                        # shifted copy dx=2

    # ---- conv2 + BN2: 9 shifted bf16 MXU dots, f32 accumulation -----------------
    acc2 = jnp.zeros((HW, Cp), jnp.float32)
    for dy in range(3):
        for dx in range(3):
            # Tile-aligned view: dy offsets by W (=16) sublanes, no relayout.
            lhs = y1s_ref[dx, dy:dy + H].reshape(HW, Cp)
            rhs = w2_ref[(dy * 3 + dx) * Cp:(dy * 3 + dx + 1) * Cp, :]
            acc2 = acc2 + jnp.dot(lhs, rhs, preferred_element_type=jnp.float32)

    # ---- residual skip (one small MXU dot), BN2 epilogue, final ReLU ------------
    # drop_path is Identity (p = 0); skip = cat([x, zeros]) channel-wise.
    skip = jnp.dot(xcol, wskip_ref[...], preferred_element_type=jnp.float32)
    out = jnp.maximum(acc2 * s2_ref[...] + h2_ref[...] + skip, 0.0)  # f32 (v5e-safe)
    o_ref[0] = out[:, :Cout]                                         # dense store


# ------------------------------- wrapper -------------------------------------

def basic_block_forward(x_nchw, params):
    """Pallas implementation of BasicBlock.forward (downsample=False, eval-mode BN)."""
    x = jnp.transpose(x_nchw, (0, 2, 3, 1)).astype(jnp.float32)      # NCHW -> NHWC
    N, H, W, Cin = x.shape
    Cout = params["w2"].shape[-1]
    Cp = max(128, ((Cout + 127) // 128) * 128)                       # lane-dense pad
    assert W % 8 == 0, "W must be sublane-aligned for the shifted-copy layout"

    # conv1 im2col: tiny (9*Cin columns), lane-dense, columns ordered (dy, dx, ci).
    xp = jnp.pad(x, ((0, 0), (1, 1), (1, 1), (0, 0)))
    cols = [xp[:, dy:dy + H, dx:dx + W, :] for dy in range(3) for dx in range(3)]
    xcol = jnp.concatenate(cols, axis=-1).reshape(N, H * W, 9 * Cin)

    def fold(bias, g, beta, m, v, eps=1e-5):
        scale = g / jnp.sqrt(v + eps)
        shift = (bias - m) * scale + beta                            # conv bias folded
        return (jnp.pad(scale, (0, Cp - Cout)).reshape(1, Cp),
                jnp.pad(shift, (0, Cp - Cout)).reshape(1, Cp))

    s1, h1 = fold(params["b1"], params["g1"], params["b1_bn"], params["m1"], params["v1"])
    s2, h2 = fold(params["b2"], params["g2"], params["b2_bn"], params["m2"], params["v2"])

    # conv weights (HWIO) -> flattened, zero-padded output lanes.
    w1 = jnp.pad(params["w1"], ((0, 0), (0, 0), (0, 0), (0, Cp - Cout)))
    w1 = w1.reshape(9 * Cin, Cp).astype(jnp.float32)                 # f32 MXU path
    w2 = jnp.pad(params["w2"], ((0, 0), (0, 0), (0, Cp - Cout), (0, Cp - Cout)))
    w2 = w2.reshape(9 * Cp, Cp).astype(jnp.bfloat16)                 # bf16 MXU path
    # One-hot skip matrix: centre-tap (dy=1, dx=1) input channel ci -> output lane ci.
    wskip = jnp.zeros((9 * Cin, Cp), jnp.float32)
    wskip = wskip.at[4 * Cin + jnp.arange(Cin), jnp.arange(Cin)].set(1.0)

    kernel = functools.partial(_basic_block_kernel, H=H, W=W, Cin=Cin, Cout=Cout, Cp=Cp)

    # grid=(N,), one image per step; weight/BN blocks have constant index maps so
    # they stay VMEM-resident (no re-DMA).  TODO(synk): for production feature-map
    # sizes, tile over output rows (v7x 64 MiB VMEM) and/or batch images per step.
    out = pl.pallas_call(
        kernel,
        out_shape=jax.ShapeDtypeStruct((N, H * W, Cout), jnp.float32),
        grid=(N,),
        in_specs=[
            pl.BlockSpec((1, H * W, 9 * Cin), lambda n: (n, 0, 0)),
            pl.BlockSpec((9 * Cin, Cp), lambda n: (0, 0)),
            pl.BlockSpec((9 * Cp, Cp), lambda n: (0, 0)),
            pl.BlockSpec((1, Cp), lambda n: (0, 0)),
            pl.BlockSpec((1, Cp), lambda n: (0, 0)),
            pl.BlockSpec((1, Cp), lambda n: (0, 0)),
            pl.BlockSpec((1, Cp), lambda n: (0, 0)),
            pl.BlockSpec((9 * Cin, Cp), lambda n: (0, 0)),
        ],
        out_specs=pl.BlockSpec((1, H * W, Cout), lambda n: (n, 0, 0)),
        scratch_shapes=[pltpu.VMEM((3, H + 2, W, Cp), jnp.bfloat16)],
        compiler_params=pltpu.CompilerParams(
            dimension_semantics=("parallel",),
            vmem_limit_bytes=32 * 1024 * 1024,
        ),
    )(xcol, w1, w2, s1, h1, s2, h2, wskip)

    out = out.reshape(N, H, W, Cout)                                 # free metadata
    return jnp.transpose(out, (0, 3, 1, 2))                          # NHWC -> NCHW


# --------------------------- pure-JAX reference ------------------------------

def basic_block_reference(x_nchw, params, eps=1e-5):
    x = jnp.transpose(x_nchw, (0, 2, 3, 1)).astype(jnp.float32)
    dn = ("NHWC", "HWIO", "NHWC")

    def conv(inp, w, b):
        return lax.conv_general_dilated(inp, w, (1, 1), "SAME",
                                        dimension_numbers=dn) + b

    def bn(y, g, be, m, v):
        return (y - m) / jnp.sqrt(v + eps) * g + be

    y = jnp.maximum(bn(conv(x, params["w1"], params["b1"]),
                       params["g1"], params["b1_bn"], params["m1"], params["v1"]), 0.0)
    y = bn(conv(y, params["w2"], params["b2"]),
           params["g2"], params["b2_bn"], params["m2"], params["v2"])
    Cout = params["w2"].shape[-1]
    skip = jnp.concatenate(
        [x, jnp.zeros(x.shape[:3] + (Cout - x.shape[-1],), jnp.float32)], axis=-1)
    y = jnp.maximum(y + skip, 0.0)
    return jnp.transpose(y, (0, 3, 1, 2))


# --------------------------------- main --------------------------------------

if __name__ == "__main__":
    key = jax.random.PRNGKey(0)
    N, Cin, Cout, H, W = 2, 4, 8, 16, 16

    ks = jax.random.split(key, 12)
    params = {
        # conv weights in HWIO layout (kh, kw, Cin, Cout); biases per channel.
        "w1": 0.1 * jax.random.normal(ks[0], (3, 3, Cin, Cout), jnp.float32),
        "b1": 0.1 * jax.random.normal(ks[1], (Cout,), jnp.float32),
        "w2": 0.1 * jax.random.normal(ks[2], (3, 3, Cout, Cout), jnp.float32),
        "b2": 0.1 * jax.random.normal(ks[3], (Cout,), jnp.float32),
        # BatchNorm1 (gamma, beta, running_mean, running_var)
        "g1": 1.0 + 0.1 * jax.random.normal(ks[4], (Cout,), jnp.float32),
        "b1_bn": 0.1 * jax.random.normal(ks[5], (Cout,), jnp.float32),
        "m1": 0.1 * jax.random.normal(ks[6], (Cout,), jnp.float32),
        "v1": 1.0 + 0.1 * jax.random.uniform(ks[7], (Cout,), jnp.float32),
        # BatchNorm2
        "g2": 1.0 + 0.1 * jax.random.normal(ks[8], (Cout,), jnp.float32),
        "b2_bn": 0.1 * jax.random.normal(ks[9], (Cout,), jnp.float32),
        "m2": 0.1 * jax.random.normal(ks[10], (Cout,), jnp.float32),
        "v2": 1.0 + 0.1 * jax.random.uniform(ks[11], (Cout,), jnp.float32),
    }

    x = jax.random.normal(key, (N, Cin, H, W), jnp.float32)   # NCHW, like PyTorch

    out = jax.jit(basic_block_forward)(x, params)
    out = jax.block_until_ready(out)

    ref = basic_block_reference(x, params)
    assert out.shape == (N, Cout, H, W)
    # conv2 uses bf16 MXU inputs (f32 accumulation), so tolerance is loosened vs f32.
    assert jnp.allclose(out, ref, atol=2e-2, rtol=2e-2), "mismatch vs JAX reference"

    print("KERNEL_OK")
</pallas_src>

<mosaic_0001>
module attributes {stable_mosaic.version = 11 : i64} {
  func.func @_basic_block_kernel(%arg0: i32, %arg1: memref<1x256x36xf32, #tpu.memory_space<vmem>>, %arg2: memref<36x128xf32, #tpu.memory_space<vmem>>, %arg3: memref<1152x128xbf16, #tpu.memory_space<vmem>>, %arg4: memref<1x128xf32, #tpu.memory_space<vmem>>, %arg5: memref<1x128xf32, #tpu.memory_space<vmem>>, %arg6: memref<1x128xf32, #tpu.memory_space<vmem>>, %arg7: memref<1x128xf32, #tpu.memory_space<vmem>>, %arg8: memref<36x128xf32, #tpu.memory_space<vmem>>, %arg9: memref<1x256x8xf32, #tpu.memory_space<vmem>>, %arg10: memref<3x18x16x128xbf16, #tpu.memory_space<vmem>>) attributes {dimension_semantics = [#tpu.dimension_semantics<parallel>], iteration_bounds = array<i64: 2>, scalar_prefetch = 0 : i64, scratch_operands = 1 : i64, tpu.core_type = #tpu.core_type<tc>, window_params = [{transform_indices = @transform_0, window_bounds = array<i64: 1, 256, 36>}, {pipeline_mode = #tpu.pipeline_mode<synchronous>, transform_indices = @transform_1, window_bounds = array<i64: 36, 128>}, {pipeline_mode = #tpu.pipeline_mode<synchronous>, transform_indices = @transform_2, window_bounds = array<i64: 1152, 128>}, {pipeline_mode = #tpu.pipeline_mode<synchronous>, transform_indices = @transform_3, window_bounds = array<i64: 1, 128>}, {pipeline_mode = #tpu.pipeline_mode<synchronous>, transform_indices = @transform_4, window_bounds = array<i64: 1, 128>}, {pipeline_mode = #tpu.pipeline_mode<synchronous>, transform_indices = @transform_5, window_bounds = array<i64: 1, 128>}, {pipeline_mode = #tpu.pipeline_mode<synchronous>, transform_indices = @transform_6, window_bounds = array<i64: 1, 128>}, {pipeline_mode = #tpu.pipeline_mode<synchronous>, transform_indices = @transform_7, window_bounds = array<i64: 36, 128>}, {transform_indices = @transform_8, window_bounds = array<i64: 1, 256, 8>}]} {
    %c0 = arith.constant 0 : index
    %c0_0 = arith.constant 0 : index
    %c0_1 = arith.constant 0 : index
    %0 = vector.load %arg1[%c0, %c0_0, %c0_1] : memref<1x256x36xf32, #tpu.memory_space<vmem>>, vector<1x256x36xf32>
    %1 = vector.shape_cast %0 : vector<1x256x36xf32> to vector<256x36xf32>
    %c0_2 = arith.constant 0 : index
    %c0_3 = arith.constant 0 : index
    %2 = vector.load %arg2[%c0_2, %c0_3] : memref<36x128xf32, #tpu.memory_space<vmem>>, vector<36x128xf32>
    %cst = arith.constant dense<0.000000e+00> : vector<256x128xf32>
    %3 = tpu.matmul %1, %2, %cst {dimension_numbers = #tpu.dot_dimension_numbers<[1], [0], [0], [1], [0, 0, 1, 1], [], []>} : vector<256x36xf32>, vector<36x128xf32>, vector<256x128xf32> -> vector<256x128xf32>
    %c0_4 = arith.constant 0 : index
    %c0_5 = arith.constant 0 : index
    %4 = vector.load %arg4[%c0_4, %c0_5] : memref<1x128xf32, #tpu.memory_space<vmem>>, vector<1x128xf32>
    %5 = vector.broadcast %4 : vector<1x128xf32> to vector<256x128xf32>
    %6 = arith.mulf %3, %5 : vector<256x128xf32>
    %c0_6 = arith.constant 0 : index
    %c0_7 = arith.constant 0 : index
    %7 = vector.load %arg5[%c0_6, %c0_7] : memref<1x128xf32, #tpu.memory_space<vmem>>, vector<1x128xf32>
    %8 = vector.broadcast %7 : vector<1x128xf32> to vector<256x128xf32>
    %9 = arith.addf %6, %8 : vector<256x128xf32>
    %cst_8 = arith.constant 0.000000e+00 : f32
    %10 = vector.broadcast %cst_8 : f32 to vector<256x128xf32>
    %11 = arith.maximumf %9, %10 : vector<256x128xf32>
    %12 = arith.truncf %11 : vector<256x128xf32> to vector<256x128xbf16>
    %13 = vector.shape_cast %12 : vector<256x128xbf16> to vector<16x16x128xbf16>
    %cst_9 = arith.constant 0.000000e+00 : bf16
    %14 = vector.broadcast %cst_9 : bf16 to vector<1x16x128xbf16>
    %cst_10 = arith.constant 0.000000e+00 : bf16
    %15 = vector.broadcast %cst_10 : bf16 to vector<16x1x128xbf16>
    %c0_11 = arith.constant 0 : index
    %c0_12 = arith.constant 0 : index
    %c0_13 = arith.constant 0 : index
    %c0_14 = arith.constant 0 : index
    %16 = vector.load %arg10[%c0_11, %c0_12, %c0_13, %c0_14] : memref<3x18x16x128xbf16, #tpu.memory_space<vmem>>, vector<1x1x16x128xbf16>
    %17 = vector.shape_cast %16 : vector<1x1x16x128xbf16> to vector<1x16x128xbf16>
    %18 = vector.shape_cast %14 : vector<1x16x128xbf16> to vector<1x1x16x128xbf16>
    tpu.vector_store %arg10[%c0_11, %c0_12, %c0_13, %c0_14], %18 {strides = array<i32>} : memref<3x18x16x128xbf16, #tpu.memory_space<vmem>>, vector<1x1x16x128xbf16>,
    %c0_15 = arith.constant 0 : index
    %c17 = arith.constant 17 : index
    %c0_16 = arith.constant 0 : index
    %c0_17 = arith.constant 0 : index
    %19 = vector.load %arg10[%c0_15, %c17, %c0_16, %c0_17] : memref<3x18x16x128xbf16, #tpu.memory_space<vmem>>, vector<1x1x16x128xbf16>
    %20 = vector.shape_cast %19 : vector<1x1x16x128xbf16> to vector<1x16x128xbf16>
    %21 = vector.shape_cast %14 : vector<1x16x128xbf16> to vector<1x1x16x128xbf16>
    tpu.vector_store %arg10[%c0_15, %c17, %c0_16, %c0_17], %21 {strides = array<i32>} : memref<3x18x16x128xbf16, #tpu.memory_space<vmem>>, vector<1x1x16x128xbf16>,
    %c1 = arith.constant 1 : index
    %c0_18 = arith.constant 0 : index
    %c0_19 = arith.constant 0 : index
    %c0_20 = arith.constant 0 : index
    %22 = vector.load %arg10[%c1, %c0_18, %c0_19, %c0_20] : memref<3x18x16x128xbf16, #tpu.memory_space<vmem>>, vector<1x1x16x128xbf16>
    %23 = vector.shape_cast %22 : vector<1x1x16x128xbf16> to vector<1x16x128xbf16>
    %24 = vector.shape_cast %14 : vector<1x16x128xbf16> to vector<1x1x16x128xbf16>
    tpu.vector_store %arg10[%c1, %c0_18, %c0_19, %c0_20], %24 {strides = array<i32>} : memref<3x18x16x128xbf16, #tpu.memory_space<vmem>>, vector<1x1x16x128xbf16>,
    %c1_21 = arith.constant 1 : index
    %c17_22 = arith.constant 17 : index
    %c0_23 = arith.constant 0 : index
    %c0_24 = arith.constant 0 : index
    %25 = vector.load %arg10[%c1_21, %c17_22, %c0_23, %c0_24] : memref<3x18x16x128xbf16, #tpu.memory_space<vmem>>, vector<1x1x16x128xbf16>
    %26 = vector.shape_cast %25 : vector<1x1x16x128xbf16> to vector<1x16x128xbf16>
    %27 = vector.shape_cast %14 : vector<1x16x128xbf16> to vector<1x1x16x128xbf16>
    tpu.vector_store %arg10[%c1_21, %c17_22, %c0_23, %c0_24], %27 {strides = array<i32>} : memref<3x18x16x128xbf16, #tpu.memory_space<vmem>>, vector<1x1x16x128xbf16>,
    %c2 = arith.constant 2 : index
    %c0_25 = arith.constant 0 : index
    %c0_26 = arith.constant 0 : index
    %c0_27 = arith.constant 0 : index
    %28 = vector.load %arg10[%c2, %c0_25, %c0_26, %c0_27] : memref<3x18x16x128xbf16, #tpu.memory_space<vmem>>, vector<1x1x16x128xbf16>
    %29 = vector.shape_cast %28 : vector<1x1x16x128xbf16> to vector<1x16x128xbf16>
    %30 = vector.shape_cast %14 : vector<1x16x128xbf16> to vector<1x1x16x128xbf16>
    tpu.vector_store %arg10[%c2, %c0_25, %c0_26, %c0_27], %30 {strides = array<i32>} : memref<3x18x16x128xbf16, #tpu.memory_space<vmem>>, vector<1x1x16x128xbf16>,
    %c2_28 = arith.constant 2 : index
    %c17_29 = arith.constant 17 : index
    %c0_30 = arith.constant 0 : index
    %c0_31 = arith.constant 0 : index
    %31 = vector.load %arg10[%c2_28, %c17_29, %c0_30, %c0_31] : memref<3x18x16x128xbf16, #tpu.memory_space<vmem>>, vector<1x1x16x128xbf16>
    %32 = vector.shape_cast %31 : vector<1x1x16x128xbf16> to vector<1x16x128xbf16>
    %33 = vector.shape_cast %14 : vector<1x16x128xbf16> to vector<1x1x16x128xbf16>
    tpu.vector_store %arg10[%c2_28, %c17_29, %c0_30, %c0_31], %33 {strides = array<i32>} : memref<3x18x16x128xbf16, #tpu.memory_space<vmem>>, vector<1x1x16x128xbf16>,
    %c1_32 = arith.constant 1 : index
    %c1_33 = arith.constant 1 : index
    %c0_34 = arith.constant 0 : index
    %c0_35 = arith.constant 0 : index
    %34 = vector.load %arg10[%c1_32, %c1_33, %c0_34, %c0_35] : memref<3x18x16x128xbf16, #tpu.memory_space<vmem>>, vector<1x16x16x128xbf16>
    %35 = vector.shape_cast %34 : vector<1x16x16x128xbf16> to vector<16x16x128xbf16>
    %36 = vector.shape_cast %13 : vector<16x16x128xbf16> to vector<1x16x16x128xbf16>
    tpu.vector_store %arg10[%c1_32, %c1_33, %c0_34, %c0_35], %36 {strides = array<i32>} : memref<3x18x16x128xbf16, #tpu.memory_space<vmem>>, vector<1x16x16x128xbf16>,
    %c0_36 = arith.constant 0 : index
    %c1_37 = arith.constant 1 : index
    %c0_38 = arith.constant 0 : index
    %c0_39 = arith.constant 0 : index
    %37 = vector.load %arg10[%c0_36, %c1_37, %c0_38, %c0_39] : memref<3x18x16x128xbf16, #tpu.memory_space<vmem>>, vector<1x16x1x128xbf16>
    %38 = vector.shape_cast %37 : vector<1x16x1x128xbf16> to vector<16x1x128xbf16>
    %39 = vector.shape_cast %15 : vector<16x1x128xbf16> to vector<1x16x1x128xbf16>
    tpu.vector_store %arg10[%c0_36, %c1_37, %c0_38, %c0_39], %39 {strides = array<i32>} : memref<3x18x16x128xbf16, #tpu.memory_space<vmem>>, vector<1x16x1x128xbf16>,
    %40 = vector.extract_strided_slice %13 {offsets = [0, 0, 0], sizes = [16, 15, 128], strides = [1, 1, 1]} : vector<16x16x128xbf16> to vector<16x15x128xbf16>
    %c0_40 = arith.constant 0 : index
    %c1_41 = arith.constant 1 : index
    %c1_42 = arith.constant 1 : index
    %c0_43 = arith.constant 0 : index
    %41 = vector.load %arg10[%c0_40, %c1_41, %c1_42, %c0_43] : memref<3x18x16x128xbf16, #tpu.memory_space<vmem>>, vector<1x16x15x128xbf16>
    %42 = vector.shape_cast %41 : vector<1x16x15x128xbf16> to vector<16x15x128xbf16>
    %43 = vector.shape_cast %40 : vector<16x15x128xbf16> to vector<1x16x15x128xbf16>
    tpu.vector_store %arg10[%c0_40, %c1_41, %c1_42, %c0_43], %43 {strides = array<i32>} : memref<3x18x16x128xbf16, #tpu.memory_space<vmem>>, vector<1x16x15x128xbf16>,
    %c2_44 = arith.constant 2 : index
    %c1_45 = arith.constant 1 : index
    %c15 = arith.constant 15 : index
    %c0_46 = arith.constant 0 : index
    %44 = vector.load %arg10[%c2_44, %c1_45, %c15, %c0_46] : memref<3x18x16x128xbf16, #tpu.memory_space<vmem>>, vector<1x16x1x128xbf16>
    %45 = vector.shape_cast %44 : vector<1x16x1x128xbf16> to vector<16x1x128xbf16>
    %46 = vector.shape_cast %15 : vector<16x1x128xbf16> to vector<1x16x1x128xbf16>
    tpu.vector_store %arg10[%c2_44, %c1_45, %c15, %c0_46], %46 {strides = array<i32>} : memref<3x18x16x128xbf16, #tpu.memory_space<vmem>>, vector<1x16x1x128xbf16>,
    %47 = vector.extract_strided_slice %13 {offsets = [0, 1, 0], sizes = [16, 15, 128], strides = [1, 1, 1]} : vector<16x16x128xbf16> to vector<16x15x128xbf16>
    %c2_47 = arith.constant 2 : index
    %c1_48 = arith.constant 1 : index
    %c0_49 = arith.constant 0 : index
    %c0_50 = arith.constant 0 : index
    %48 = vector.load %arg10[%c2_47, %c1_48, %c0_49, %c0_50] : memref<3x18x16x128xbf16, #tpu.memory_space<vmem>>, vector<1x16x15x128xbf16>
    %49 = vector.shape_cast %48 : vector<1x16x15x128xbf16> to vector<16x15x128xbf16>
    %50 = vector.shape_cast %47 : vector<16x15x128xbf16> to vector<1x16x15x128xbf16>
    tpu.vector_store %arg10[%c2_47, %c1_48, %c0_49, %c0_50], %50 {strides = array<i32>} : memref<3x18x16x128xbf16, #tpu.memory_space<vmem>>, vector<1x16x15x128xbf16>,
    %cst_51 = arith.constant 0.000000e+00 : f32
    %51 = vector.broadcast %cst_51 : f32 to vector<256x128xf32>
    %c0_52 = arith.constant 0 : index
    %c0_53 = arith.constant 0 : index
    %c0_54 = arith.constant 0 : index
    %c0_55 = arith.constant 0 : index
    %52 = vector.load %arg10[%c0_52, %c0_53, %c0_54, %c0_55] : memref<3x18x16x128xbf16, #tpu.memory_space<vmem>>, vector<1x16x16x128xbf16>
    %53 = vector.shape_cast %52 : vector<1x16x16x128xbf16> to vector<16x16x128xbf16>
    %54 = vector.shape_cast %53 : vector<16x16x128xbf16> to vector<256x128xbf16>
    %c0_56 = arith.constant 0 : index
    %c0_57 = arith.constant 0 : index
    %55 = vector.load %arg3[%c0_56, %c0_57] : memref<1152x128xbf16, #tpu.memory_space<vmem>>, vector<128x128xbf16>
    %cst_58 = arith.constant dense<0.000000e+00> : vector<256x128xf32>
    %56 = tpu.matmul %54, %55, %cst_58 {dimension_numbers = #tpu.dot_dimension_numbers<[1], [0], [0], [1], [0, 0, 1, 1], [], []>} : vector<256x128xbf16>, vector<128x128xbf16>, vector<256x128xf32> -> vector<256x128xf32>
    %57 = arith.addf %51, %56 : vector<256x128xf32>
    %c1_59 = arith.constant 1 : index
    %c0_60 = arith.constant 0 : index
    %c0_61 = arith.constant 0 : index
    %c0_62 = arith.constant 0 : index
    %58 = vector.load %arg10[%c1_59, %c0_60, %c0_61, %c0_62] : memref<3x18x16x128xbf16, #tpu.memory_space<vmem>>, vector<1x16x16x128xbf16>
    %59 = vector.shape_cast %58 : vector<1x16x16x128xbf16> to vector<16x16x128xbf16>
    %60 = vector.shape_cast %59 : vector<16x16x128xbf16> to vector<256x128xbf16>
    %c128 = arith.constant 128 : index
    %c0_63 = arith.constant 0 : index
    %61 = vector.load %arg3[%c128, %c0_63] : memref<1152x128xbf16, #tpu.memory_space<vmem>>, vector<128x128xbf16>
    %cst_64 = arith.constant dense<0.000000e+00> : vector<256x128xf32>
    %62 = tpu.matmul %60, %61, %cst_64 {dimension_numbers = #tpu.dot_dimension_numbers<[1], [0], [0], [1], [0, 0, 1, 1], [], []>} : vector<256x128xbf16>, vector<128x128xbf16>, vector<256x128xf32> -> vector<256x128xf32>
    %63 = arith.addf %57, %62 : vector<256x128xf32>
    %c2_65 = arith.constant 2 : index
    %c0_66 = arith.constant 0 : index
    %c0_67 = arith.constant 0 : index
    %c0_68 = arith.constant 0 : index
    %64 = vector.load %arg10[%c2_65, %c0_66, %c0_67, %c0_68] : memref<3x18x16x128xbf16, #tpu.memory_space<vmem>>, vector<1x16x16x128xbf16>
    %65 = vector.shape_cast %64 : vector<1x16x16x128xbf16> to vector<16x16x128xbf16>
    %66 = vector.shape_cast %65 : vector<16x16x128xbf16> to vector<256x128xbf16>
    %c256 = arith.constant 256 : index
    %c0_69 = arith.constant 0 : index
    %67 = vector.load %arg3[%c256, %c0_69] : memref<1152x128xbf16, #tpu.memory_space<vmem>>, vector<128x128xbf16>
    %cst_70 = arith.constant dense<0.000000e+00> : vector<256x128xf32>
    %68 = tpu.matmul %66, %67, %cst_70 {dimension_numbers = #tpu.dot_dimension_numbers<[1], [0], [0], [1], [0, 0, 1, 1], [], []>} : vector<256x128xbf16>, vector<128x128xbf16>, vector<256x128xf32> -> vector<256x128xf32>
    %69 = arith.addf %63, %68 : vector<256x128xf32>
    %c0_71 = arith.constant 0 : index
    %c1_72 = arith.constant 1 : index
    %c0_73 = arith.constant 0 : index
    %c0_74 = arith.constant 0 : index
    %70 = vector.load %arg10[%c0_71, %c1_72, %c0_73, %c0_74] : memref<3x18x16x128xbf16, #tpu.memory_space<vmem>>, vector<1x16x16x128xbf16>
    %71 = vector.shape_cast %70 : vector<1x16x16x128xbf16> to vector<16x16x128xbf16>
    %72 = vector.shape_cast %71 : vector<16x16x128xbf16> to vector<256x128xbf16>
    %c384 = arith.constant 384 : index
    %c0_75 = arith.constant 0 : index
    %73 = vector.load %arg3[%c384, %c0_75] : memref<1152x128xbf16, #tpu.memory_space<vmem>>, vector<128x128xbf16>
    %cst_76 = arith.constant dense<0.000000e+00> : vector<256x128xf32>
    %74 = tpu.matmul %72, %73, %cst_76 {dimension_numbers = #tpu.dot_dimension_numbers<[1], [0], [0], [1], [0, 0, 1, 1], [], []>} : vector<256x128xbf16>, vector<128x128xbf16>, vector<256x128xf32> -> vector<256x128xf32>
    %75 = arith.addf %69, %74 : vector<256x128xf32>
    %c1_77 = arith.constant 1 : index
    %c1_78 = arith.constant 1 : index
    %c0_79 = arith.constant 0 : index
    %c0_80 = arith.constant 0 : index
    %76 = vector.load %arg10[%c1_77, %c1_78, %c0_79, %c0_80] : memref<3x18x16x128xbf16, #tpu.memory_space<vmem>>, vector<1x16x16x128xbf16>
    %77 = vector.shape_cast %76 : vector<1x16x16x128xbf16> to vector<16x16x128xbf16>
    %78 = vector.shape_cast %77 : vector<16x16x128xbf16> to vector<256x128xbf16>
    %c512 = arith.constant 512 : index
    %c0_81 = arith.constant 0 : index
    %79 = vector.load %arg3[%c512, %c0_81] : memref<1152x128xbf16, #tpu.memory_space<vmem>>, vector<128x128xbf16>
    %cst_82 = arith.constant dense<0.000000e+00> : vector<256x128xf32>
    %80 = tpu.matmul %78, %79, %cst_82 {dimension_numbers = #tpu.dot_dimension_numbers<[1], [0], [0], [1], [0, 0, 1, 1], [], []>} : vector<256x128xbf16>, vector<128x128xbf16>, vector<256x128xf32> -> vector<256x128xf32>
    %81 = arith.addf %75, %80 : vector<256x128xf32>
    %c2_83 = arith.constant 2 : index
    %c1_84 = arith.constant 1 : index
    %c0_85 = arith.constant 0 : index
    %c0_86 = arith.constant 0 : index
    %82 = vector.load %arg10[%c2_83, %c1_84, %c0_85, %c0_86] : memref<3x18x16x128xbf16, #tpu.memory_space<vmem>>, vector<1x16x16x128xbf16>
    %83 = vector.shape_cast %82 : vector<1x16x16x128xbf16> to vector<16x16x128xbf16>
    %84 = vector.shape_cast %83 : vector<16x16x128xbf16> to vector<256x128xbf16>
    %c640 = arith.constant 640 : index
    %c0_87 = arith.constant 0 : index
    %85 = vector.load %arg3[%c640, %c0_87] : memref<1152x128xbf16, #tpu.memory_space<vmem>>, vector<128x128xbf16>
    %cst_88 = arith.constant dense<0.000000e+00> : vector<256x128xf32>
    %86 = tpu.matmul %84, %85, %cst_88 {dimension_numbers = #tpu.dot_dimension_numbers<[1], [0], [0], [1], [0, 0, 1, 1], [], []>} : vector<256x128xbf16>, vector<128x128xbf16>, vector<256x128xf32> -> vector<256x128xf32>
    %87 = arith.addf %81, %86 : vector<256x128xf32>
    %c0_89 = arith.constant 0 : index
    %c2_90 = arith.constant 2 : index
    %c0_91 = arith.constant 0 : index
    %c0_92 = arith.constant 0 : index
    %88 = vector.load %arg10[%c0_89, %c2_90, %c0_91, %c0_92] : memref<3x18x16x128xbf16, #tpu.memory_space<vmem>>, vector<1x16x16x128xbf16>
    %89 = vector.shape_cast %88 : vector<1x16x16x128xbf16> to vector<16x16x128xbf16>
    %90 = vector.shape_cast %89 : vector<16x16x128xbf16> to vector<256x128xbf16>
    %c768 = arith.constant 768 : index
    %c0_93 = arith.constant 0 : index
    %91 = vector.load %arg3[%c768, %c0_93] : memref<1152x128xbf16, #tpu.memory_space<vmem>>, vector<128x128xbf16>
    %cst_94 = arith.constant dense<0.000000e+00> : vector<256x128xf32>
    %92 = tpu.matmul %90, %91, %cst_94 {dimension_numbers = #tpu.dot_dimension_numbers<[1], [0], [0], [1], [0, 0, 1, 1], [], []>} : vector<256x128xbf16>, vector<128x128xbf16>, vector<256x128xf32> -> vector<256x128xf32>
    %93 = arith.addf %87, %92 : vector<256x128xf32>
    %c1_95 = arith.constant 1 : index
    %c2_96 = arith.constant 2 : index
    %c0_97 = arith.constant 0 : index
    %c0_98 = arith.constant 0 : index
    %94 = vector.load %arg10[%c1_95, %c2_96, %c0_97, %c0_98] : memref<3x18x16x128xbf16, #tpu.memory_space<vmem>>, vector<1x16x16x128xbf16>
    %95 = vector.shape_cast %94 : vector<1x16x16x128xbf16> to vector<16x16x128xbf16>
    %96 = vector.shape_cast %95 : vector<16x16x128xbf16> to vector<256x128xbf16>
    %c896 = arith.constant 896 : index
    %c0_99 = arith.constant 0 : index
    %97 = vector.load %arg3[%c896, %c0_99] : memref<1152x128xbf16, #tpu.memory_space<vmem>>, vector<128x128xbf16>
    %cst_100 = arith.constant dense<0.000000e+00> : vector<256x128xf32>
    %98 = tpu.matmul %96, %97, %cst_100 {dimension_numbers = #tpu.dot_dimension_numbers<[1], [0], [0], [1], [0, 0, 1, 1], [], []>} : vector<256x128xbf16>, vector<128x128xbf16>, vector<256x128xf32> -> vector<256x128xf32>
    %99 = arith.addf %93, %98 : vector<256x128xf32>
    %c2_101 = arith.constant 2 : index
    %c2_102 = arith.constant 2 : index
    %c0_103 = arith.constant 0 : index
    %c0_104 = arith.constant 0 : index
    %100 = vector.load %arg10[%c2_101, %c2_102, %c0_103, %c0_104] : memref<3x18x16x128xbf16, #tpu.memory_space<vmem>>, vector<1x16x16x128xbf16>
    %101 = vector.shape_cast %100 : vector<1x16x16x128xbf16> to vector<16x16x128xbf16>
    %102 = vector.shape_cast %101 : vector<16x16x128xbf16> to vector<256x128xbf16>
    %c1024 = arith.constant 1024 : index
    %c0_105 = arith.constant 0 : index
    %103 = vector.load %arg3[%c1024, %c0_105] : memref<1152x128xbf16, #tpu.memory_space<vmem>>, vector<128x128xbf16>
    %cst_106 = arith.constant dense<0.000000e+00> : vector<256x128xf32>
    %104 = tpu.matmul %102, %103, %cst_106 {dimension_numbers = #tpu.dot_dimension_numbers<[1], [0], [0], [1], [0, 0, 1, 1], [], []>} : vector<256x128xbf16>, vector<128x128xbf16>, vector<256x128xf32> -> vector<256x128xf32>
    %105 = arith.addf %99, %104 : vector<256x128xf32>
    %c0_107 = arith.constant 0 : index
    %c0_108 = arith.constant 0 : index
    %106 = vector.load %arg8[%c0_107, %c0_108] : memref<36x128xf32, #tpu.memory_space<vmem>>, vector<36x128xf32>
    %cst_109 = arith.constant dense<0.000000e+00> : vector<256x128xf32>
    %107 = tpu.matmul %1, %106, %cst_109 {dimension_numbers = #tpu.dot_dimension_numbers<[1], [0], [0], [1], [0, 0, 1, 1], [], []>} : vector<256x36xf32>, vector<36x128xf32>, vector<256x128xf32> -> vector<256x128xf32>
    %c0_110 = arith.constant 0 : index
    %c0_111 = arith.constant 0 : index
    %108 = vector.load %arg6[%c0_110, %c0_111] : memref<1x128xf32, #tpu.memory_space<vmem>>, vector<1x128xf32>
    %109 = vector.broadcast %108 : vector<1x128xf32> to vector<256x128xf32>
    %110 = arith.mulf %105, %109 : vector<256x128xf32>
    %c0_112 = arith.constant 0 : index
    %c0_113 = arith.constant 0 : index
    %111 = vector.load %arg7[%c0_112, %c0_113] : memref<1x128xf32, #tpu.memory_space<vmem>>, vector<1x128xf32>
    %112 = vector.broadcast %111 : vector<1x128xf32> to vector<256x128xf32>
    %113 = arith.addf %110, %112 : vector<256x128xf32>
    %114 = arith.addf %113, %107 : vector<256x128xf32>
    %cst_114 = arith.constant 0.000000e+00 : f32
    %115 = vector.broadcast %cst_114 : f32 to vector<256x128xf32>
    %116 = arith.maximumf %114, %115 : vector<256x128xf32>
    %117 = vector.extract_strided_slice %116 {offsets = [0, 0], sizes = [256, 8], strides = [1, 1]} : vector<256x128xf32> to vector<256x8xf32>
    %c0_115 = arith.constant 0 : index
    %c0_116 = arith.constant 0 : index
    %c0_117 = arith.constant 0 : index
    %118 = vector.load %arg9[%c0_115, %c0_116, %c0_117] : memref<1x256x8xf32, #tpu.memory_space<vmem>>, vector<1x256x8xf32>
    %119 = vector.shape_cast %118 : vector<1x256x8xf32> to vector<256x8xf32>
    %120 = vector.shape_cast %117 : vector<256x8xf32> to vector<1x256x8xf32>
    tpu.vector_store %arg9[%c0_115, %c0_116, %c0_117], %120 {strides = array<i32>} : memref<1x256x8xf32, #tpu.memory_space<vmem>>, vector<1x256x8xf32>,
    return
  }
  func.func @transform_0(%arg0: i32) -> (i32, i32, i32) {
    %c0_i32 = arith.constant 0 : i32
    %c0_i32_0 = arith.constant 0 : i32
    %c0_i32_1 = arith.constant 0 : i32
    return %arg0, %c0_i32, %c0_i32_0 : i32, i32, i32
  }
  func.func @transform_1(%arg0: i32) -> (i32, i32) {
    %c0_i32 = arith.constant 0 : i32
    %c0_i32_0 = arith.constant 0 : i32
    %c0_i32_1 = arith.constant 0 : i32
    return %c0_i32, %c0_i32_0 : i32, i32
  }
  func.func @transform_2(%arg0: i32) -> (i32, i32) {
    %c0_i32 = arith.constant 0 : i32
    %c0_i32_0 = arith.constant 0 : i32
    %c0_i32_1 = arith.constant 0 : i32
    return %c0_i32, %c0_i32_0 : i32, i32
  }
  func.func @transform_3(%arg0: i32) -> (i32, i32) {
    %c0_i32 = arith.constant 0 : i32
    %c0_i32_0 = arith.constant 0 : i32
    %c0_i32_1 = arith.constant 0 : i32
    return %c0_i32, %c0_i32_0 : i32, i32
  }
  func.func @transform_4(%arg0: i32) -> (i32, i32) {
    %c0_i32 = arith.constant 0 : i32
    %c0_i32_0 = arith.constant 0 : i32
    %c0_i32_1 = arith.constant 0 : i32
    return %c0_i32, %c0_i32_0 : i32, i32
  }
  func.func @transform_5(%arg0: i32) -> (i32, i32) {
    %c0_i32 = arith.constant 0 : i32
    %c0_i32_0 = arith.constant 0 : i32
    %c0_i32_1 = arith.constant 0 : i32
    return %c0_i32, %c0_i32_0 : i32, i32
  }
  func.func @transform_6(%arg0: i32) -> (i32, i32) {
    %c0_i32 = arith.constant 0 : i32
    %c0_i32_0 = arith.constant 0 : i32
    %c0_i32_1 = arith.constant 0 : i32
    return %c0_i32, %c0_i32_0 : i32, i32
  }
  func.func @transform_7(%arg0: i32) -> (i32, i32) {
    %c0_i32 = arith.constant 0 : i32
    %c0_i32_0 = arith.constant 0 : i32
    %c0_i32_1 = arith.constant 0 : i32
    return %c0_i32, %c0_i32_0 : i32, i32
  }
  func.func @transform_8(%arg0: i32) -> (i32, i32, i32) {
    %c0_i32 = arith.constant 0 : i32
    %c0_i32_0 = arith.constant 0 : i32
    %c0_i32_1 = arith.constant 0 : i32
    return %arg0, %c0_i32, %c0_i32_0 : i32, i32, i32
  }
}

</mosaic_0001>

<llo_original>
// kernel: basic_block_forward.1
$region0: #{basic_block_forward.1}
  #allocation0 [shape = 'u32[]', space=smem, size = 0x4, offset = 0x4, fixed_abs, tag = 'smem constant byte address 0x4 - core index']
  #allocation1 [shape = 'u32[144,128]{1,0:T(1,128)}', space=vmem, size = 0x12000, scoped, tag = 'internal scratch']
  #allocation2 [shape = 'bf16[3,18,16,128]{3,2,1,0:T(8,128)(2,1)}', space=vmem, size = 0x36000, scoped, tag = 'scratch operand']
  %s0 = inlined_call_operand.vmem [shape: f32[2,256,36], index: 0, kind: input, shape index: {}]
  %s1 = inlined_call_operand.vmem [shape: f32[36,128], index: 1, kind: input, shape index: {}]
  %s2 = inlined_call_operand.vmem [shape: bf16[1152,128], index: 2, kind: input, shape index: {}]
  %s3 = inlined_call_operand.vmem [shape: f32[1,128], index: 3, kind: input, shape index: {}]
  %s4 = inlined_call_operand.vmem [shape: f32[1,128], index: 4, kind: input, shape index: {}]
  %s5 = inlined_call_operand.vmem [shape: f32[1,128], index: 5, kind: input, shape index: {}]
  %s6 = inlined_call_operand.vmem [shape: f32[1,128], index: 6, kind: input, shape index: {}]
  %s7 = inlined_call_operand.vmem [shape: f32[36,128], index: 7, kind: input, shape index: {}]
  %s8 = inlined_call_operand.vmem [shape: f32[2,256,8], index: 8, kind: output, shape index: {}]
  %s9 = sld [smem:[#allocation0]]
  $region65: #{basic_block_forward.1} parent=0
    _
  %s11 = ssub.s32 1, %s9
  %s12 = scalar_select 0, %s11, %s9
  loop: start=0, step=1, limit=4
  $region2: #{basic_block_forward.1} parent=0 // loop_pre_header
    _
  $region3: #{basic_block_forward.1} parent=0 // loop_header
    %s14 = sphi 0, %s18
    %p15 = scmp.ge.s32.totalorder %s14, 4
    %s24 = sphi 0, %s26
    %s27 = sphi 0, %s24
    %s28 = sphi 0, %s27
    %s44 = sphi 0, %s28
    %s48 = sphi 0, %s48
    %s50 = sphi 0, %s48
    %s51 = sphi 0, %s50
    %s65 = sphi 0, %s51
    %s69 = sphi 0, %s69
    %s71 = sphi 0, %s69
    %s72 = sphi 0, %s71
    %s86 = sphi 0, %s72
    %s90 = sphi 0, %s90
    %s92 = sphi 0, %s90
    %s93 = sphi 0, %s92
    %s107 = sphi 0, %s93
    %s111 = sphi 0, %s111
    %s113 = sphi 0, %s111
    %s114 = sphi 0, %s113
    %s128 = sphi 0, %s114
    %s132 = sphi 0, %s132
    %s134 = sphi 0, %s132
    %s135 = sphi 0, %s134
    %s149 = sphi 0, %s135
    %s153 = sphi 0, %s153
    %s155 = sphi 0, %s153
    %s156 = sphi 0, %s155
    %s170 = sphi 0, %s156
    %s174 = sphi 0, %s174
    %s176 = sphi 0, %s174
    %s177 = sphi 0, %s176
    %s191 = sphi 0, %s177
    %s197 = sphi 0, %s199
    %s200 = sphi 0, %s197
    %s201 = sphi 0, %s200
    %s217 = sphi 0, %s201
  $region4: #{basic_block_forward.1} parent=0 // loop_header_branch
    %17 = sbr.rel (%p15) target = $region8
  $region5: #{basic_block_forward.1} parent=0 // loop_body
    %s19 = ssub.s32 %s14, 1
    %s20 = ssub.s32 %s14, 2
    %s21 = sadd.s32 %s14, 1
    %s22 = ssub.s32 %s14, %s21
    %p23 = scmp.eq.s32.totalorder %s22, 0
    %s25 = sadd.s32 %s24, 1
    %s26 = scalar_select %p23, %s24, %s25
    %p29 = pneg %p23
    %p30 = scmp.eq.s32.totalorder %s14, 1
    %p31 = por %p29, %p30
    %p32 = scmp.ne.s32.totalorder %s24, %s27
    %p33 = scmp.eq.s32.totalorder %s14, 0
    %p34 = por %p32, %p33
    %p35 = scmp.ne.s32.totalorder %s24, %s27
    %p36 = scmp.eq.s32.totalorder %s19, 1
    %p37 = por %p35, %p36
    %p38 = scmp.ne.s32.totalorder %s27, %s28
    %p39 = scmp.eq.s32.totalorder %s19, 0
    %p40 = por %p38, %p39
    %p41 = scmp.ne.s32.totalorder %s27, %s28
    %p42 = scmp.eq.s32.totalorder %s20, 1
    %p43 = por %p41, %p42
    %p45 = scmp.ne.s32.totalorder %s28, %s44
    %p46 = scmp.eq.s32.totalorder %s20, 0
    %p47 = por %p45, %p46
    %s49 = sadd.s32 %s48, 1
    %p52 = scmp.eq.s32.totalorder %s14, 1
    %p53 = scmp.ne.s32.totalorder %s48, %s50
    %p54 = scmp.eq.s32.totalorder %s14, 0
    %p55 = por %p53, %p54
    %p56 = scmp.ne.s32.totalorder %s48, %s50
    %p57 = scmp.eq.s32.totalorder %s19, 1
    %p58 = por %p56, %p57
    %p59 = scmp.ne.s32.totalorder %s50, %s51
    %p60 = scmp.eq.s32.totalorder %s19, 0
    %p61 = por %p59, %p60
    %p62 = scmp.ne.s32.totalorder %s50, %s51
    %p63 = scmp.eq.s32.totalorder %s20, 1
    %p64 = por %p62, %p63
    %p66 = scmp.ne.s32.totalorder %s51, %s65
    %p67 = scmp.eq.s32.totalorder %s20, 0
    %p68 = por %p66, %p67
    %s70 = sadd.s32 %s69, 1
    %p73 = scmp.eq.s32.totalorder %s14, 1
    %p74 = scmp.ne.s32.totalorder %s69, %s71
    %p75 = scmp.eq.s32.totalorder %s14, 0
    %p76 = por %p74, %p75
    %p77 = scmp.ne.s32.totalorder %s69, %s71
    %p78 = scmp.eq.s32.totalorder %s19, 1
    %p79 = por %p77, %p78
    %p80 = scmp.ne.s32.totalorder %s71, %s72
    %p81 = scmp.eq.s32.totalorder %s19, 0
    %p82 = por %p80, %p81
    %p83 = scmp.ne.s32.totalorder %s71, %s72
    %p84 = scmp.eq.s32.totalorder %s20, 1
    %p85 = por %p83, %p84
    %p87 = scmp.ne.s32.totalorder %s72, %s86
    %p88 = scmp.eq.s32.totalorder %s20, 0
    %p89 = por %p87, %p88
    %s91 = sadd.s32 %s90, 1
    %p94 = scmp.eq.s32.totalorder %s14, 1
    %p95 = scmp.ne.s32.totalorder %s90, %s92
    %p96 = scmp.eq.s32.totalorder %s14, 0
    %p97 = por %p95, %p96
    %p98 = scmp.ne.s32.totalorder %s90, %s92
    %p99 = scmp.eq.s32.totalorder %s19, 1
    %p100 = por %p98, %p99
    %p101 = scmp.ne.s32.totalorder %s92, %s93
    %p102 = scmp.eq.s32.totalorder %s19, 0
    %p103 = por %p101, %p102
    %p104 = scmp.ne.s32.totalorder %s92, %s93
    %p105 = scmp.eq.s32.totalorder %s20, 1
    %p106 = por %p104, %p105
    %p108 = scmp.ne.s32.totalorder %s93, %s107
    %p109 = scmp.eq.s32.totalorder %s20, 0
    %p110 = por %p108, %p109
    %s112 = sadd.s32 %s111, 1
    %p115 = scmp.eq.s32.totalorder %s14, 1
    %p116 = scmp.ne.s32.totalorder %s111, %s113
    %p117 = scmp.eq.s32.totalorder %s14, 0
    %p118 = por %p116, %p117
    %p119 = scmp.ne.s32.totalorder %s111, %s113
    %p120 = scmp.eq.s32.totalorder %s19, 1
    %p121 = por %p119, %p120
    %p122 = scmp.ne.s32.totalorder %s113, %s114
    %p123 = scmp.eq.s32.totalorder %s19, 0
    %p124 = por %p122, %p123
    %p125 = scmp.ne.s32.totalorder %s113, %s114
    %p126 = scmp.eq.s32.totalorder %s20, 1
    %p127 = por %p125, %p126
    %p129 = scmp.ne.s32.totalorder %s114, %s128
    %p130 = scmp.eq.s32.totalorder %s20, 0
    %p131 = por %p129, %p130
    %s133 = sadd.s32 %s132, 1
    %p136 = scmp.eq.s32.totalorder %s14, 1
    %p137 = scmp.ne.s32.totalorder %s132, %s134
    %p138 = scmp.eq.s32.totalorder %s14, 0
    %p139 = por %p137, %p138
    %p140 = scmp.ne.s32.totalorder %s132, %s134
    %p141 = scmp.eq.s32.totalorder %s19, 1
    %p142 = por %p140, %p141
    %p143 = scmp.ne.s32.totalorder %s134, %s135
    %p144 = scmp.eq.s32.totalorder %s19, 0
    %p145 = por %p143, %p144
    %p146 = scmp.ne.s32.totalorder %s134, %s135
    %p147 = scmp.eq.s32.totalorder %s20, 1
    %p148 = por %p146, %p147
    %p150 = scmp.ne.s32.totalorder %s135, %s149
    %p151 = scmp.eq.s32.totalorder %s20, 0
    %p152 = por %p150, %p151
    %s154 = sadd.s32 %s153, 1
    %p157 = scmp.eq.s32.totalorder %s14, 1
    %p158 = scmp.ne.s32.totalorder %s153, %s155
    %p159 = scmp.eq.s32.totalorder %s14, 0
    %p160 = por %p158, %p159
    %p161 = scmp.ne.s32.totalorder %s153, %s155
    %p162 = scmp.eq.s32.totalorder %s19, 1
    %p163 = por %p161, %p162
    %p164 = scmp.ne.s32.totalorder %s155, %s156
    %p165 = scmp.eq.s32.totalorder %s19, 0
    %p166 = por %p164, %p165
    %p167 = scmp.ne.s32.totalorder %s155, %s156
    %p168 = scmp.eq.s32.totalorder %s20, 1
    %p169 = por %p167, %p168
    %p171 = scmp.ne.s32.totalorder %s156, %s170
    %p172 = scmp.eq.s32.totalorder %s20, 0
    %p173 = por %p171, %p172
    %s175 = sadd.s32 %s174, 1
    %p178 = scmp.eq.s32.totalorder %s14, 1
    %p179 = scmp.ne.s32.totalorder %s174, %s176
    %p180 = scmp.eq.s32.totalorder %s14, 0
    %p181 = por %p179, %p180
    %p182 = scmp.ne.s32.totalorder %s174, %s176
    %p183 = scmp.eq.s32.totalorder %s19, 1
    %p184 = por %p182, %p183
    %p185 = scmp.ne.s32.totalorder %s176, %s177
    %p186 = scmp.eq.s32.totalorder %s19, 0
    %p187 = por %p185, %p186
    %p188 = scmp.ne.s32.totalorder %s176, %s177
    %p189 = scmp.eq.s32.totalorder %s20, 1
    %p190 = por %p188, %p189
    %p192 = scmp.ne.s32.totalorder %s177, %s191
    %p193 = scmp.eq.s32.totalorder %s20, 0
    %p194 = por %p192, %p193
    %s195 = ssub.s32 %s14, %s21
    %p196 = scmp.eq.s32.totalorder %s195, 0
    %s198 = sadd.s32 %s197, 1
    %s199 = scalar_select %p196, %s197, %s198
    %p202 = pneg %p196
    %p203 = scmp.eq.s32.totalorder %s14, 1
    %p204 = por %p202, %p203
    %p205 = scmp.ne.s32.totalorder %s197, %s200
    %p206 = scmp.eq.s32.totalorder %s14, 0
    %p207 = por %p205, %p206
    %p208 = scmp.ne.s32.totalorder %s197, %s200
    %p209 = scmp.eq.s32.totalorder %s19, 1
    %p210 = por %p208, %p209
    %p211 = scmp.ne.s32.totalorder %s200, %s201
    %p212 = scmp.eq.s32.totalorder %s19, 0
    %p213 = por %p211, %p212
    %p214 = scmp.ne.s32.totalorder %s200, %s201
    %p215 = scmp.eq.s32.totalorder %s20, 1
    %p216 = por %p214, %p215
    %p218 = scmp.ne.s32.totalorder %s201, %s217
    %p219 = scmp.eq.s32.totalorder %s20, 0
    %p220 = por %p218, %p219
    %p221 = scmp.le.s32.totalorder 1, %s14
    %p222 = scmp.lt.s32.totalorder %s14, 3
    %p223 = pnand %p221, %p222
    %p224 = pneg %p223
    // Predicated region
    $region9: #{basic_block_forward.1} parent=5 // pred_check
      _
    $region10: #{basic_block_forward.1} parent=5 // pred_check_branch
      %226 = sbr.rel (%p223) target = $region12
    $region11: #{basic_block_forward.1} parent=5 // pred_region
      %s227 = ssub.s32 %s14, 1
      // Predicated region
      $region13: #{basic_block_forward.1} parent=11 // pred_check
        %p228 = pneg %p61
      $region14: #{basic_block_forward.1} parent=11 // pred_check_branch
        %230 = sbr.rel (%p228) target = $region16
      $region15: #{basic_block_forward.1} parent=11 // pred_region
        _
      $region16: #{basic_block_forward.1} parent=11 // pred_fallthru
        _
      // Predicated region
      $region17: #{basic_block_forward.1} parent=11 // pred_check
        %p231 = pneg %p82
      $region18: #{basic_block_forward.1} parent=11 // pred_check_branch
        %233 = sbr.rel (%p231) target = $region20
      $region19: #{basic_block_forward.1} parent=11 // pred_region
        _
      $region20: #{basic_block_forward.1} parent=11 // pred_fallthru
        _
      // Predicated region
      $region21: #{basic_block_forward.1} parent=11 // pred_check
        %p234 = pneg %p103
      $region22: #{basic_block_forward.1} parent=11 // pred_check_branch
        %236 = sbr.rel (%p234) target = $region24
      $region23: #{basic_block_forward.1} parent=11 // pred_region
        _
      $region24: #{basic_block_forward.1} parent=11 // pred_fallthru
        _
      // Predicated region
      $region25: #{basic_block_forward.1} parent=11 // pred_check
        %p237 = pneg %p124
      $region26: #{basic_block_forward.1} parent=11 // pred_check_branch
        %239 = sbr.rel (%p237) target = $region28
      $region27: #{basic_block_forward.1} parent=11 // pred_region
        _
      $region28: #{basic_block_forward.1} parent=11 // pred_fallthru
        _
      // Predicated region
      $region29: #{basic_block_forward.1} parent=11 // pred_check
        %p240 = pneg %p145
      $region30: #{basic_block_forward.1} parent=11 // pred_check_branch
        %242 = sbr.rel (%p240) target = $region32
      $region31: #{basic_block_forward.1} parent=11 // pred_region
        _
      $region32: #{basic_block_forward.1} parent=11 // pred_fallthru
        _
      // Predicated region
      $region33: #{basic_block_forward.1} parent=11 // pred_check
        %p243 = pneg %p166
      $region34: #{basic_block_forward.1} parent=11 // pred_check_branch
        %245 = sbr.rel (%p243) target = $region36
      $region35: #{basic_block_forward.1} parent=11 // pred_region
        _
      $region36: #{basic_block_forward.1} parent=11 // pred_fallthru
        _
      // Predicated region
      $region37: #{basic_block_forward.1} parent=11 // pred_check
        %p246 = pneg %p187
      $region38: #{basic_block_forward.1} parent=11 // pred_check_branch
        %248 = sbr.rel (%p246) target = $region40
      $region39: #{basic_block_forward.1} parent=11 // pred_region
        _
      $region40: #{basic_block_forward.1} parent=11 // pred_fallthru
        _
    $region12: #{basic_block_forward.1} parent=5 // pred_fallthru
      _
    %p249 = scmp.lt.s32.totalorder %s14, 2
    // Predicated region
    $region41: #{basic_block_forward.1} parent=5 // pred_check
      %p250 = pneg %p249
    $region42: #{basic_block_forward.1} parent=5 // pred_check_branch
      %252 = sbr.rel (%p250) target = $region44
    $region43: #{basic_block_forward.1} parent=5 // pred_region
      // Predicated region
      $region45: #{basic_block_forward.1} parent=43 // pred_check
        %p253 = pneg %p34
      $region46: #{basic_block_forward.1} parent=43 // pred_check_branch
        %255 = sbr.rel (%p253) target = $region48
      $region47: #{basic_block_forward.1} parent=43 // pred_region
        %p256 = scmp.lt.s32.totalorder %s14, 1
        %s257 = scalar_select %p256, %s14, 1
        %s258 = smul.addr %s257, 32
        %s259 = smul.addr %s258, 8
        %s260 = scalar_lea.vmem %s0, %s259
      $region48: #{basic_block_forward.1} parent=43 // pred_fallthru
        _
    $region44: #{basic_block_forward.1} parent=5 // pred_fallthru
      _
    %p261 = scmp.le.s32.totalorder 1, %s14
    %p262 = scmp.lt.s32.totalorder %s14, 3
    %p263 = pnand %p261, %p262
    %p264 = pneg %p263
    // Predicated region
    $region49: #{basic_block_forward.1} parent=5 // pred_check
      _
    $region50: #{basic_block_forward.1} parent=5 // pred_check_branch
      %266 = sbr.rel (%p263) target = $region52
    $region51: #{basic_block_forward.1} parent=5 // pred_region
      %s267 = ssub.s32 %s14, 1
      %p268 = scmp.lt.s32.totalorder %s19, 1
      %s269 = scalar_select %p268, %s19, 1
      %s270 = smul.addr %s269, 32
      %s271 = smul.addr %s270, 8
      %s272 = scalar_lea.vmem %s0, %s271
      %p273 = pneg %p40
      %p274 = pneg %p37
      %p275 = pneg %p61
      %p276 = pneg %p58
      %p277 = pneg %p82
      %p278 = pneg %p79
      %p279 = pneg %p103
      %p280 = pneg %p100
      %p281 = pneg %p124
      %p282 = pneg %p121
      %p283 = pneg %p145
      %p284 = pneg %p142
      %p285 = pneg %p166
      %p286 = pneg %p163
      %p287 = pneg %p187
      %p288 = pneg %p184
      %p289 = pneg %p213
      %p290 = pneg %p210
      %p291 = scmp.lt.s32.totalorder %s19, 1
      %s292 = scalar_select %p291, %s19, 1
      %s293 = smul.addr %s292, 32
      %s294 = smul.addr %s293, 8
      %s295 = scalar_lea.vmem %s8, %s294
      %p296 = scmp.lt.s32.totalorder %s19, 1
      %s297 = scalar_select %p296, %s19, 1
      %s298 = smul.addr %s297, 32
      %s299 = smul.addr %s298, 8
      %s300 = scalar_lea.vmem %s0, %s299
      %p301 = scmp.lt.s32.totalorder %s19, 1
      %s302 = scalar_select %p301, %s19, 1
      %s303 = smul.addr %s302, 32
      %s304 = smul.addr %s303, 8
      %s305 = scalar_lea.vmem %s8, %s304
      %v307 = vld [vmem:[%s300] sm:$0xff]
      %v308 = vld [vmem:[%s300 + $0x8] sm:$0xff]
      %v309 = vld [vmem:[%s300 + $0x10] sm:$0xff]
      %v310 = vld [vmem:[%s300 + $0x18] sm:$0xff]
      %v311 = vld [vmem:[%s300 + $0x20] sm:$0xff]
      %v312 = vld [vmem:[%s300 + $0x28] sm:$0xff]
      %v313 = vld [vmem:[%s300 + $0x30] sm:$0xff]
      %v314 = vld [vmem:[%s300 + $0x38] sm:$0xff]
      %v315 = vld [vmem:[%s300 + $0x40] sm:$0xff]
      %v316 = vld [vmem:[%s300 + $0x48] sm:$0xff]
      %v317 = vld [vmem:[%s300 + $0x50] sm:$0xff]
      %v318 = vld [vmem:[%s300 + $0x58] sm:$0xff]
      %v319 = vld [vmem:[%s300 + $0x60] sm:$0xff]
      %v320 = vld [vmem:[%s300 + $0x68] sm:$0xff]
      %v321 = vld [vmem:[%s300 + $0x70] sm:$0xff]
      %v322 = vld [vmem:[%s300 + $0x78] sm:$0xff]
      %v323 = vld [vmem:[%s300 + $0x80] sm:$0xff]
      %v324 = vld [vmem:[%s300 + $0x88] sm:$0xff]
      %v325 = vld [vmem:[%s300 + $0x90] sm:$0xff]
      %v326 = vld [vmem:[%s300 + $0x98] sm:$0xff]
      %v327 = vld [vmem:[%s300 + $0xa0] sm:$0xff]
      %v328 = vld [vmem:[%s300 + $0xa8] sm:$0xff]
      %v329 = vld [vmem:[%s300 + $0xb0] sm:$0xff]
      %v330 = vld [vmem:[%s300 + $0xb8] sm:$0xff]
      %v331 = vld [vmem:[%s300 + $0xc0] sm:$0xff]
      %v332 = vld [vmem:[%s300 + $0xc8] sm:$0xff]
      %v333 = vld [vmem:[%s300 + $0xd0] sm:$0xff]
      %v334 = vld [vmem:[%s300 + $0xd8] sm:$0xff]
      %v335 = vld [vmem:[%s300 + $0xe0] sm:$0xff]
      %v336 = vld [vmem:[%s300 + $0xe8] sm:$0xff]
      %v337 = vld [vmem:[%s300 + $0xf0] sm:$0xff]
      %v338 = vld [vmem:[%s300 + $0xf8] sm:$0xff]
      %v339 = vld [vmem:[%s1] sm:$0xff]
      %v340 = vld [vmem:[%s1 + $0x8] sm:$0xff]
      %v341 = vld [vmem:[%s1 + $0x10] sm:$0xff]
      %v342 = vld [vmem:[%s1 + $0x18] sm:$0xff]
      %v343 = vld [vmem:[%s1 + $0x20] sm:$0xf]
      %vm344 = vcmask 293888
      %v346 = vsel %vm344, %v307, 0
      %v349 = vsel %vm344, %v308, 0
      %v352 = vsel %vm344, %v309, 0
      %v355 = vsel %vm344, %v310, 0
      %v358 = vsel %vm344, %v311, 0
      %v361 = vsel %vm344, %v312, 0
      %v364 = vsel %vm344, %v313, 0
      %v367 = vsel %vm344, %v314, 0
      %v370 = vsel %vm344, %v315, 0
      %v373 = vsel %vm344, %v316, 0
      %v376 = vsel %vm344, %v317, 0
      %v379 = vsel %vm344, %v318, 0
      %v382 = vsel %vm344, %v319, 0
      %v385 = vsel %vm344, %v320, 0
      %v388 = vsel %vm344, %v321, 0
      %v391 = vsel %vm344, %v322, 0
      %v394 = vsel %vm344, %v323, 0
      %v397 = vsel %vm344, %v324, 0
      %v400 = vsel %vm344, %v325, 0
      %v403 = vsel %vm344, %v326, 0
      %v406 = vsel %vm344, %v327, 0
      %v409 = vsel %vm344, %v328, 0
      %v412 = vsel %vm344, %v329, 0
      %v415 = vsel %vm344, %v330, 0
      %v418 = vsel %vm344, %v331, 0
      %v421 = vsel %vm344, %v332, 0
      %v424 = vsel %vm344, %v333, 0
      %v427 = vsel %vm344, %v334, 0
      %v430 = vsel %vm344, %v335, 0
      %v433 = vsel %vm344, %v336, 0
      %v436 = vsel %vm344, %v337, 0
      %v439 = vsel %vm344, %v338, 0
      %vm441 = vcmask 1043456
      %v443 = vsel %vm441, %v343, 0
      %445 = vmatprep.subr.mxu0 0.0
      %446 = vmatpush1.msra.mxu0 0.0
      %447 = vmatprep.subr.mxu0 0.0
      %448 = vmatpush1.msra.mxu0 0.0
      %449 = vmatprep.subr.mxu0 0.0
      %450 = vmatpush1.msra.mxu0 0.0
      %451 = vmatprep.subr.mxu0 0.0
      %452 = vmatpush1.msra.mxu0 0.0
      %453 = vmatprep.subr.mxu0 0.0
      %454 = vmatpush1.msra.mxu0 0.0
      %455 = vmatprep.subr.mxu0 0.0
      %456 = vmatpush1.msra.mxu0 0.0
      %457 = vmatprep.subr.mxu0 0.0
      %458 = vmatpush1.msra.mxu0 0.0
      %459 = vmatprep.subr.mxu0 0.0
      %460 = vmatpush1.msra.mxu0 0.0
      %461 = vmatprep.subr.mxu0 0.0
      %462 = vmatpush1.msra.mxu0 0.0
      %463 = vmatprep.subr.mxu0 0.0
      %464 = vmatpush1.msra.mxu0 0.0
      %465 = vmatprep.subr.mxu0 0.0
      %466 = vmatpush1.msra.mxu0 0.0
      %467 = vmatprep.subr.mxu0 0.0
      %468 = vmatpush1.msra.mxu0 %v443
      %469 = vmatprep.subr.mxu0 0.0
      %470 = vmatpush1.msra.mxu0 %v342
      %471 = vmatprep.subr.mxu0 0.0
      %472 = vmatpush1.msra.mxu0 %v341
      %473 = vmatprep.subr.mxu0 0.0
      %474 = vmatpush1.msra.mxu0 %v340
      %475 = vmatprep.subr.mxu0 0.0
      %476 = vmatpush1.msra.mxu0 %v339
      %477 = vmatprep.subr.mxu0 0.0
      %478 = vmatpush2.msra.mxu0 0.0
      %479 = vmatprep.subr.mxu0 0.0
      %480 = vmatpush2.msra.mxu0 0.0
      %481 = vmatprep.subr.mxu0 0.0
      %482 = vmatpush2.msra.mxu0 0.0
      %483 = vmatprep.subr.mxu0 0.0
      %484 = vmatpush2.msra.mxu0 0.0
      %485 = vmatprep.subr.mxu0 0.0
      %486 = vmatpush2.msra.mxu0 0.0
      %487 = vmatprep.subr.mxu0 0.0
      %488 = vmatpush2.msra.mxu0 0.0
      %489 = vmatprep.subr.mxu0 0.0
      %490 = vmatpush2.msra.mxu0 0.0
      %491 = vmatprep.subr.mxu0 0.0
      %492 = vmatpush2.msra.mxu0 0.0
      %493 = vmatprep.subr.mxu0 0.0
      %494 = vmatpush2.msra.mxu0 0.0
      %495 = vmatprep.subr.mxu0 0.0
      %496 = vmatpush2.msra.mxu0 0.0
      %497 = vmatprep.subr.mxu0 0.0
      %498 = vmatpush2.msra.mxu0 0.0
      %499 = vmatprep.subr.mxu0 0.0
      %500 = vmatpush2.msra.mxu0 0.0
      %501 = vmatprep.subr.mxu0 0.0
      %502 = vmatpush2.msra.mxu0 0.0
      %503 = vmatprep.subr.mxu0 0.0
      %504 = vmatpush2.msra.mxu0 0.0
      %505 = vmatprep.subr.mxu0 0.0
      %506 = vmatpush2.msra.mxu0 0.0
      %507 = vmatprep.subr.mxu0 0.0
      %508 = vmatpush2.msra.mxu0 0.0
      %509 = vmatprep.mubr.f32.mxu0 0.0
      %510 = vmatmul.mubr.f32.gmra.mxu0 %v346
      %v511 = vpop.f32.mrf.mxu0
      %v512 = vadd.f32 0.0, %v511
      %v513 = vpop.f32.mrf.mxu0
      %514 = vmatprep.mubr.f32.mxu0 0.0
      %515 = vmatmul.mubr.f32.gmra.mxu0 %v349
      %v516 = vpop.f32.mrf.mxu0
      %v517 = vadd.f32 0.0, %v516
      %v518 = vpop.f32.mrf.mxu0
      %519 = vmatprep.mubr.f32.mxu0 0.0
      %520 = vmatmul.mubr.f32.gmra.mxu0 %v352
      %v521 = vpop.f32.mrf.mxu0
      %v522 = vadd.f32 0.0, %v521
      %v523 = vpop.f32.mrf.mxu0
      %524 = vmatprep.mubr.f32.mxu0 0.0
      %525 = vmatmul.mubr.f32.gmra.mxu0 %v355
      %v526 = vpop.f32.mrf.mxu0
      %v527 = vadd.f32 0.0, %v526
      %v528 = vpop.f32.mrf.mxu0
      %529 = vmatprep.mubr.f32.mxu0 0.0
      %530 = vmatmul.mubr.f32.gmra.mxu0 %v358
      %v531 = vpop.f32.mrf.mxu0
      %v532 = vadd.f32 0.0, %v531
      %v533 = vpop.f32.mrf.mxu0
      %534 = vmatprep.mubr.f32.mxu0 0.0
      %535 = vmatmul.mubr.f32.gmra.mxu0 %v361
      %v536 = vpop.f32.mrf.mxu0
      %v537 = vadd.f32 0.0, %v536
      %v538 = vpop.f32.mrf.mxu0
      %539 = vmatprep.mubr.f32.mxu0 0.0
      %540 = vmatmul.mubr.f32.gmra.mxu0 %v364
      %v541 = vpop.f32.mrf.mxu0
      %v542 = vadd.f32 0.0, %v541
      %v543 = vpop.f32.mrf.mxu0
      %544 = vmatprep.mubr.f32.mxu0 0.0
      %545 = vmatmul.mubr.f32.gmra.mxu0 %v367
      %v546 = vpop.f32.mrf.mxu0
      %v547 = vadd.f32 0.0, %v546
      %v548 = vpop.f32.mrf.mxu0
      %549 = vmatprep.mubr.f32.mxu0 0.0
      %550 = vmatmul.mubr.f32.gmra.mxu0 %v370
      %v551 = vpop.f32.mrf.mxu0
      %v552 = vadd.f32 0.0, %v551
      %v553 = vpop.f32.mrf.mxu0
      %554 = vmatprep.mubr.f32.mxu0 0.0
      %555 = vmatmul.mubr.f32.gmra.mxu0 %v373
      %v556 = vpop.f32.mrf.mxu0
      %v557 = vadd.f32 0.0, %v556
      %v558 = vpop.f32.mrf.mxu0
      %559 = vmatprep.mubr.f32.mxu0 0.0
      %560 = vmatmul.mubr.f32.gmra.mxu0 %v376
      %v561 = vpop.f32.mrf.mxu0
      %v562 = vadd.f32 0.0, %v561
      %v563 = vpop.f32.mrf.mxu0
      %564 = vmatprep.mubr.f32.mxu0 0.0
      %565 = vmatmul.mubr.f32.gmra.mxu0 %v379
      %v566 = vpop.f32.mrf.mxu0
      %v567 = vadd.f32 0.0, %v566
      %v568 = vpop.f32.mrf.mxu0
      %569 = vmatprep.mubr.f32.mxu0 0.0
      %570 = vmatmul.mubr.f32.gmra.mxu0 %v382
      %v571 = vpop.f32.mrf.mxu0
      %v572 = vadd.f32 0.0, %v571
      %v573 = vpop.f32.mrf.mxu0
      %574 = vmatprep.mubr.f32.mxu0 0.0
      %575 = vmatmul.mubr.f32.gmra.mxu0 %v385
      %v576 = vpop.f32.mrf.mxu0
      %v577 = vadd.f32 0.0, %v576
      %v578 = vpop.f32.mrf.mxu0
      %579 = vmatprep.mubr.f32.mxu0 0.0
      %580 = vmatmul.mubr.f32.gmra.mxu0 %v388
      %v581 = vpop.f32.mrf.mxu0
      %v582 = vadd.f32 0.0, %v581
      %v583 = vpop.f32.mrf.mxu0
      %584 = vmatprep.mubr.f32.mxu0 0.0
      %585 = vmatmul.mubr.f32.gmra.mxu0 %v391
      %v586 = vpop.f32.mrf.mxu0
      %v587 = vadd.f32 0.0, %v586
      %v588 = vpop.f32.mrf.mxu0
      %589 = vmatprep.mubr.f32.mxu0 0.0
      %590 = vmatmul.mubr.f32.gmra.mxu0 %v394
      %v591 = vpop.f32.mrf.mxu0
      %v592 = vadd.f32 0.0, %v591
      %v593 = vpop.f32.mrf.mxu0
      %594 = vmatprep.mubr.f32.mxu0 0.0
      %595 = vmatmul.mubr.f32.gmra.mxu0 %v397
      %v596 = vpop.f32.mrf.mxu0
      %v597 = vadd.f32 0.0, %v596
      %v598 = vpop.f32.mrf.mxu0
      %599 = vmatprep.mubr.f32.mxu0 0.0
      %600 = vmatmul.mubr.f32.gmra.mxu0 %v400
      %v601 = vpop.f32.mrf.mxu0
      %v602 = vadd.f32 0.0, %v601
      %v603 = vpop.f32.mrf.mxu0
      %604 = vmatprep.mubr.f32.mxu0 0.0
      %605 = vmatmul.mubr.f32.gmra.mxu0 %v403
      %v606 = vpop.f32.mrf.mxu0
      %v607 = vadd.f32 0.0, %v606
      %v608 = vpop.f32.mrf.mxu0
      %609 = vmatprep.mubr.f32.mxu0 0.0
      %610 = vmatmul.mubr.f32.gmra.mxu0 %v406
      %v611 = vpop.f32.mrf.mxu0
      %v612 = vadd.f32 0.0, %v611
      %v613 = vpop.f32.mrf.mxu0
      %614 = vmatprep.mubr.f32.mxu0 0.0
      %615 = vmatmul.mubr.f32.gmra.mxu0 %v409
      %v616 = vpop.f32.mrf.mxu0
      %v617 = vadd.f32 0.0, %v616
      %v618 = vpop.f32.mrf.mxu0
      %619 = vmatprep.mubr.f32.mxu0 0.0
      %620 = vmatmul.mubr.f32.gmra.mxu0 %v412
      %v621 = vpop.f32.mrf.mxu0
      %v622 = vadd.f32 0.0, %v621
      %v623 = vpop.f32.mrf.mxu0
      %624 = vmatprep.mubr.f32.mxu0 0.0
      %625 = vmatmul.mubr.f32.gmra.mxu0 %v415
      %v626 = vpop.f32.mrf.mxu0
      %v627 = vadd.f32 0.0, %v626
      %v628 = vpop.f32.mrf.mxu0
      %629 = vmatprep.mubr.f32.mxu0 0.0
      %630 = vmatmul.mubr.f32.gmra.mxu0 %v418
      %v631 = vpop.f32.mrf.mxu0
      %v632 = vadd.f32 0.0, %v631
      %v633 = vpop.f32.mrf.mxu0
      %634 = vmatprep.mubr.f32.mxu0 0.0
      %635 = vmatmul.mubr.f32.gmra.mxu0 %v421
      %v636 = vpop.f32.mrf.mxu0
      %v637 = vadd.f32 0.0, %v636
      %v638 = vpop.f32.mrf.mxu0
      %639 = vmatprep.mubr.f32.mxu0 0.0
      %640 = vmatmul.mubr.f32.gmra.mxu0 %v424
      %v641 = vpop.f32.mrf.mxu0
      %v642 = vadd.f32 0.0, %v641
      %v643 = vpop.f32.mrf.mxu0
      %644 = vmatprep.mubr.f32.mxu0 0.0
      %645 = vmatmul.mubr.f32.gmra.mxu0 %v427
      %v646 = vpop.f32.mrf.mxu0
      %v647 = vadd.f32 0.0, %v646
      %v648 = vpop.f32.mrf.mxu0
      %649 = vmatprep.mubr.f32.mxu0 0.0
      %650 = vmatmul.mubr.f32.gmra.mxu0 %v430
      %v651 = vpop.f32.mrf.mxu0
      %v652 = vadd.f32 0.0, %v651
      %v653 = vpop.f32.mrf.mxu0
      %654 = vmatprep.mubr.f32.mxu0 0.0
      %655 = vmatmul.mubr.f32.gmra.mxu0 %v433
      %v656 = vpop.f32.mrf.mxu0
      %v657 = vadd.f32 0.0, %v656
      %v658 = vpop.f32.mrf.mxu0
      %659 = vmatprep.mubr.f32.mxu0 0.0
      %660 = vmatmul.mubr.f32.gmra.mxu0 %v436
      %v661 = vpop.f32.mrf.mxu0
      %v662 = vadd.f32 0.0, %v661
      %v663 = vpop.f32.mrf.mxu0
      %664 = vmatprep.mubr.f32.mxu0 0.0
      %665 = vmatmul.mubr.f32.gmra.mxu0 %v439
      %v666 = vpop.f32.mrf.mxu0
      %v667 = vadd.f32 0.0, %v666
      %v668 = vpop.f32.mrf.mxu0
      %669 = vdwg.mxu0
      %v670 = vld [vmem:[%s3] sm:$0x1]
      %v672 = vlaneseq
      %v673 = vshrl.u32 %v672, 7
      %v674 = vsub.s32 0, %v673
      %v675 = vrot.slane %v670, %v674
      %v677 = vmul.f32 %v512, %v675
      %v678 = vmul.f32 %v517, %v675
      %v679 = vmul.f32 %v522, %v675
      %v680 = vmul.f32 %v527, %v675
      %v681 = vmul.f32 %v532, %v675
      %v682 = vmul.f32 %v537, %v675
      %v683 = vmul.f32 %v542, %v675
      %v684 = vmul.f32 %v547, %v675
      %v685 = vmul.f32 %v552, %v675
      %v686 = vmul.f32 %v557, %v675
      %v687 = vmul.f32 %v562, %v675
      %v688 = vmul.f32 %v567, %v675
      %v689 = vmul.f32 %v572, %v675
      %v690 = vmul.f32 %v577, %v675
      %v691 = vmul.f32 %v582, %v675
      %v692 = vmul.f32 %v587, %v675
      %v693 = vmul.f32 %v592, %v675
      %v694 = vmul.f32 %v597, %v675
      %v695 = vmul.f32 %v602, %v675
      %v696 = vmul.f32 %v607, %v675
      %v697 = vmul.f32 %v612, %v675
      %v698 = vmul.f32 %v617, %v675
      %v699 = vmul.f32 %v622, %v675
      %v700 = vmul.f32 %v627, %v675
      %v701 = vmul.f32 %v632, %v675
      %v702 = vmul.f32 %v637, %v675
      %v703 = vmul.f32 %v642, %v675
      %v704 = vmul.f32 %v647, %v675
      %v705 = vmul.f32 %v652, %v675
      %v706 = vmul.f32 %v657, %v675
      %v707 = vmul.f32 %v662, %v675
      %v708 = vmul.f32 %v667, %v675
      %v709 = vld [vmem:[%s4] sm:$0x1]
      %v711 = vlaneseq
      %v712 = vshrl.u32 %v711, 7
      %v713 = vsub.s32 0, %v712
      %v714 = vrot.slane %v709, %v713
      %v716 = vadd.f32 %v677, %v714
      %v717 = vadd.f32 %v678, %v714
      %v718 = vadd.f32 %v679, %v714
      %v719 = vadd.f32 %v680, %v714
      %v720 = vadd.f32 %v681, %v714
      %v721 = vadd.f32 %v682, %v714
      %v722 = vadd.f32 %v683, %v714
      %v723 = vadd.f32 %v684, %v714
      %v724 = vadd.f32 %v685, %v714
      %v725 = vadd.f32 %v686, %v714
      %v726 = vadd.f32 %v687, %v714
      %v727 = vadd.f32 %v688, %v714
      %v728 = vadd.f32 %v689, %v714
      %v729 = vadd.f32 %v690, %v714
      %v730 = vadd.f32 %v691, %v714
      %v731 = vadd.f32 %v692, %v714
      %v732 = vadd.f32 %v693, %v714
      %v733 = vadd.f32 %v694, %v714
      %v734 = vadd.f32 %v695, %v714
      %v735 = vadd.f32 %v696, %v714
      %v736 = vadd.f32 %v697, %v714
      %v737 = vadd.f32 %v698, %v714
      %v738 = vadd.f32 %v699, %v714
      %v739 = vadd.f32 %v700, %v714
      %v740 = vadd.f32 %v701, %v714
      %v741 = vadd.f32 %v702, %v714
      %v742 = vadd.f32 %v703, %v714
      %v743 = vadd.f32 %v704, %v714
      %v744 = vadd.f32 %v705, %v714
      %v745 = vadd.f32 %v706, %v714
      %v746 = vadd.f32 %v707, %v714
      %v747 = vadd.f32 %v708, %v714
      %v748 = vmax.f32 %v716, 0.0
      %v749 = vmax.f32 %v717, 0.0
      %v750 = vmax.f32 %v718, 0.0
      %v751 = vmax.f32 %v719, 0.0
      %v752 = vmax.f32 %v720, 0.0
      %v753 = vmax.f32 %v721, 0.0
      %v754 = vmax.f32 %v722, 0.0
      %v755 = vmax.f32 %v723, 0.0
      %v756 = vmax.f32 %v724, 0.0
      %v757 = vmax.f32 %v725, 0.0
      %v758 = vmax.f32 %v726, 0.0
      %v759 = vmax.f32 %v727, 0.0
      %v760 = vmax.f32 %v728, 0.0
      %v761 = vmax.f32 %v729, 0.0
      %v762 = vmax.f32 %v730, 0.0
      %v763 = vmax.f32 %v731, 0.0
      %v764 = vmax.f32 %v732, 0.0
      %v765 = vmax.f32 %v733, 0.0
      %v766 = vmax.f32 %v734, 0.0
      %v767 = vmax.f32 %v735, 0.0
      %v768 = vmax.f32 %v736, 0.0
      %v769 = vmax.f32 %v737, 0.0
      %v770 = vmax.f32 %v738, 0.0
      %v771 = vmax.f32 %v739, 0.0
      %v772 = vmax.f32 %v740, 0.0
      %v773 = vmax.f32 %v741, 0.0
      %v774 = vmax.f32 %v742, 0.0
      %v775 = vmax.f32 %v743, 0.0
      %v776 = vmax.f32 %v744, 0.0
      %v777 = vmax.f32 %v745, 0.0
      %v778 = vmax.f32 %v746, 0.0
      %v779 = vmax.f32 %v747, 0.0
      %v780 = vpack.c.bf16 %v749, %v748
      %v781 = vpack.c.bf16 %v751, %v750
      %v782 = vpack.c.bf16 %v753, %v752
      %v783 = vpack.c.bf16 %v755, %v754
      %v784 = vpack.c.bf16 %v757, %v756
      %v785 = vpack.c.bf16 %v759, %v758
      %v786 = vpack.c.bf16 %v761, %v760
      %v787 = vpack.c.bf16 %v763, %v762
      %v788 = vpack.c.bf16 %v765, %v764
      %v789 = vpack.c.bf16 %v767, %v766
      %v790 = vpack.c.bf16 %v769, %v768
      %v791 = vpack.c.bf16 %v771, %v770
      %v792 = vpack.c.bf16 %v773, %v772
      %v793 = vpack.c.bf16 %v775, %v774
      %v794 = vpack.c.bf16 %v777, %v776
      %v795 = vpack.c.bf16 %v779, %v778
      %796 = vst [vmem:[#allocation2] sm:$0xf] 0
      %797 = vst [vmem:[#allocation2 + $0x4] sm:$0xf] 0
      %s798 = scalar_lea.vmem [#allocation2], 136
      %799 = vst [vmem:[%s798] sm:$0xf] 0
      %800 = vst [vmem:[%s798 + $0x4] sm:$0xf] 0
      %s801 = scalar_lea.vmem [#allocation2], 144
      %802 = vst [vmem:[%s801] sm:$0xf] 0
      %803 = vst [vmem:[%s801 + $0x4] sm:$0xf] 0
      %s804 = scalar_lea.vmem [#allocation2], 280
      %805 = vst [vmem:[%s804] sm:$0xf] 0
      %806 = vst [vmem:[%s804 + $0x4] sm:$0xf] 0
      %s807 = scalar_lea.vmem [#allocation2], 288
      %808 = vst [vmem:[%s807] sm:$0xf] 0
      %809 = vst [vmem:[%s807 + $0x4] sm:$0xf] 0
      %s810 = scalar_lea.vmem [#allocation2], 424
      %811 = vst [vmem:[%s810] sm:$0xf] 0
      %812 = vst [vmem:[%s810 + $0x4] sm:$0xf] 0
      %v829 = vunpack.c.l.b16 %v780
      %v830 = vunpack.c.h.b16 %v780
      %v831 = vunpack.c.l.b16 %v781
      %v832 = vunpack.c.h.b16 %v781
      %v833 = vunpack.c.l.b16 %v782
      %v834 = vunpack.c.h.b16 %v782
      %v835 = vunpack.c.l.b16 %v783
      %v836 = vunpack.c.h.b16 %v783
      %v837 = vunpack.c.l.b16 %v784
      %v838 = vunpack.c.h.b16 %v784
      %v839 = vunpack.c.l.b16 %v785
      %v840 = vunpack.c.h.b16 %v785
      %v841 = vunpack.c.l.b16 %v786
      %v842 = vunpack.c.h.b16 %v786
      %v843 = vunpack.c.l.b16 %v787
      %v844 = vunpack.c.h.b16 %v787
      %v845 = vunpack.c.l.b16 %v788
      %v846 = vunpack.c.h.b16 %v788
      %v847 = vunpack.c.l.b16 %v789
      %v848 = vunpack.c.h.b16 %v789
      %v849 = vunpack.c.l.b16 %v790
      %v850 = vunpack.c.h.b16 %v790
      %v851 = vunpack.c.l.b16 %v791
      %v852 = vunpack.c.h.b16 %v791
      %v853 = vunpack.c.l.b16 %v792
      %v854 = vunpack.c.h.b16 %v792
      %v855 = vunpack.c.l.b16 %v793
      %v856 = vunpack.c.h.b16 %v793
      %v857 = vunpack.c.l.b16 %v794
      %v858 = vunpack.c.h.b16 %v794
      %v859 = vunpack.c.l.b16 %v795
      %v860 = vunpack.c.h.b16 %v795
      %v861 = vpack.c.b16 %v829, %v829
      %v862 = vpack.c.b16 %v830, %v830
      %v863 = vpack.c.b16 %v831, %v831
      %v864 = vpack.c.b16 %v832, %v832
      %v865 = vpack.c.b16 %v833, %v833
      %v866 = vpack.c.b16 %v834, %v834
      %v867 = vpack.c.b16 %v835, %v835
      %v868 = vpack.c.b16 %v836, %v836
      %v869 = vpack.c.b16 %v837, %v837
      %v870 = vpack.c.b16 %v838, %v838
      %v871 = vpack.c.b16 %v839, %v839
      %v872 = vpack.c.b16 %v840, %v840
      %v873 = vpack.c.b16 %v841, %v841
      %v874 = vpack.c.b16 %v842, %v842
      %v875 = vpack.c.b16 %v843, %v843
      %v876 = vpack.c.b16 %v844, %v844
      %v877 = vpack.c.b16 %v845, %v845
      %v878 = vpack.c.b16 %v846, %v846
      %v879 = vpack.c.b16 %v847, %v847
      %v880 = vpack.c.b16 %v848, %v848
      %v881 = vpack.c.b16 %v849, %v849
      %v882 = vpack.c.b16 %v850, %v850
      %v883 = vpack.c.b16 %v851, %v851
      %v884 = vpack.c.b16 %v852, %v852
      %v885 = vpack.c.b16 %v853, %v853
      %v886 = vpack.c.b16 %v854, %v854
      %v887 = vpack.c.b16 %v855, %v855
      %v888 = vpack.c.b16 %v856, %v856
      %v889 = vpack.c.b16 %v857, %v857
      %v890 = vpack.c.b16 %v858, %v858
      %v891 = vpack.c.b16 %v859, %v859
      %v892 = vpack.c.b16 %v860, %v860
      %s925 = scalar_lea.vmem [#allocation2], 152
      %926 = vst [vmem:[%s925] sm:$0xf] %v861
      %927 = vst [vmem:[%s925 + $0x4] sm:$0xf] %v862
      %928 = vst [vmem:[%s925 + $0x8] sm:$0xf] %v863
      %929 = vst [vmem:[%s925 + $0xc] sm:$0xf] %v864
      %930 = vst [vmem:[%s925 + $0x10] sm:$0xf] %v865
      %931 = vst [vmem:[%s925 + $0x14] sm:$0xf] %v866
      %932 = vst [vmem:[%s925 + $0x18] sm:$0xf] %v867
      %933 = vst [vmem:[%s925 + $0x1c] sm:$0xf] %v868
      %934 = vst [vmem:[%s925 + $0x20] sm:$0xf] %v869
      %935 = vst [vmem:[%s925 + $0x24] sm:$0xf] %v870
      %936 = vst [vmem:[%s925 + $0x28] sm:$0xf] %v871
      %937 = vst [vmem:[%s925 + $0x2c] sm:$0xf] %v872
      %938 = vst [vmem:[%s925 + $0x30] sm:$0xf] %v873
      %939 = vst [vmem:[%s925 + $0x34] sm:$0xf] %v874
      %940 = vst [vmem:[%s925 + $0x38] sm:$0xf] %v875
      %941 = vst [vmem:[%s925 + $0x3c] sm:$0xf] %v876
      %942 = vst [vmem:[%s925 + $0x40] sm:$0xf] %v877
      %943 = vst [vmem:[%s925 + $0x44] sm:$0xf] %v878
      %944 = vst [vmem:[%s925 + $0x48] sm:$0xf] %v879
      %945 = vst [vmem:[%s925 + $0x4c] sm:$0xf] %v880
      %946 = vst [vmem:[%s925 + $0x50] sm:$0xf] %v881
      %947 = vst [vmem:[%s925 + $0x54] sm:$0xf] %v882
      %948 = vst [vmem:[%s925 + $0x58] sm:$0xf] %v883
      %949 = vst [vmem:[%s925 + $0x5c] sm:$0xf] %v884
      %950 = vst [vmem:[%s925 + $0x60] sm:$0xf] %v885
      %951 = vst [vmem:[%s925 + $0x64] sm:$0xf] %v886
      %952 = vst [vmem:[%s925 + $0x68] sm:$0xf] %v887
      %953 = vst [vmem:[%s925 + $0x6c] sm:$0xf] %v888
      %954 = vst [vmem:[%s925 + $0x70] sm:$0xf] %v889
      %955 = vst [vmem:[%s925 + $0x74] sm:$0xf] %v890
      %956 = vst [vmem:[%s925 + $0x78] sm:$0xf] %v891
      %957 = vst [vmem:[%s925 + $0x7c] sm:$0xf] %v892
      %s958 = scalar_lea.vmem [#allocation2], 8
      %vm959 = vcmask 1040384
      %vm960 = vsmask.f32 256
      %vm961 = vmand %vm959, %vm960
      %v962 = vld [vmem:[%s958] sm:$0x1]
      %v963 = vsel %vm961, 0, %v962
      %964 = vst [vmem:[%s958] sm:$0x1] %v963
      %v965 = vld [vmem:[%s958 + $0x8] sm:$0x1]
      %v966 = vsel %vm961, 0, %v965
      %967 = vst [vmem:[%s958 + $0x8] sm:$0x1] %v966
      %v968 = vld [vmem:[%s958 + $0x10] sm:$0x1]
      %v969 = vsel %vm961, 0, %v968
      %970 = vst [vmem:[%s958 + $0x10] sm:$0x1] %v969
      %v971 = vld [vmem:[%s958 + $0x18] sm:$0x1]
      %v972 = vsel %vm961, 0, %v971
      %973 = vst [vmem:[%s958 + $0x18] sm:$0x1] %v972
      %v974 = vld [vmem:[%s958 + $0x20] sm:$0x1]
      %v975 = vsel %vm961, 0, %v974
      %976 = vst [vmem:[%s958 + $0x20] sm:$0x1] %v975
      %v977 = vld [vmem:[%s958 + $0x28] sm:$0x1]
      %v978 = vsel %vm961, 0, %v977
      %979 = vst [vmem:[%s958 + $0x28] sm:$0x1] %v978
      %v980 = vld [vmem:[%s958 + $0x30] sm:$0x1]
      %v981 = vsel %vm961, 0, %v980
      %982 = vst [vmem:[%s958 + $0x30] sm:$0x1] %v981
      %v983 = vld [vmem:[%s958 + $0x38] sm:$0x1]
      %v984 = vsel %vm961, 0, %v983
      %985 = vst [vmem:[%s958 + $0x38] sm:$0x1] %v984
      %v986 = vld [vmem:[%s958 + $0x40] sm:$0x1]
      %v987 = vsel %vm961, 0, %v986
      %988 = vst [vmem:[%s958 + $0x40] sm:$0x1] %v987
      %v989 = vld [vmem:[%s958 + $0x48] sm:$0x1]
      %v990 = vsel %vm961, 0, %v989
      %991 = vst [vmem:[%s958 + $0x48] sm:$0x1] %v990
      %v992 = vld [vmem:[%s958 + $0x50] sm:$0x1]
      %v993 = vsel %vm961, 0, %v992
      %994 = vst [vmem:[%s958 + $0x50] sm:$0x1] %v993
      %v995 = vld [vmem:[%s958 + $0x58] sm:$0x1]
      %v996 = vsel %vm961, 0, %v995
      %997 = vst [vmem:[%s958 + $0x58] sm:$0x1] %v996
      %v998 = vld [vmem:[%s958 + $0x60] sm:$0x1]
      %v999 = vsel %vm961, 0, %v998
      %1000 = vst [vmem:[%s958 + $0x60] sm:$0x1] %v999
      %v1001 = vld [vmem:[%s958 + $0x68] sm:$0x1]
      %v1002 = vsel %vm961, 0, %v1001
      %1003 = vst [vmem:[%s958 + $0x68] sm:$0x1] %v1002
      %v1004 = vld [vmem:[%s958 + $0x70] sm:$0x1]
      %v1005 = vsel %vm961, 0, %v1004
      %1006 = vst [vmem:[%s958 + $0x70] sm:$0x1] %v1005
      %v1007 = vld [vmem:[%s958 + $0x78] sm:$0x1]
      %v1008 = vsel %vm961, 0, %v1007
      %1009 = vst [vmem:[%s958 + $0x78] sm:$0x1] %v1008
      %vm1010 = vsmask.f32 4368
      %vm1011 = vmor %vm960, %vm1010
      %v1013 = vshrl.u32 %v861, 16
      %v1015 = vrot.slane %v1013, 7
      %v1016 = vshll.u32 %v861, 16
      %v1018 = vor.u32 %v1015, %v1016
      %v1019 = vrot.slane %v1015, 4
      %v1021 = vshrl.u32 %v862, 16
      %v1023 = vrot.slane %v1021, 7
      %v1024 = vshll.u32 %v862, 16
      %v1026 = vor.u32 %v1023, %v1024
      %v1027 = vsel %vm1011, %v1019, %v1026
      %v1029 = vshrl.u32 %v863, 16
      %v1031 = vrot.slane %v1029, 7
      %v1032 = vshll.u32 %v863, 16
      %v1034 = vor.u32 %v1031, %v1032
      %v1035 = vrot.slane %v1031, 4
      %v1037 = vshrl.u32 %v864, 16
      %v1039 = vrot.slane %v1037, 7
      %v1040 = vshll.u32 %v864, 16
      %v1042 = vor.u32 %v1039, %v1040
      %v1043 = vsel %vm1011, %v1035, %v1042
      %v1045 = vshrl.u32 %v865, 16
      %v1047 = vrot.slane %v1045, 7
      %v1048 = vshll.u32 %v865, 16
      %v1050 = vor.u32 %v1047, %v1048
      %v1051 = vrot.slane %v1047, 4
      %v1053 = vshrl.u32 %v866, 16
      %v1055 = vrot.slane %v1053, 7
      %v1056 = vshll.u32 %v866, 16
      %v1058 = vor.u32 %v1055, %v1056
      %v1059 = vsel %vm1011, %v1051, %v1058
      %v1061 = vshrl.u32 %v867, 16
      %v1063 = vrot.slane %v1061, 7
      %v1064 = vshll.u32 %v867, 16
      %v1066 = vor.u32 %v1063, %v1064
      %v1067 = vrot.slane %v1063, 4
      %v1069 = vshrl.u32 %v868, 16
      %v1071 = vrot.slane %v1069, 7
      %v1072 = vshll.u32 %v868, 16
      %v1074 = vor.u32 %v1071, %v1072
      %v1075 = vsel %vm1011, %v1067, %v1074
      %v1077 = vshrl.u32 %v869, 16
      %v1079 = vrot.slane %v1077, 7
      %v1080 = vshll.u32 %v869, 16
      %v1082 = vor.u32 %v1079, %v1080
      %v1083 = vrot.slane %v1079, 4
      %v1085 = vshrl.u32 %v870, 16
      %v1087 = vrot.slane %v1085, 7
      %v1088 = vshll.u32 %v870, 16
      %v1090 = vor.u32 %v1087, %v1088
      %v1091 = vsel %vm1011, %v1083, %v1090
      %v1093 = vshrl.u32 %v871, 16
      %v1095 = vrot.slane %v1093, 7
      %v1096 = vshll.u32 %v871, 16
      %v1098 = vor.u32 %v1095, %v1096
      %v1099 = vrot.slane %v1095, 4
      %v1101 = vshrl.u32 %v872, 16
      %v1103 = vrot.slane %v1101, 7
      %v1104 = vshll.u32 %v872, 16
      %v1106 = vor.u32 %v1103, %v1104
      %v1107 = vsel %vm1011, %v1099, %v1106
      %v1109 = vshrl.u32 %v873, 16
      %v1111 = vrot.slane %v1109, 7
      %v1112 = vshll.u32 %v873, 16
      %v1114 = vor.u32 %v1111, %v1112
      %v1115 = vrot.slane %v1111, 4
      %v1117 = vshrl.u32 %v874, 16
      %v1119 = vrot.slane %v1117, 7
      %v1120 = vshll.u32 %v874, 16
      %v1122 = vor.u32 %v1119, %v1120
      %v1123 = vsel %vm1011, %v1115, %v1122
      %v1125 = vshrl.u32 %v875, 16
      %v1127 = vrot.slane %v1125, 7
      %v1128 = vshll.u32 %v875, 16
      %v1130 = vor.u32 %v1127, %v1128
      %v1131 = vrot.slane %v1127, 4
      %v1133 = vshrl.u32 %v876, 16
      %v1135 = vrot.slane %v1133, 7
      %v1136 = vshll.u32 %v876, 16
      %v1138 = vor.u32 %v1135, %v1136
      %v1139 = vsel %vm1011, %v1131, %v1138
      %v1141 = vshrl.u32 %v877, 16
      %v1143 = vrot.slane %v1141, 7
      %v1144 = vshll.u32 %v877, 16
      %v1146 = vor.u32 %v1143, %v1144
      %v1147 = vrot.slane %v1143, 4
      %v1149 = vshrl.u32 %v878, 16
      %v1151 = vrot.slane %v1149, 7
      %v1152 = vshll.u32 %v878, 16
      %v1154 = vor.u32 %v1151, %v1152
      %v1155 = vsel %vm1011, %v1147, %v1154
      %v1157 = vshrl.u32 %v879, 16
      %v1159 = vrot.slane %v1157, 7
      %v1160 = vshll.u32 %v879, 16
      %v1162 = vor.u32 %v1159, %v1160
      %v1163 = vrot.slane %v1159, 4
      %v1165 = vshrl.u32 %v880, 16
      %v1167 = vrot.slane %v1165, 7
      %v1168 = vshll.u32 %v880, 16
      %v1170 = vor.u32 %v1167, %v1168
      %v1171 = vsel %vm1011, %v1163, %v1170
      %v1173 = vshrl.u32 %v881, 16
      %v1175 = vrot.slane %v1173, 7
      %v1176 = vshll.u32 %v881, 16
      %v1178 = vor.u32 %v1175, %v1176
      %v1179 = vrot.slane %v1175, 4
      %v1181 = vshrl.u32 %v882, 16
      %v1183 = vrot.slane %v1181, 7
      %v1184 = vshll.u32 %v882, 16
      %v1186 = vor.u32 %v1183, %v1184
      %v1187 = vsel %vm1011, %v1179, %v1186
      %v1189 = vshrl.u32 %v883, 16
      %v1191 = vrot.slane %v1189, 7
      %v1192 = vshll.u32 %v883, 16
      %v1194 = vor.u32 %v1191, %v1192
      %v1195 = vrot.slane %v1191, 4
      %v1197 = vshrl.u32 %v884, 16
      %v1199 = vrot.slane %v1197, 7
      %v1200 = vshll.u32 %v884, 16
      %v1202 = vor.u32 %v1199, %v1200
      %v1203 = vsel %vm1011, %v1195, %v1202
      %v1205 = vshrl.u32 %v885, 16
      %v1207 = vrot.slane %v1205, 7
      %v1208 = vshll.u32 %v885, 16
      %v1210 = vor.u32 %v1207, %v1208
      %v1211 = vrot.slane %v1207, 4
      %v1213 = vshrl.u32 %v886, 16
      %v1215 = vrot.slane %v1213, 7
      %v1216 = vshll.u32 %v886, 16
      %v1218 = vor.u32 %v1215, %v1216
      %v1219 = vsel %vm1011, %v1211, %v1218
      %v1221 = vshrl.u32 %v887, 16
      %v1223 = vrot.slane %v1221, 7
      %v1224 = vshll.u32 %v887, 16
      %v1226 = vor.u32 %v1223, %v1224
      %v1227 = vrot.slane %v1223, 4
      %v1229 = vshrl.u32 %v888, 16
      %v1231 = vrot.slane %v1229, 7
      %v1232 = vshll.u32 %v888, 16
      %v1234 = vor.u32 %v1231, %v1232
      %v1235 = vsel %vm1011, %v1227, %v1234
      %v1237 = vshrl.u32 %v889, 16
      %v1239 = vrot.slane %v1237, 7
      %v1240 = vshll.u32 %v889, 16
      %v1242 = vor.u32 %v1239, %v1240
      %v1243 = vrot.slane %v1239, 4
      %v1245 = vshrl.u32 %v890, 16
      %v1247 = vrot.slane %v1245, 7
      %v1248 = vshll.u32 %v890, 16
      %v1250 = vor.u32 %v1247, %v1248
      %v1251 = vsel %vm1011, %v1243, %v1250
      %v1253 = vshrl.u32 %v891, 16
      %v1255 = vrot.slane %v1253, 7
      %v1256 = vshll.u32 %v891, 16
      %v1258 = vor.u32 %v1255, %v1256
      %v1259 = vrot.slane %v1255, 4
      %v1261 = vshrl.u32 %v892, 16
      %v1263 = vrot.slane %v1261, 7
      %v1264 = vshll.u32 %v892, 16
      %v1266 = vor.u32 %v1263, %v1264
      %v1267 = vsel %vm1011, %v1259, %v1266
      %vm1300 = vcmask 1043456
      %vm1301 = vsmask.f32 7938
      %vm1302 = vmand %vm1300, %vm1301
      %v1303 = vld [vmem:[%s958] sm:$0xf]
      %v1304 = vsel %vm1302, %v1018, %v1303
      %1305 = vst [vmem:[%s958] sm:$0xf] %v1304
      %1306 = vst [vmem:[%s958 + $0x4] sm:$0xf] %v1027
      %v1307 = vld [vmem:[%s958 + $0x8] sm:$0xf]
      %v1308 = vsel %vm1302, %v1034, %v1307
      %1309 = vst [vmem:[%s958 + $0x8] sm:$0xf] %v1308
      %1310 = vst [vmem:[%s958 + $0xc] sm:$0xf] %v1043
      %v1311 = vld [vmem:[%s958 + $0x10] sm:$0xf]
      %v1312 = vsel %vm1302, %v1050, %v1311
      %1313 = vst [vmem:[%s958 + $0x10] sm:$0xf] %v1312
      %1314 = vst [vmem:[%s958 + $0x14] sm:$0xf] %v1059
      %v1315 = vld [vmem:[%s958 + $0x18] sm:$0xf]
      %v1316 = vsel %vm1302, %v1066, %v1315
      %1317 = vst [vmem:[%s958 + $0x18] sm:$0xf] %v1316
      %1318 = vst [vmem:[%s958 + $0x1c] sm:$0xf] %v1075
      %v1319 = vld [vmem:[%s958 + $0x20] sm:$0xf]
      %v1320 = vsel %vm1302, %v1082, %v1319
      %1321 = vst [vmem:[%s958 + $0x20] sm:$0xf] %v1320
      %1322 = vst [vmem:[%s958 + $0x24] sm:$0xf] %v1091
      %v1323 = vld [vmem:[%s958 + $0x28] sm:$0xf]
      %v1324 = vsel %vm1302, %v1098, %v1323
      %1325 = vst [vmem:[%s958 + $0x28] sm:$0xf] %v1324
      %1326 = vst [vmem:[%s958 + $0x2c] sm:$0xf] %v1107
      %v1327 = vld [vmem:[%s958 + $0x30] sm:$0xf]
      %v1328 = vsel %vm1302, %v1114, %v1327
      %1329 = vst [vmem:[%s958 + $0x30] sm:$0xf] %v1328
      %1330 = vst [vmem:[%s958 + $0x34] sm:$0xf] %v1123
      %v1331 = vld [vmem:[%s958 + $0x38] sm:$0xf]
      %v1332 = vsel %vm1302, %v1130, %v1331
      %1333 = vst [vmem:[%s958 + $0x38] sm:$0xf] %v1332
      %1334 = vst [vmem:[%s958 + $0x3c] sm:$0xf] %v1139
      %v1335 = vld [vmem:[%s958 + $0x40] sm:$0xf]
      %v1336 = vsel %vm1302, %v1146, %v1335
      %1337 = vst [vmem:[%s958 + $0x40] sm:$0xf] %v1336
      %1338 = vst [vmem:[%s958 + $0x44] sm:$0xf] %v1155
      %v1339 = vld [vmem:[%s958 + $0x48] sm:$0xf]
      %v1340 = vsel %vm1302, %v1162, %v1339
      %1341 = vst [vmem:[%s958 + $0x48] sm:$0xf] %v1340
      %1342 = vst [vmem:[%s958 + $0x4c] sm:$0xf] %v1171
      %v1343 = vld [vmem:[%s958 + $0x50] sm:$0xf]
      %v1344 = vsel %vm1302, %v1178, %v1343
      %1345 = vst [vmem:[%s958 + $0x50] sm:$0xf] %v1344
      %1346 = vst [vmem:[%s958 + $0x54] sm:$0xf] %v1187
      %v1347 = vld [vmem:[%s958 + $0x58] sm:$0xf]
      %v1348 = vsel %vm1302, %v1194, %v1347
      %1349 = vst [vmem:[%s958 + $0x58] sm:$0xf] %v1348
      %1350 = vst [vmem:[%s958 + $0x5c] sm:$0xf] %v1203
      %v1351 = vld [vmem:[%s958 + $0x60] sm:$0xf]
      %v1352 = vsel %vm1302, %v1210, %v1351
      %1353 = vst [vmem:[%s958 + $0x60] sm:$0xf] %v1352
      %1354 = vst [vmem:[%s958 + $0x64] sm:$0xf] %v1219
      %v1355 = vld [vmem:[%s958 + $0x68] sm:$0xf]
      %v1356 = vsel %vm1302, %v1226, %v1355
      %1357 = vst [vmem:[%s958 + $0x68] sm:$0xf] %v1356
      %1358 = vst [vmem:[%s958 + $0x6c] sm:$0xf] %v1235
      %v1359 = vld [vmem:[%s958 + $0x70] sm:$0xf]
      %v1360 = vsel %vm1302, %v1242, %v1359
      %1361 = vst [vmem:[%s958 + $0x70] sm:$0xf] %v1360
      %1362 = vst [vmem:[%s958 + $0x74] sm:$0xf] %v1251
      %v1363 = vld [vmem:[%s958 + $0x78] sm:$0xf]
      %v1364 = vsel %vm1302, %v1258, %v1363
      %1365 = vst [vmem:[%s958 + $0x78] sm:$0xf] %v1364
      %1366 = vst [vmem:[%s958 + $0x7c] sm:$0xf] %v1267
      %s1367 = scalar_lea.vmem [#allocation2], 296
      %vm1368 = vcmask 1043459
      %vm1369 = vsmask.f32 7950
      %vm1370 = vmand %vm1368, %vm1369
      %v1371 = vld [vmem:[%s1367 + $0x4] sm:$0x8]
      %v1372 = vsel %vm1370, 0, %v1371
      %1373 = vst [vmem:[%s1367 + $0x4] sm:$0x8] %v1372
      %v1374 = vld [vmem:[%s1367 + $0xc] sm:$0x8]
      %v1375 = vsel %vm1370, 0, %v1374
      %1376 = vst [vmem:[%s1367 + $0xc] sm:$0x8] %v1375
      %v1377 = vld [vmem:[%s1367 + $0x14] sm:$0x8]
      %v1378 = vsel %vm1370, 0, %v1377
      %1379 = vst [vmem:[%s1367 + $0x14] sm:$0x8] %v1378
      %v1380 = vld [vmem:[%s1367 + $0x1c] sm:$0x8]
      %v1381 = vsel %vm1370, 0, %v1380
      %1382 = vst [vmem:[%s1367 + $0x1c] sm:$0x8] %v1381
      %v1383 = vld [vmem:[%s1367 + $0x24] sm:$0x8]
      %v1384 = vsel %vm1370, 0, %v1383
      %1385 = vst [vmem:[%s1367 + $0x24] sm:$0x8] %v1384
      %v1386 = vld [vmem:[%s1367 + $0x2c] sm:$0x8]
      %v1387 = vsel %vm1370, 0, %v1386
      %1388 = vst [vmem:[%s1367 + $0x2c] sm:$0x8] %v1387
      %v1389 = vld [vmem:[%s1367 + $0x34] sm:$0x8]
      %v1390 = vsel %vm1370, 0, %v1389
      %1391 = vst [vmem:[%s1367 + $0x34] sm:$0x8] %v1390
      %v1392 = vld [vmem:[%s1367 + $0x3c] sm:$0x8]
      %v1393 = vsel %vm1370, 0, %v1392
      %1394 = vst [vmem:[%s1367 + $0x3c] sm:$0x8] %v1393
      %v1395 = vld [vmem:[%s1367 + $0x44] sm:$0x8]
      %v1396 = vsel %vm1370, 0, %v1395
      %1397 = vst [vmem:[%s1367 + $0x44] sm:$0x8] %v1396
      %v1398 = vld [vmem:[%s1367 + $0x4c] sm:$0x8]
      %v1399 = vsel %vm1370, 0, %v1398
      %1400 = vst [vmem:[%s1367 + $0x4c] sm:$0x8] %v1399
      %v1401 = vld [vmem:[%s1367 + $0x54] sm:$0x8]
      %v1402 = vsel %vm1370, 0, %v1401
      %1403 = vst [vmem:[%s1367 + $0x54] sm:$0x8] %v1402
      %v1404 = vld [vmem:[%s1367 + $0x5c] sm:$0x8]
      %v1405 = vsel %vm1370, 0, %v1404
      %1406 = vst [vmem:[%s1367 + $0x5c] sm:$0x8] %v1405
      %v1407 = vld [vmem:[%s1367 + $0x64] sm:$0x8]
      %v1408 = vsel %vm1370, 0, %v1407
      %1409 = vst [vmem:[%s1367 + $0x64] sm:$0x8] %v1408
      %v1410 = vld [vmem:[%s1367 + $0x6c] sm:$0x8]
      %v1411 = vsel %vm1370, 0, %v1410
      %1412 = vst [vmem:[%s1367 + $0x6c] sm:$0x8] %v1411
      %v1413 = vld [vmem:[%s1367 + $0x74] sm:$0x8]
      %v1414 = vsel %vm1370, 0, %v1413
      %1415 = vst [vmem:[%s1367 + $0x74] sm:$0x8] %v1414
      %v1416 = vld [vmem:[%s1367 + $0x7c] sm:$0x8]
      %v1417 = vsel %vm1370, 0, %v1416
      %1418 = vst [vmem:[%s1367 + $0x7c] sm:$0x8] %v1417
      %vm1419 = vsmask.f32 3328
      %vm1420 = vsmask.f32 7440
      %vm1421 = vmor %vm1419, %vm1420
      %v1422 = vrot.slane %v1013, 4
      %v1423 = vrot.slane %v1016, 5
      %v1424 = vor.u32 %v1422, %v1423
      %v1425 = vrot.slane %v1424, 4
      %v1426 = vrot.slane %v1024, 5
      %v1427 = vsel %vm1421, %v1425, %v1426
      %v1428 = vrot.slane %v1021, 4
      %v1429 = vor.u32 %v1428, %v1426
      %v1430 = vrot.slane %v1429, 4
      %v1431 = vrot.slane %v1029, 4
      %v1432 = vrot.slane %v1032, 5
      %v1433 = vor.u32 %v1431, %v1432
      %v1434 = vrot.slane %v1433, 4
      %v1435 = vrot.slane %v1040, 5
      %v1436 = vsel %vm1421, %v1434, %v1435
      %v1437 = vrot.slane %v1037, 4
      %v1438 = vor.u32 %v1437, %v1435
      %v1439 = vrot.slane %v1438, 4
      %v1440 = vrot.slane %v1045, 4
      %v1441 = vrot.slane %v1048, 5
      %v1442 = vor.u32 %v1440, %v1441
      %v1443 = vrot.slane %v1442, 4
      %v1444 = vrot.slane %v1056, 5
      %v1445 = vsel %vm1421, %v1443, %v1444
      %v1446 = vrot.slane %v1053, 4
      %v1447 = vor.u32 %v1446, %v1444
      %v1448 = vrot.slane %v1447, 4
      %v1449 = vrot.slane %v1061, 4
      %v1450 = vrot.slane %v1064, 5
      %v1451 = vor.u32 %v1449, %v1450
      %v1452 = vrot.slane %v1451, 4
      %v1453 = vrot.slane %v1072, 5
      %v1454 = vsel %vm1421, %v1452, %v1453
      %v1455 = vrot.slane %v1069, 4
      %v1456 = vor.u32 %v1455, %v1453
      %v1457 = vrot.slane %v1456, 4
      %v1458 = vrot.slane %v1077, 4
      %v1459 = vrot.slane %v1080, 5
      %v1460 = vor.u32 %v1458, %v1459
      %v1461 = vrot.slane %v1460, 4
      %v1462 = vrot.slane %v1088, 5
      %v1463 = vsel %vm1421, %v1461, %v1462
      %v1464 = vrot.slane %v1085, 4
      %v1465 = vor.u32 %v1464, %v1462
      %v1466 = vrot.slane %v1465, 4
      %v1467 = vrot.slane %v1093, 4
      %v1468 = vrot.slane %v1096, 5
      %v1469 = vor.u32 %v1467, %v1468
      %v1470 = vrot.slane %v1469, 4
      %v1471 = vrot.slane %v1104, 5
      %v1472 = vsel %vm1421, %v1470, %v1471
      %v1473 = vrot.slane %v1101, 4
      %v1474 = vor.u32 %v1473, %v1471
      %v1475 = vrot.slane %v1474, 4
      %v1476 = vrot.slane %v1109, 4
      %v1477 = vrot.slane %v1112, 5
      %v1478 = vor.u32 %v1476, %v1477
      %v1479 = vrot.slane %v1478, 4
      %v1480 = vrot.slane %v1120, 5
      %v1481 = vsel %vm1421, %v1479, %v1480
      %v1482 = vrot.slane %v1117, 4
      %v1483 = vor.u32 %v1482, %v1480
      %v1484 = vrot.slane %v1483, 4
      %v1485 = vrot.slane %v1125, 4
      %v1486 = vrot.slane %v1128, 5
      %v1487 = vor.u32 %v1485, %v1486
      %v1488 = vrot.slane %v1487, 4
      %v1489 = vrot.slane %v1136, 5
      %v1490 = vsel %vm1421, %v1488, %v1489
      %v1491 = vrot.slane %v1133, 4
      %v1492 = vor.u32 %v1491, %v1489
      %v1493 = vrot.slane %v1492, 4
      %v1494 = vrot.slane %v1141, 4
      %v1495 = vrot.slane %v1144, 5
      %v1496 = vor.u32 %v1494, %v1495
      %v1497 = vrot.slane %v1496, 4
      %v1498 = vrot.slane %v1152, 5
      %v1499 = vsel %vm1421, %v1497, %v1498
      %v1500 = vrot.slane %v1149, 4
      %v1501 = vor.u32 %v1500, %v1498
      %v1502 = vrot.slane %v1501, 4
      %v1503 = vrot.slane %v1157, 4
      %v1504 = vrot.slane %v1160, 5
      %v1505 = vor.u32 %v1503, %v1504
      %v1506 = vrot.slane %v1505, 4
      %v1507 = vrot.slane %v1168, 5
      %v1508 = vsel %vm1421, %v1506, %v1507
      %v1509 = vrot.slane %v1165, 4
      %v1510 = vor.u32 %v1509, %v1507
      %v1511 = vrot.slane %v1510, 4
      %v1512 = vrot.slane %v1173, 4
      %v1513 = vrot.slane %v1176, 5
      %v1514 = vor.u32 %v1512, %v1513
      %v1515 = vrot.slane %v1514, 4
      %v1516 = vrot.slane %v1184, 5
      %v1517 = vsel %vm1421, %v1515, %v1516
      %v1518 = vrot.slane %v1181, 4
      %v1519 = vor.u32 %v1518, %v1516
      %v1520 = vrot.slane %v1519, 4
      %v1521 = vrot.slane %v1189, 4
      %v1522 = vrot.slane %v1192, 5
      %v1523 = vor.u32 %v1521, %v1522
      %v1524 = vrot.slane %v1523, 4
      %v1525 = vrot.slane %v1200, 5
      %v1526 = vsel %vm1421, %v1524, %v1525
      %v1527 = vrot.slane %v1197, 4
      %v1528 = vor.u32 %v1527, %v1525
      %v1529 = vrot.slane %v1528, 4
      %v1530 = vrot.slane %v1205, 4
      %v1531 = vrot.slane %v1208, 5
      %v1532 = vor.u32 %v1530, %v1531
      %v1533 = vrot.slane %v1532, 4
      %v1534 = vrot.slane %v1216, 5
      %v1535 = vsel %vm1421, %v1533, %v1534
      %v1536 = vrot.slane %v1213, 4
      %v1537 = vor.u32 %v1536, %v1534
      %v1538 = vrot.slane %v1537, 4
      %v1539 = vrot.slane %v1221, 4
      %v1540 = vrot.slane %v1224, 5
      %v1541 = vor.u32 %v1539, %v1540
      %v1542 = vrot.slane %v1541, 4
      %v1543 = vrot.slane %v1232, 5
      %v1544 = vsel %vm1421, %v1542, %v1543
      %v1545 = vrot.slane %v1229, 4
      %v1546 = vor.u32 %v1545, %v1543
      %v1547 = vrot.slane %v1546, 4
      %v1548 = vrot.slane %v1237, 4
      %v1549 = vrot.slane %v1240, 5
      %v1550 = vor.u32 %v1548, %v1549
      %v1551 = vrot.slane %v1550, 4
      %v1552 = vrot.slane %v1248, 5
      %v1553 = vsel %vm1421, %v1551, %v1552
      %v1554 = vrot.slane %v1245, 4
      %v1555 = vor.u32 %v1554, %v1552
      %v1556 = vrot.slane %v1555, 4
      %v1557 = vrot.slane %v1253, 4
      %v1558 = vrot.slane %v1256, 5
      %v1559 = vor.u32 %v1557, %v1558
      %v1560 = vrot.slane %v1559, 4
      %v1561 = vrot.slane %v1264, 5
      %v1562 = vsel %vm1421, %v1560, %v1561
      %v1563 = vrot.slane %v1261, 4
      %v1564 = vor.u32 %v1563, %v1561
      %v1565 = vrot.slane %v1564, 4
      %1598 = vst [vmem:[%s1367] sm:$0xf] %v1427
      %vm1599 = vmand %vm1300, %vm1419
      %v1600 = vld [vmem:[%s1367 + $0x4] sm:$0xf]
      %v1601 = vsel %vm1599, %v1430, %v1600
      %1602 = vst [vmem:[%s1367 + $0x4] sm:$0xf] %v1601
      %1603 = vst [vmem:[%s1367 + $0x8] sm:$0xf] %v1436
      %v1604 = vld [vmem:[%s1367 + $0xc] sm:$0xf]
      %v1605 = vsel %vm1599, %v1439, %v1604
      %1606 = vst [vmem:[%s1367 + $0xc] sm:$0xf] %v1605
      %1607 = vst [vmem:[%s1367 + $0x10] sm:$0xf] %v1445
      %v1608 = vld [vmem:[%s1367 + $0x14] sm:$0xf]
      %v1609 = vsel %vm1599, %v1448, %v1608
      %1610 = vst [vmem:[%s1367 + $0x14] sm:$0xf] %v1609
      %1611 = vst [vmem:[%s1367 + $0x18] sm:$0xf] %v1454
      %v1612 = vld [vmem:[%s1367 + $0x1c] sm:$0xf]
      %v1613 = vsel %vm1599, %v1457, %v1612
      %1614 = vst [vmem:[%s1367 + $0x1c] sm:$0xf] %v1613
      %1615 = vst [vmem:[%s1367 + $0x20] sm:$0xf] %v1463
      %v1616 = vld [vmem:[%s1367 + $0x24] sm:$0xf]
      %v1617 = vsel %vm1599, %v1466, %v1616
      %1618 = vst [vmem:[%s1367 + $0x24] sm:$0xf] %v1617
      %1619 = vst [vmem:[%s1367 + $0x28] sm:$0xf] %v1472
      %v1620 = vld [vmem:[%s1367 + $0x2c] sm:$0xf]
      %v1621 = vsel %vm1599, %v1475, %v1620
      %1622 = vst [vmem:[%s1367 + $0x2c] sm:$0xf] %v1621
      %1623 = vst [vmem:[%s1367 + $0x30] sm:$0xf] %v1481
      %v1624 = vld [vmem:[%s1367 + $0x34] sm:$0xf]
      %v1625 = vsel %vm1599, %v1484, %v1624
      %1626 = vst [vmem:[%s1367 + $0x34] sm:$0xf] %v1625
      %1627 = vst [vmem:[%s1367 + $0x38] sm:$0xf] %v1490
      %v1628 = vld [vmem:[%s1367 + $0x3c] sm:$0xf]
      %v1629 = vsel %vm1599, %v1493, %v1628
      %1630 = vst [vmem:[%s1367 + $0x3c] sm:$0xf] %v1629
      %1631 = vst [vmem:[%s1367 + $0x40] sm:$0xf] %v1499
      %v1632 = vld [vmem:[%s1367 + $0x44] sm:$0xf]
      %v1633 = vsel %vm1599, %v1502, %v1632
      %1634 = vst [vmem:[%s1367 + $0x44] sm:$0xf] %v1633
      %1635 = vst [vmem:[%s1367 + $0x48] sm:$0xf] %v1508
      %v1636 = vld [vmem:[%s1367 + $0x4c] sm:$0xf]
      %v1637 = vsel %vm1599, %v1511, %v1636
      %1638 = vst [vmem:[%s1367 + $0x4c] sm:$0xf] %v1637
      %1639 = vst [vmem:[%s1367 + $0x50] sm:$0xf] %v1517
      %v1640 = vld [vmem:[%s1367 + $0x54] sm:$0xf]
      %v1641 = vsel %vm1599, %v1520, %v1640
      %1642 = vst [vmem:[%s1367 + $0x54] sm:$0xf] %v1641
      %1643 = vst [vmem:[%s1367 + $0x58] sm:$0xf] %v1526
      %v1644 = vld [vmem:[%s1367 + $0x5c] sm:$0xf]
      %v1645 = vsel %vm1599, %v1529, %v1644
      %1646 = vst [vmem:[%s1367 + $0x5c] sm:$0xf] %v1645
      %1647 = vst [vmem:[%s1367 + $0x60] sm:$0xf] %v1535
      %v1648 = vld [vmem:[%s1367 + $0x64] sm:$0xf]
      %v1649 = vsel %vm1599, %v1538, %v1648
      %1650 = vst [vmem:[%s1367 + $0x64] sm:$0xf] %v1649
      %1651 = vst [vmem:[%s1367 + $0x68] sm:$0xf] %v1544
      %v1652 = vld [vmem:[%s1367 + $0x6c] sm:$0xf]
      %v1653 = vsel %vm1599, %v1547, %v1652
      %1654 = vst [vmem:[%s1367 + $0x6c] sm:$0xf] %v1653
      %1655 = vst [vmem:[%s1367 + $0x70] sm:$0xf] %v1553
      %v1656 = vld [vmem:[%s1367 + $0x74] sm:$0xf]
      %v1657 = vsel %vm1599, %v1556, %v1656
      %1658 = vst [vmem:[%s1367 + $0x74] sm:$0xf] %v1657
      %1659 = vst [vmem:[%s1367 + $0x78] sm:$0xf] %v1562
      %v1660 = vld [vmem:[%s1367 + $0x7c] sm:$0xf]
      %v1661 = vsel %vm1599, %v1565, %v1660
      %1662 = vst [vmem:[%s1367 + $0x7c] sm:$0xf] %v1661
      %v1663 = vld [vmem:[#allocation2] sm:$0xf]
      %v1664 = vld [vmem:[#allocation2 + $0x4] sm:$0xf]
      %v1665 = vld [vmem:[#allocation2 + $0x8] sm:$0xf]
      %v1666 = vld [vmem:[#allocation2 + $0xc] sm:$0xf]
      %v1667 = vld [vmem:[#allocation2 + $0x10] sm:$0xf]
      %v1668 = vld [vmem:[#allocation2 + $0x14] sm:$0xf]
      %v1669 = vld [vmem:[#allocation2 + $0x18] sm:$0xf]
      %v1670 = vld [vmem:[#allocation2 + $0x1c] sm:$0xf]
      %v1671 = vld [vmem:[#allocation2 + $0x20] sm:$0xf]
      %v1672 = vld [vmem:[#allocation2 + $0x24] sm:$0xf]
      %v1673 = vld [vmem:[#allocation2 + $0x28] sm:$0xf]
      %v1674 = vld [vmem:[#allocation2 + $0x2c] sm:$0xf]
      %v1675 = vld [vmem:[#allocation2 + $0x30] sm:$0xf]
      %v1676 = vld [vmem:[#allocation2 + $0x34] sm:$0xf]
      %v1677 = vld [vmem:[#allocation2 + $0x38] sm:$0xf]
      %v1678 = vld [vmem:[#allocation2 + $0x3c] sm:$0xf]
      %v1679 = vld [vmem:[#allocation2 + $0x40] sm:$0xf]
      %v1680 = vld [vmem:[#allocation2 + $0x44] sm:$0xf]
      %v1681 = vld [vmem:[#allocation2 + $0x48] sm:$0xf]
      %v1682 = vld [vmem:[#allocation2 + $0x4c] sm:$0xf]
      %v1683 = vld [vmem:[#allocation2 + $0x50] sm:$0xf]
      %v1684 = vld [vmem:[#allocation2 + $0x54] sm:$0xf]
      %v1685 = vld [vmem:[#allocation2 + $0x58] sm:$0xf]
      %v1686 = vld [vmem:[#allocation2 + $0x5c] sm:$0xf]
      %v1687 = vld [vmem:[#allocation2 + $0x60] sm:$0xf]
      %v1688 = vld [vmem:[#allocation2 + $0x64] sm:$0xf]
      %v1689 = vld [vmem:[#allocation2 + $0x68] sm:$0xf]
      %v1690 = vld [vmem:[#allocation2 + $0x6c] sm:$0xf]
      %v1691 = vld [vmem:[#allocation2 + $0x70] sm:$0xf]
      %v1692 = vld [vmem:[#allocation2 + $0x74] sm:$0xf]
      %v1693 = vld [vmem:[#allocation2 + $0x78] sm:$0xf]
      %v1694 = vld [vmem:[#allocation2 + $0x7c] sm:$0xf]
      %v1695 = vld [vmem:[%s2] sm:$0xf]
      %v1696 = vld [vmem:[%s2 + $0x4] sm:$0xf]
      %v1697 = vld [vmem:[%s2 + $0x8] sm:$0xf]
      %v1698 = vld [vmem:[%s2 + $0xc] sm:$0xf]
      %v1699 = vld [vmem:[%s2 + $0x10] sm:$0xf]
      %v1700 = vld [vmem:[%s2 + $0x14] sm:$0xf]
      %v1701 = vld [vmem:[%s2 + $0x18] sm:$0xf]
      %v1702 = vld [vmem:[%s2 + $0x1c] sm:$0xf]
      %v1703 = vld [vmem:[%s2 + $0x20] sm:$0xf]
      %v1704 = vld [vmem:[%s2 + $0x24] sm:$0xf]
      %v1705 = vld [vmem:[%s2 + $0x28] sm:$0xf]
      %v1706 = vld [vmem:[%s2 + $0x2c] sm:$0xf]
      %v1707 = vld [vmem:[%s2 + $0x30] sm:$0xf]
      %v1708 = vld [vmem:[%s2 + $0x34] sm:$0xf]
      %v1709 = vld [vmem:[%s2 + $0x38] sm:$0xf]
      %v1710 = vld [vmem:[%s2 + $0x3c] sm:$0xf]
      %v1711 = vld [vmem:[%s801] sm:$0xf]
      %v1712 = vld [vmem:[%s801 + $0x4] sm:$0xf]
      %v1713 = vld [vmem:[%s801 + $0x8] sm:$0xf]
      %v1714 = vld [vmem:[%s801 + $0xc] sm:$0xf]
      %v1715 = vld [vmem:[%s801 + $0x10] sm:$0xf]
      %v1716 = vld [vmem:[%s801 + $0x14] sm:$0xf]
      %v1717 = vld [vmem:[%s801 + $0x18] sm:$0xf]
      %v1718 = vld [vmem:[%s801 + $0x1c] sm:$0xf]
      %v1719 = vld [vmem:[%s801 + $0x20] sm:$0xf]
      %v1720 = vld [vmem:[%s801 + $0x24] sm:$0xf]
      %v1721 = vld [vmem:[%s801 + $0x28] sm:$0xf]
      %v1722 = vld [vmem:[%s801 + $0x2c] sm:$0xf]
      %v1723 = vld [vmem:[%s801 + $0x30] sm:$0xf]
      %v1724 = vld [vmem:[%s801 + $0x34] sm:$0xf]
      %v1725 = vld [vmem:[%s801 + $0x38] sm:$0xf]
      %v1726 = vld [vmem:[%s801 + $0x3c] sm:$0xf]
      %v1727 = vld [vmem:[%s801 + $0x40] sm:$0xf]
      %v1728 = vld [vmem:[%s801 + $0x44] sm:$0xf]
      %v1729 = vld [vmem:[%s801 + $0x48] sm:$0xf]
      %v1730 = vld [vmem:[%s801 + $0x4c] sm:$0xf]
      %v1731 = vld [vmem:[%s801 + $0x50] sm:$0xf]
      %v1732 = vld [vmem:[%s801 + $0x54] sm:$0xf]
      %v1733 = vld [vmem:[%s801 + $0x58] sm:$0xf]
      %v1734 = vld [vmem:[%s801 + $0x5c] sm:$0xf]
      %v1735 = vld [vmem:[%s801 + $0x60] sm:$0xf]
      %v1736 = vld [vmem:[%s801 + $0x64] sm:$0xf]
      %v1737 = vld [vmem:[%s801 + $0x68] sm:$0xf]
      %v1738 = vld [vmem:[%s801 + $0x6c] sm:$0xf]
      %v1739 = vld [vmem:[%s801 + $0x70] sm:$0xf]
      %v1740 = vld [vmem:[%s801 + $0x74] sm:$0xf]
      %v1741 = vld [vmem:[%s801 + $0x78] sm:$0xf]
      %v1742 = vld [vmem:[%s801 + $0x7c] sm:$0xf]
      %v1743 = vld [vmem:[%s2 + $0x40] sm:$0xf]
      %v1744 = vld [vmem:[%s2 + $0x44] sm:$0xf]
      %v1745 = vld [vmem:[%s2 + $0x48] sm:$0xf]
      %v1746 = vld [vmem:[%s2 + $0x4c] sm:$0xf]
      %v1747 = vld [vmem:[%s2 + $0x50] sm:$0xf]
      %v1748 = vld [vmem:[%s2 + $0x54] sm:$0xf]
      %v1749 = vld [vmem:[%s2 + $0x58] sm:$0xf]
      %v1750 = vld [vmem:[%s2 + $0x5c] sm:$0xf]
      %v1751 = vld [vmem:[%s2 + $0x60] sm:$0xf]
      %v1752 = vld [vmem:[%s2 + $0x64] sm:$0xf]
      %v1753 = vld [vmem:[%s2 + $0x68] sm:$0xf]
      %v1754 = vld [vmem:[%s2 + $0x6c] sm:$0xf]
      %v1755 = vld [vmem:[%s2 + $0x70] sm:$0xf]
      %v1756 = vld [vmem:[%s2 + $0x74] sm:$0xf]
      %v1757 = vld [vmem:[%s2 + $0x78] sm:$0xf]
      %v1758 = vld [vmem:[%s2 + $0x7c] sm:$0xf]
      %v1791 = vunpack.c.l.b16 %v1711
      %v1792 = vunpack.c.l.b16 %v1712
      %v1793 = vunpack.c.l.b16 %v1713
      %v1794 = vunpack.c.l.b16 %v1714
      %v1795 = vunpack.c.l.b16 %v1715
      %v1796 = vunpack.c.l.b16 %v1716
      %v1797 = vunpack.c.l.b16 %v1717
      %v1798 = vunpack.c.l.b16 %v1718
      %v1799 = vunpack.c.l.b16 %v1719
      %v1800 = vunpack.c.l.b16 %v1720
      %v1801 = vunpack.c.l.b16 %v1721
      %v1802 = vunpack.c.l.b16 %v1722
      %v1803 = vunpack.c.l.b16 %v1723
      %v1804 = vunpack.c.l.b16 %v1724
      %v1805 = vunpack.c.l.b16 %v1725
      %v1806 = vunpack.c.l.b16 %v1726
      %v1807 = vunpack.c.l.b16 %v1727
      %v1808 = vunpack.c.l.b16 %v1728
      %v1809 = vunpack.c.l.b16 %v1729
      %v1810 = vunpack.c.l.b16 %v1730
      %v1811 = vunpack.c.l.b16 %v1731
      %v1812 = vunpack.c.l.b16 %v1732
      %v1813 = vunpack.c.l.b16 %v1733
      %v1814 = vunpack.c.l.b16 %v1734
      %v1815 = vunpack.c.l.b16 %v1735
      %v1816 = vunpack.c.l.b16 %v1736
      %v1817 = vunpack.c.l.b16 %v1737
      %v1818 = vunpack.c.l.b16 %v1738
      %v1819 = vunpack.c.l.b16 %v1739
      %v1820 = vunpack.c.l.b16 %v1740
      %v1821 = vunpack.c.l.b16 %v1741
      %v1822 = vunpack.c.l.b16 %v1742
      %v1823 = vpack.c.b16 %v1792, %v1791
      %v1824 = vpack.c.b16 %v1794, %v1793
      %v1825 = vpack.c.b16 %v1796, %v1795
      %v1826 = vpack.c.b16 %v1798, %v1797
      %v1827 = vpack.c.b16 %v1800, %v1799
      %v1828 = vpack.c.b16 %v1802, %v1801
      %v1829 = vpack.c.b16 %v1804, %v1803
      %v1830 = vpack.c.b16 %v1806, %v1805
      %v1831 = vpack.c.b16 %v1808, %v1807
      %v1832 = vpack.c.b16 %v1810, %v1809
      %v1833 = vpack.c.b16 %v1812, %v1811
      %v1834 = vpack.c.b16 %v1814, %v1813
      %v1835 = vpack.c.b16 %v1816, %v1815
      %v1836 = vpack.c.b16 %v1818, %v1817
      %v1837 = vpack.c.b16 %v1820, %v1819
      %v1838 = vpack.c.b16 %v1822, %v1821
      %v1871 = vunpack.c.l.b16 %v1743
      %v1872 = vunpack.c.l.b16 %v1744
      %v1873 = vunpack.c.l.b16 %v1745
      %v1874 = vunpack.c.l.b16 %v1746
      %v1875 = vunpack.c.l.b16 %v1747
      %v1876 = vunpack.c.l.b16 %v1748
      %v1877 = vunpack.c.l.b16 %v1749
      %v1878 = vunpack.c.l.b16 %v1750
      %v1879 = vunpack.c.l.b16 %v1751
      %v1880 = vunpack.c.l.b16 %v1752
      %v1881 = vunpack.c.l.b16 %v1753
      %v1882 = vunpack.c.l.b16 %v1754
      %v1883 = vunpack.c.l.b16 %v1755
      %v1884 = vunpack.c.l.b16 %v1756
      %v1885 = vunpack.c.l.b16 %v1757
      %v1886 = vunpack.c.l.b16 %v1758
      %v1887 = vpack.c.b16 %v1872, %v1871
      %v1888 = vpack.c.b16 %v1874, %v1873
      %v1889 = vpack.c.b16 %v1876, %v1875
      %v1890 = vpack.c.b16 %v1878, %v1877
      %v1891 = vpack.c.b16 %v1880, %v1879
      %v1892 = vpack.c.b16 %v1882, %v1881
      %v1893 = vpack.c.b16 %v1884, %v1883
      %v1894 = vpack.c.b16 %v1886, %v1885
      %1903 = vmatprep.subr.bf16.mxu0 0
      %1904 = vmatpush1.bf16.msra.mxu0 %v1894
      %1905 = vmatprep.subr.bf16.mxu0 0
      %1906 = vmatpush1.bf16.msra.mxu0 %v1893
      %1907 = vmatprep.subr.bf16.mxu0 0
      %1908 = vmatpush1.bf16.msra.mxu0 %v1892
      %1909 = vmatprep.subr.bf16.mxu0 0
      %1910 = vmatpush1.bf16.msra.mxu0 %v1891
      %1911 = vmatprep.subr.bf16.mxu0 0
      %1912 = vmatpush1.bf16.msra.mxu0 %v1890
      %1913 = vmatprep.subr.bf16.mxu0 0
      %1914 = vmatpush1.bf16.msra.mxu0 %v1889
      %1915 = vmatprep.subr.bf16.mxu0 0
      %1916 = vmatpush1.bf16.msra.mxu0 %v1888
      %1917 = vmatprep.subr.bf16.mxu0 0
      %1918 = vmatpush1.bf16.msra.mxu0 %v1887
      %1919 = vmatprep.subr.bf16.mxu0 0
      %1920 = vmatpush2.bf16.msra.mxu0 0
      %1921 = vmatprep.subr.bf16.mxu0 0
      %1922 = vmatpush2.bf16.msra.mxu0 0
      %1923 = vmatprep.subr.bf16.mxu0 0
      %1924 = vmatpush2.bf16.msra.mxu0 0
      %1925 = vmatprep.subr.bf16.mxu0 0
      %1926 = vmatpush2.bf16.msra.mxu0 0
      %1927 = vmatprep.subr.bf16.mxu0 0
      %1928 = vmatpush2.bf16.msra.mxu0 0
      %1929 = vmatprep.subr.bf16.mxu0 0
      %1930 = vmatpush2.bf16.msra.mxu0 0
      %1931 = vmatprep.subr.bf16.mxu0 0
      %1932 = vmatpush2.bf16.msra.mxu0 0
      %1933 = vmatprep.subr.bf16.mxu0 0
      %1934 = vmatpush2.bf16.msra.mxu0 0
      %1935 = vmatprep.mubr.bf16.mxu0 0
      %1936 = vmatmul.mubr.bf16.gmra.mxu0 %v1823
      %v1937 = vpop.f32.mrf.mxu0
      %v1938 = vadd.f32 0.0, %v1937
      %v1939 = vpop.f32.mrf.mxu0
      %v1940 = vpop.f32.mrf.mxu0
      %v1941 = vadd.f32 0.0, %v1940
      %v1942 = vpop.f32.mrf.mxu0
      %1943 = vmatprep.mubr.bf16.mxu0 0
      %1944 = vmatmul.mubr.bf16.gmra.mxu0 %v1824
      %v1945 = vpop.f32.mrf.mxu0
      %v1946 = vadd.f32 0.0, %v1945
      %v1947 = vpop.f32.mrf.mxu0
      %v1948 = vpop.f32.mrf.mxu0
      %v1949 = vadd.f32 0.0, %v1948
      %v1950 = vpop.f32.mrf.mxu0
      %1951 = vmatprep.mubr.bf16.mxu0 0
      %1952 = vmatmul.mubr.bf16.gmra.mxu0 %v1825
      %v1953 = vpop.f32.mrf.mxu0
      %v1954 = vadd.f32 0.0, %v1953
      %v1955 = vpop.f32.mrf.mxu0
      %v1956 = vpop.f32.mrf.mxu0
      %v1957 = vadd.f32 0.0, %v1956
      %v1958 = vpop.f32.mrf.mxu0
      %1959 = vmatprep.mubr.bf16.mxu0 0
      %1960 = vmatmul.mubr.bf16.gmra.mxu0 %v1826
      %v1961 = vpop.f32.mrf.mxu0
      %v1962 = vadd.f32 0.0, %v1961
      %v1963 = vpop.f32.mrf.mxu0
      %v1964 = vpop.f32.mrf.mxu0
      %v1965 = vadd.f32 0.0, %v1964
      %v1966 = vpop.f32.mrf.mxu0
      %1967 = vmatprep.mubr.bf16.mxu0 0
      %1968 = vmatmul.mubr.bf16.gmra.mxu0 %v1827
      %v1969 = vpop.f32.mrf.mxu0
      %v1970 = vadd.f32 0.0, %v1969
      %v1971 = vpop.f32.mrf.mxu0
      %v1972 = vpop.f32.mrf.mxu0
      %v1973 = vadd.f32 0.0, %v1972
      %v1974 = vpop.f32.mrf.mxu0
      %1975 = vmatprep.mubr.bf16.mxu0 0
      %1976 = vmatmul.mubr.bf16.gmra.mxu0 %v1828
      %v1977 = vpop.f32.mrf.mxu0
      %v1978 = vadd.f32 0.0, %v1977
      %v1979 = vpop.f32.mrf.mxu0
      %v1980 = vpop.f32.mrf.mxu0
      %v1981 = vadd.f32 0.0, %v1980
      %v1982 = vpop.f32.mrf.mxu0
      %1983 = vmatprep.mubr.bf16.mxu0 0
      %1984 = vmatmul.mubr.bf16.gmra.mxu0 %v1829
      %v1985 = vpop.f32.mrf.mxu0
      %v1986 = vadd.f32 0.0, %v1985
      %v1987 = vpop.f32.mrf.mxu0
      %v1988 = vpop.f32.mrf.mxu0
      %v1989 = vadd.f32 0.0, %v1988
      %v1990 = vpop.f32.mrf.mxu0
      %1991 = vmatprep.mubr.bf16.mxu0 0
      %1992 = vmatmul.mubr.bf16.gmra.mxu0 %v1830
      %v1993 = vpop.f32.mrf.mxu0
      %v1994 = vadd.f32 0.0, %v1993
      %v1995 = vpop.f32.mrf.mxu0
      %v1996 = vpop.f32.mrf.mxu0
      %v1997 = vadd.f32 0.0, %v1996
      %v1998 = vpop.f32.mrf.mxu0
      %1999 = vmatprep.mubr.bf16.mxu0 0
      %2000 = vmatmul.mubr.bf16.gmra.mxu0 %v1831
      %v2001 = vpop.f32.mrf.mxu0
      %v2002 = vadd.f32 0.0, %v2001
      %v2003 = vpop.f32.mrf.mxu0
      %v2004 = vpop.f32.mrf.mxu0
      %v2005 = vadd.f32 0.0, %v2004
      %v2006 = vpop.f32.mrf.mxu0
      %2007 = vmatprep.mubr.bf16.mxu0 0
      %2008 = vmatmul.mubr.bf16.gmra.mxu0 %v1832
      %v2009 = vpop.f32.mrf.mxu0
      %v2010 = vadd.f32 0.0, %v2009
      %v2011 = vpop.f32.mrf.mxu0
      %v2012 = vpop.f32.mrf.mxu0
      %v2013 = vadd.f32 0.0, %v2012
      %v2014 = vpop.f32.mrf.mxu0
      %2015 = vmatprep.mubr.bf16.mxu0 0
      %2016 = vmatmul.mubr.bf16.gmra.mxu0 %v1833
      %v2017 = vpop.f32.mrf.mxu0
      %v2018 = vadd.f32 0.0, %v2017
      %v2019 = vpop.f32.mrf.mxu0
      %v2020 = vpop.f32.mrf.mxu0
      %v2021 = vadd.f32 0.0, %v2020
      %v2022 = vpop.f32.mrf.mxu0
      %2023 = vmatprep.mubr.bf16.mxu0 0
      %2024 = vmatmul.mubr.bf16.gmra.mxu0 %v1834
      %v2025 = vpop.f32.mrf.mxu0
      %v2026 = vadd.f32 0.0, %v2025
      %v2027 = vpop.f32.mrf.mxu0
      %v2028 = vpop.f32.mrf.mxu0
      %v2029 = vadd.f32 0.0, %v2028
      %v2030 = vpop.f32.mrf.mxu0
      %2031 = vmatprep.mubr.bf16.mxu0 0
      %2032 = vmatmul.mubr.bf16.gmra.mxu0 %v1835
      %v2033 = vpop.f32.mrf.mxu0
      %v2034 = vadd.f32 0.0, %v2033
      %v2035 = vpop.f32.mrf.mxu0
      %v2036 = vpop.f32.mrf.mxu0
      %v2037 = vadd.f32 0.0, %v2036
      %v2038 = vpop.f32.mrf.mxu0
      %2039 = vmatprep.mubr.bf16.mxu0 0
      %2040 = vmatmul.mubr.bf16.gmra.mxu0 %v1836
      %v2041 = vpop.f32.mrf.mxu0
      %v2042 = vadd.f32 0.0, %v2041
      %v2043 = vpop.f32.mrf.mxu0
      %v2044 = vpop.f32.mrf.mxu0
      %v2045 = vadd.f32 0.0, %v2044
      %v2046 = vpop.f32.mrf.mxu0
      %2047 = vmatprep.mubr.bf16.mxu0 0
      %2048 = vmatmul.mubr.bf16.gmra.mxu0 %v1837
      %v2049 = vpop.f32.mrf.mxu0
      %v2050 = vadd.f32 0.0, %v2049
      %v2051 = vpop.f32.mrf.mxu0
      %v2052 = vpop.f32.mrf.mxu0
      %v2053 = vadd.f32 0.0, %v2052
      %v2054 = vpop.f32.mrf.mxu0
      %2055 = vmatprep.mubr.bf16.mxu0 0
      %2056 = vmatmul.mubr.bf16.gmra.mxu0 %v1838
      %v2057 = vpop.f32.mrf.mxu0
      %v2058 = vadd.f32 0.0, %v2057
      %v2059 = vpop.f32.mrf.mxu0
      %v2060 = vpop.f32.mrf.mxu0
      %v2061 = vadd.f32 0.0, %v2060
      %v2062 = vpop.f32.mrf.mxu0
      %2063 = vdwg.mxu0
      %v2096 = vunpack.c.l.b16 %v1663
      %v2097 = vunpack.c.l.b16 %v1664
      %v2098 = vunpack.c.l.b16 %v1665
      %v2099 = vunpack.c.l.b16 %v1666
      %v2100 = vunpack.c.l.b16 %v1667
      %v2101 = vunpack.c.l.b16 %v1668
      %v2102 = vunpack.c.l.b16 %v1669
      %v2103 = vunpack.c.l.b16 %v1670
      %v2104 = vunpack.c.l.b16 %v1671
      %v2105 = vunpack.c.l.b16 %v1672
      %v2106 = vunpack.c.l.b16 %v1673
      %v2107 = vunpack.c.l.b16 %v1674
      %v2108 = vunpack.c.l.b16 %v1675
      %v2109 = vunpack.c.l.b16 %v1676
      %v2110 = vunpack.c.l.b16 %v1677
      %v2111 = vunpack.c.l.b16 %v1678
      %v2112 = vunpack.c.l.b16 %v1679
      %v2113 = vunpack.c.l.b16 %v1680
      %v2114 = vunpack.c.l.b16 %v1681
      %v2115 = vunpack.c.l.b16 %v1682
      %v2116 = vunpack.c.l.b16 %v1683
      %v2117 = vunpack.c.l.b16 %v1684
      %v2118 = vunpack.c.l.b16 %v1685
      %v2119 = vunpack.c.l.b16 %v1686
      %v2120 = vunpack.c.l.b16 %v1687
      %v2121 = vunpack.c.l.b16 %v1688
      %v2122 = vunpack.c.l.b16 %v1689
      %v2123 = vunpack.c.l.b16 %v1690
      %v2124 = vunpack.c.l.b16 %v1691
      %v2125 = vunpack.c.l.b16 %v1692
      %v2126 = vunpack.c.l.b16 %v1693
      %v2127 = vunpack.c.l.b16 %v1694
      %v2128 = vpack.c.b16 %v2097, %v2096
      %v2129 = vpack.c.b16 %v2099, %v2098
      %v2130 = vpack.c.b16 %v2101, %v2100
      %v2131 = vpack.c.b16 %v2103, %v2102
      %v2132 = vpack.c.b16 %v2105, %v2104
      %v2133 = vpack.c.b16 %v2107, %v2106
      %v2134 = vpack.c.b16 %v2109, %v2108
      %v2135 = vpack.c.b16 %v2111, %v2110
      %v2136 = vpack.c.b16 %v2113, %v2112
      %v2137 = vpack.c.b16 %v2115, %v2114
      %v2138 = vpack.c.b16 %v2117, %v2116
      %v2139 = vpack.c.b16 %v2119, %v2118
      %v2140 = vpack.c.b16 %v2121, %v2120
      %v2141 = vpack.c.b16 %v2123, %v2122
      %v2142 = vpack.c.b16 %v2125, %v2124
      %v2143 = vpack.c.b16 %v2127, %v2126
      %v2176 = vunpack.c.l.b16 %v1695
      %v2177 = vunpack.c.l.b16 %v1696
      %v2178 = vunpack.c.l.b16 %v1697
      %v2179 = vunpack.c.l.b16 %v1698
      %v2180 = vunpack.c.l.b16 %v1699
      %v2181 = vunpack.c.l.b16 %v1700
      %v2182 = vunpack.c.l.b16 %v1701
      %v2183 = vunpack.c.l.b16 %v1702
      %v2184 = vunpack.c.l.b16 %v1703
      %v2185 = vunpack.c.l.b16 %v1704
      %v2186 = vunpack.c.l.b16 %v1705
      %v2187 = vunpack.c.l.b16 %v1706
      %v2188 = vunpack.c.l.b16 %v1707
      %v2189 = vunpack.c.l.b16 %v1708
      %v2190 = vunpack.c.l.b16 %v1709
      %v2191 = vunpack.c.l.b16 %v1710
      %v2192 = vpack.c.b16 %v2177, %v2176
      %v2193 = vpack.c.b16 %v2179, %v2178
      %v2194 = vpack.c.b16 %v2181, %v2180
      %v2195 = vpack.c.b16 %v2183, %v2182
      %v2196 = vpack.c.b16 %v2185, %v2184
      %v2197 = vpack.c.b16 %v2187, %v2186
      %v2198 = vpack.c.b16 %v2189, %v2188
      %v2199 = vpack.c.b16 %v2191, %v2190
      %2208 = vmatprep.subr.bf16.mxu0 0
      %2209 = vmatpush1.bf16.msra.mxu0 %v2199
      %2210 = vmatprep.subr.bf16.mxu0 0
      %2211 = vmatpush1.bf16.msra.mxu0 %v2198
      %2212 = vmatprep.subr.bf16.mxu0 0
      %2213 = vmatpush1.bf16.msra.mxu0 %v2197
      %2214 = vmatprep.subr.bf16.mxu0 0
      %2215 = vmatpush1.bf16.msra.mxu0 %v2196
      %2216 = vmatprep.subr.bf16.mxu0 0
      %2217 = vmatpush1.bf16.msra.mxu0 %v2195
      %2218 = vmatprep.subr.bf16.mxu0 0
      %2219 = vmatpush1.bf16.msra.mxu0 %v2194
      %2220 = vmatprep.subr.bf16.mxu0 0
      %2221 = vmatpush1.bf16.msra.mxu0 %v2193
      %2222 = vmatprep.subr.bf16.mxu0 0
      %2223 = vmatpush1.bf16.msra.mxu0 %v2192
      %2224 = vmatprep.subr.bf16.mxu0 0
      %2225 = vmatpush2.bf16.msra.mxu0 0
      %2226 = vmatprep.subr.bf16.mxu0 0
      %2227 = vmatpush2.bf16.msra.mxu0 0
      %2228 = vmatprep.subr.bf16.mxu0 0
      %2229 = vmatpush2.bf16.msra.mxu0 0
      %2230 = vmatprep.subr.bf16.mxu0 0
      %2231 = vmatpush2.bf16.msra.mxu0 0
      %2232 = vmatprep.subr.bf16.mxu0 0
      %2233 = vmatpush2.bf16.msra.mxu0 0
      %2234 = vmatprep.subr.bf16.mxu0 0
      %2235 = vmatpush2.bf16.msra.mxu0 0
      %2236 = vmatprep.subr.bf16.mxu0 0
      %2237 = vmatpush2.bf16.msra.mxu0 0
      %2238 = vmatprep.subr.bf16.mxu0 0
      %2239 = vmatpush2.bf16.msra.mxu0 0
      %2240 = vmatprep.mubr.bf16.mxu0 0
      %2241 = vmatmul.mubr.bf16.gmra.mxu0 %v2128
      %v2242 = vpop.f32.mrf.mxu0
      %v2243 = vadd.f32 %v1938, %v2242
      %v2244 = vpop.f32.mrf.mxu0
      %v2245 = vpop.f32.mrf.mxu0
      %v2246 = vadd.f32 %v1941, %v2245
      %v2247 = vpop.f32.mrf.mxu0
      %2248 = vmatprep.mubr.bf16.mxu0 0
      %2249 = vmatmul.mubr.bf16.gmra.mxu0 %v2129
      %v2250 = vpop.f32.mrf.mxu0
      %v2251 = vadd.f32 %v1946, %v2250
      %v2252 = vpop.f32.mrf.mxu0
      %v2253 = vpop.f32.mrf.mxu0
      %v2254 = vadd.f32 %v1949, %v2253
      %v2255 = vpop.f32.mrf.mxu0
      %2256 = vmatprep.mubr.bf16.mxu0 0
      %2257 = vmatmul.mubr.bf16.gmra.mxu0 %v2130
      %v2258 = vpop.f32.mrf.mxu0
      %v2259 = vadd.f32 %v1954, %v2258
      %v2260 = vpop.f32.mrf.mxu0
      %v2261 = vpop.f32.mrf.mxu0
      %v2262 = vadd.f32 %v1957, %v2261
      %v2263 = vpop.f32.mrf.mxu0
      %2264 = vmatprep.mubr.bf16.mxu0 0
      %2265 = vmatmul.mubr.bf16.gmra.mxu0 %v2131
      %v2266 = vpop.f32.mrf.mxu0
      %v2267 = vadd.f32 %v1962, %v2266
      %v2268 = vpop.f32.mrf.mxu0
      %v2269 = vpop.f32.mrf.mxu0
      %v2270 = vadd.f32 %v1965, %v2269
      %v2271 = vpop.f32.mrf.mxu0
      %2272 = vmatprep.mubr.bf16.mxu0 0
      %2273 = vmatmul.mubr.bf16.gmra.mxu0 %v2132
      %v2274 = vpop.f32.mrf.mxu0
      %v2275 = vadd.f32 %v1970, %v2274
      %v2276 = vpop.f32.mrf.mxu0
      %v2277 = vpop.f32.mrf.mxu0
      %v2278 = vadd.f32 %v1973, %v2277
      %v2279 = vpop.f32.mrf.mxu0
      %2280 = vmatprep.mubr.bf16.mxu0 0
      %2281 = vmatmul.mubr.bf16.gmra.mxu0 %v2133
      %v2282 = vpop.f32.mrf.mxu0
      %v2283 = vadd.f32 %v1978, %v2282
      %v2284 = vpop.f32.mrf.mxu0
      %v2285 = vpop.f32.mrf.mxu0
      %v2286 = vadd.f32 %v1981, %v2285
      %v2287 = vpop.f32.mrf.mxu0
      %2288 = vmatprep.mubr.bf16.mxu0 0
      %2289 = vmatmul.mubr.bf16.gmra.mxu0 %v2134
      %v2290 = vpop.f32.mrf.mxu0
      %v2291 = vadd.f32 %v1986, %v2290
      %v2292 = vpop.f32.mrf.mxu0
      %v2293 = vpop.f32.mrf.mxu0
      %v2294 = vadd.f32 %v1989, %v2293
      %v2295 = vpop.f32.mrf.mxu0
      %2296 = vmatprep.mubr.bf16.mxu0 0
      %2297 = vmatmul.mubr.bf16.gmra.mxu0 %v2135
      %v2298 = vpop.f32.mrf.mxu0
      %v2299 = vadd.f32 %v1994, %v2298
      %v2300 = vpop.f32.mrf.mxu0
      %v2301 = vpop.f32.mrf.mxu0
      %v2302 = vadd.f32 %v1997, %v2301
      %v2303 = vpop.f32.mrf.mxu0
      %2304 = vmatprep.mubr.bf16.mxu0 0
      %2305 = vmatmul.mubr.bf16.gmra.mxu0 %v2136
      %v2306 = vpop.f32.mrf.mxu0
      %v2307 = vadd.f32 %v2002, %v2306
      %v2308 = vpop.f32.mrf.mxu0
      %v2309 = vpop.f32.mrf.mxu0
      %v2310 = vadd.f32 %v2005, %v2309
      %v2311 = vpop.f32.mrf.mxu0
      %2312 = vmatprep.mubr.bf16.mxu0 0
      %2313 = vmatmul.mubr.bf16.gmra.mxu0 %v2137
      %v2314 = vpop.f32.mrf.mxu0
      %v2315 = vadd.f32 %v2010, %v2314
      %v2316 = vpop.f32.mrf.mxu0
      %v2317 = vpop.f32.mrf.mxu0
      %v2318 = vadd.f32 %v2013, %v2317
      %v2319 = vpop.f32.mrf.mxu0
      %2320 = vmatprep.mubr.bf16.mxu0 0
      %2321 = vmatmul.mubr.bf16.gmra.mxu0 %v2138
      %v2322 = vpop.f32.mrf.mxu0
      %v2323 = vadd.f32 %v2018, %v2322
      %v2324 = vpop.f32.mrf.mxu0
      %v2325 = vpop.f32.mrf.mxu0
      %v2326 = vadd.f32 %v2021, %v2325
      %v2327 = vpop.f32.mrf.mxu0
      %2328 = vmatprep.mubr.bf16.mxu0 0
      %2329 = vmatmul.mubr.bf16.gmra.mxu0 %v2139
      %v2330 = vpop.f32.mrf.mxu0
      %v2331 = vadd.f32 %v2026, %v2330
      %v2332 = vpop.f32.mrf.mxu0
      %v2333 = vpop.f32.mrf.mxu0
      %v2334 = vadd.f32 %v2029, %v2333
      %v2335 = vpop.f32.mrf.mxu0
      %2336 = vmatprep.mubr.bf16.mxu0 0
      %2337 = vmatmul.mubr.bf16.gmra.mxu0 %v2140
      %v2338 = vpop.f32.mrf.mxu0
      %v2339 = vadd.f32 %v2034, %v2338
      %v2340 = vpop.f32.mrf.mxu0
      %v2341 = vpop.f32.mrf.mxu0
      %v2342 = vadd.f32 %v2037, %v2341
      %v2343 = vpop.f32.mrf.mxu0
      %2344 = vmatprep.mubr.bf16.mxu0 0
      %2345 = vmatmul.mubr.bf16.gmra.mxu0 %v2141
      %v2346 = vpop.f32.mrf.mxu0
      %v2347 = vadd.f32 %v2042, %v2346
      %v2348 = vpop.f32.mrf.mxu0
      %v2349 = vpop.f32.mrf.mxu0
      %v2350 = vadd.f32 %v2045, %v2349
      %v2351 = vpop.f32.mrf.mxu0
      %2352 = vmatprep.mubr.bf16.mxu0 0
      %2353 = vmatmul.mubr.bf16.gmra.mxu0 %v2142
      %v2354 = vpop.f32.mrf.mxu0
      %v2355 = vadd.f32 %v2050, %v2354
      %v2356 = vpop.f32.mrf.mxu0
      %v2357 = vpop.f32.mrf.mxu0
      %v2358 = vadd.f32 %v2053, %v2357
      %v2359 = vpop.f32.mrf.mxu0
      %2360 = vmatprep.mubr.bf16.mxu0 0
      %2361 = vmatmul.mubr.bf16.gmra.mxu0 %v2143
      %v2362 = vpop.f32.mrf.mxu0
      %v2363 = vadd.f32 %v2058, %v2362
      %v2364 = vpop.f32.mrf.mxu0
      %v2365 = vpop.f32.mrf.mxu0
      %v2366 = vadd.f32 %v2061, %v2365
      %v2367 = vpop.f32.mrf.mxu0
      %2368 = vdwg.mxu0
      %v2369 = vld [vmem:[%s807] sm:$0xf]
      %v2370 = vld [vmem:[%s807 + $0x4] sm:$0xf]
      %v2371 = vld [vmem:[%s807 + $0x8] sm:$0xf]
      %v2372 = vld [vmem:[%s807 + $0xc] sm:$0xf]
      %v2373 = vld [vmem:[%s807 + $0x10] sm:$0xf]
      %v2374 = vld [vmem:[%s807 + $0x14] sm:$0xf]
      %v2375 = vld [vmem:[%s807 + $0x18] sm:$0xf]
      %v2376 = vld [vmem:[%s807 + $0x1c] sm:$0xf]
      %v2377 = vld [vmem:[%s807 + $0x20] sm:$0xf]
      %v2378 = vld [vmem:[%s807 + $0x24] sm:$0xf]
      %v2379 = vld [vmem:[%s807 + $0x28] sm:$0xf]
      %v2380 = vld [vmem:[%s807 + $0x2c] sm:$0xf]
      %v2381 = vld [vmem:[%s807 + $0x30] sm:$0xf]
      %v2382 = vld [vmem:[%s807 + $0x34] sm:$0xf]
      %v2383 = vld [vmem:[%s807 + $0x38] sm:$0xf]
      %v2384 = vld [vmem:[%s807 + $0x3c] sm:$0xf]
      %v2385 = vld [vmem:[%s807 + $0x40] sm:$0xf]
      %v2386 = vld [vmem:[%s807 + $0x44] sm:$0xf]
      %v2387 = vld [vmem:[%s807 + $0x48] sm:$0xf]
      %v2388 = vld [vmem:[%s807 + $0x4c] sm:$0xf]
      %v2389 = vld [vmem:[%s807 + $0x50] sm:$0xf]
      %v2390 = vld [vmem:[%s807 + $0x54] sm:$0xf]
      %v2391 = vld [vmem:[%s807 + $0x58] sm:$0xf]
      %v2392 = vld [vmem:[%s807 + $0x5c] sm:$0xf]
      %v2393 = vld [vmem:[%s807 + $0x60] sm:$0xf]
      %v2394 = vld [vmem:[%s807 + $0x64] sm:$0xf]
      %v2395 = vld [vmem:[%s807 + $0x68] sm:$0xf]
      %v2396 = vld [vmem:[%s807 + $0x6c] sm:$0xf]
      %v2397 = vld [vmem:[%s807 + $0x70] sm:$0xf]
      %v2398 = vld [vmem:[%s807 + $0x74] sm:$0xf]
      %v2399 = vld [vmem:[%s807 + $0x78] sm:$0xf]
      %v2400 = vld [vmem:[%s807 + $0x7c] sm:$0xf]
      %v2401 = vld [vmem:[%s2 + $0x80] sm:$0xf]
      %v2402 = vld [vmem:[%s2 + $0x84] sm:$0xf]
      %v2403 = vld [vmem:[%s2 + $0x88] sm:$0xf]
      %v2404 = vld [vmem:[%s2 + $0x8c] sm:$0xf]
      %v2405 = vld [vmem:[%s2 + $0x90] sm:$0xf]
      %v2406 = vld [vmem:[%s2 + $0x94] sm:$0xf]
      %v2407 = vld [vmem:[%s2 + $0x98] sm:$0xf]
      %v2408 = vld [vmem:[%s2 + $0x9c] sm:$0xf]
      %v2409 = vld [vmem:[%s2 + $0xa0] sm:$0xf]
      %v2410 = vld [vmem:[%s2 + $0xa4] sm:$0xf]
      %v2411 = vld [vmem:[%s2 + $0xa8] sm:$0xf]
      %v2412 = vld [vmem:[%s2 + $0xac] sm:$0xf]
      %v2413 = vld [vmem:[%s2 + $0xb0] sm:$0xf]
      %v2414 = vld [vmem:[%s2 + $0xb4] sm:$0xf]
      %v2415 = vld [vmem:[%s2 + $0xb8] sm:$0xf]
      %v2416 = vld [vmem:[%s2 + $0xbc] sm:$0xf]
      %v2449 = vunpack.c.l.b16 %v2369
      %v2450 = vunpack.c.l.b16 %v2370
      %v2451 = vunpack.c.l.b16 %v2371
      %v2452 = vunpack.c.l.b16 %v2372
      %v2453 = vunpack.c.l.b16 %v2373
      %v2454 = vunpack.c.l.b16 %v2374
      %v2455 = vunpack.c.l.b16 %v2375
      %v2456 = vunpack.c.l.b16 %v2376
      %v2457 = vunpack.c.l.b16 %v2377
      %v2458 = vunpack.c.l.b16 %v2378
      %v2459 = vunpack.c.l.b16 %v2379
      %v2460 = vunpack.c.l.b16 %v2380
      %v2461 = vunpack.c.l.b16 %v2381
      %v2462 = vunpack.c.l.b16 %v2382
      %v2463 = vunpack.c.l.b16 %v2383
      %v2464 = vunpack.c.l.b16 %v2384
      %v2465 = vunpack.c.l.b16 %v2385
      %v2466 = vunpack.c.l.b16 %v2386
      %v2467 = vunpack.c.l.b16 %v2387
      %v2468 = vunpack.c.l.b16 %v2388
      %v2469 = vunpack.c.l.b16 %v2389
      %v2470 = vunpack.c.l.b16 %v2390
      %v2471 = vunpack.c.l.b16 %v2391
      %v2472 = vunpack.c.l.b16 %v2392
      %v2473 = vunpack.c.l.b16 %v2393
      %v2474 = vunpack.c.l.b16 %v2394
      %v2475 = vunpack.c.l.b16 %v2395
      %v2476 = vunpack.c.l.b16 %v2396
      %v2477 = vunpack.c.l.b16 %v2397
      %v2478 = vunpack.c.l.b16 %v2398
      %v2479 = vunpack.c.l.b16 %v2399
      %v2480 = vunpack.c.l.b16 %v2400
      %v2481 = vpack.c.b16 %v2450, %v2449
      %v2482 = vpack.c.b16 %v2452, %v2451
      %v2483 = vpack.c.b16 %v2454, %v2453
      %v2484 = vpack.c.b16 %v2456, %v2455
      %v2485 = vpack.c.b16 %v2458, %v2457
      %v2486 = vpack.c.b16 %v2460, %v2459
      %v2487 = vpack.c.b16 %v2462, %v2461
      %v2488 = vpack.c.b16 %v2464, %v2463
      %v2489 = vpack.c.b16 %v2466, %v2465
      %v2490 = vpack.c.b16 %v2468, %v2467
      %v2491 = vpack.c.b16 %v2470, %v2469
      %v2492 = vpack.c.b16 %v2472, %v2471
      %v2493 = vpack.c.b16 %v2474, %v2473
      %v2494 = vpack.c.b16 %v2476, %v2475
      %v2495 = vpack.c.b16 %v2478, %v2477
      %v2496 = vpack.c.b16 %v2480, %v2479
      %v2529 = vunpack.c.l.b16 %v2401
      %v2530 = vunpack.c.l.b16 %v2402
      %v2531 = vunpack.c.l.b16 %v2403
      %v2532 = vunpack.c.l.b16 %v2404
      %v2533 = vunpack.c.l.b16 %v2405
      %v2534 = vunpack.c.l.b16 %v2406
      %v2535 = vunpack.c.l.b16 %v2407
      %v2536 = vunpack.c.l.b16 %v2408
      %v2537 = vunpack.c.l.b16 %v2409
      %v2538 = vunpack.c.l.b16 %v2410
      %v2539 = vunpack.c.l.b16 %v2411
      %v2540 = vunpack.c.l.b16 %v2412
      %v2541 = vunpack.c.l.b16 %v2413
      %v2542 = vunpack.c.l.b16 %v2414
      %v2543 = vunpack.c.l.b16 %v2415
      %v2544 = vunpack.c.l.b16 %v2416
      %v2545 = vpack.c.b16 %v2530, %v2529
      %v2546 = vpack.c.b16 %v2532, %v2531
      %v2547 = vpack.c.b16 %v2534, %v2533
      %v2548 = vpack.c.b16 %v2536, %v2535
      %v2549 = vpack.c.b16 %v2538, %v2537
      %v2550 = vpack.c.b16 %v2540, %v2539
      %v2551 = vpack.c.b16 %v2542, %v2541
      %v2552 = vpack.c.b16 %v2544, %v2543
      %2561 = vmatprep.subr.bf16.mxu0 0
      %2562 = vmatpush1.bf16.msra.mxu0 %v2552
      %2563 = vmatprep.subr.bf16.mxu0 0
      %2564 = vmatpush1.bf16.msra.mxu0 %v2551
      %2565 = vmatprep.subr.bf16.mxu0 0
      %2566 = vmatpush1.bf16.msra.mxu0 %v2550
      %2567 = vmatprep.subr.bf16.mxu0 0
      %2568 = vmatpush1.bf16.msra.mxu0 %v2549
      %2569 = vmatprep.subr.bf16.mxu0 0
      %2570 = vmatpush1.bf16.msra.mxu0 %v2548
      %2571 = vmatprep.subr.bf16.mxu0 0
      %2572 = vmatpush1.bf16.msra.mxu0 %v2547
      %2573 = vmatprep.subr.bf16.mxu0 0
      %2574 = vmatpush1.bf16.msra.mxu0 %v2546
      %2575 = vmatprep.subr.bf16.mxu0 0
      %2576 = vmatpush1.bf16.msra.mxu0 %v2545
      %2577 = vmatprep.subr.bf16.mxu0 0
      %2578 = vmatpush2.bf16.msra.mxu0 0
      %2579 = vmatprep.subr.bf16.mxu0 0
      %2580 = vmatpush2.bf16.msra.mxu0 0
      %2581 = vmatprep.subr.bf16.mxu0 0
      %2582 = vmatpush2.bf16.msra.mxu0 0
      %2583 = vmatprep.subr.bf16.mxu0 0
      %2584 = vmatpush2.bf16.msra.mxu0 0
      %2585 = vmatprep.subr.bf16.mxu0 0
      %2586 = vmatpush2.bf16.msra.mxu0 0
      %2587 = vmatprep.subr.bf16.mxu0 0
      %2588 = vmatpush2.bf16.msra.mxu0 0
      %2589 = vmatprep.subr.bf16.mxu0 0
      %2590 = vmatpush2.bf16.msra.mxu0 0
      %2591 = vmatprep.subr.bf16.mxu0 0
      %2592 = vmatpush2.bf16.msra.mxu0 0
      %2593 = vmatprep.mubr.bf16.mxu0 0
      %2594 = vmatmul.mubr.bf16.gmra.mxu0 %v2481
      %v2595 = vpop.f32.mrf.mxu0
      %v2596 = vadd.f32 0.0, %v2595
      %v2597 = vpop.f32.mrf.mxu0
      %v2598 = vpop.f32.mrf.mxu0
      %v2599 = vadd.f32 0.0, %v2598
      %v2600 = vpop.f32.mrf.mxu0
      %2601 = vmatprep.mubr.bf16.mxu0 0
      %2602 = vmatmul.mubr.bf16.gmra.mxu0 %v2482
      %v2603 = vpop.f32.mrf.mxu0
      %v2604 = vadd.f32 0.0, %v2603
      %v2605 = vpop.f32.mrf.mxu0
      %v2606 = vpop.f32.mrf.mxu0
      %v2607 = vadd.f32 0.0, %v2606
      %v2608 = vpop.f32.mrf.mxu0
      %2609 = vmatprep.mubr.bf16.mxu0 0
      %2610 = vmatmul.mubr.bf16.gmra.mxu0 %v2483
      %v2611 = vpop.f32.mrf.mxu0
      %v2612 = vadd.f32 0.0, %v2611
      %v2613 = vpop.f32.mrf.mxu0
      %v2614 = vpop.f32.mrf.mxu0
      %v2615 = vadd.f32 0.0, %v2614
      %v2616 = vpop.f32.mrf.mxu0
      %2617 = vmatprep.mubr.bf16.mxu0 0
      %2618 = vmatmul.mubr.bf16.gmra.mxu0 %v2484
      %v2619 = vpop.f32.mrf.mxu0
      %v2620 = vadd.f32 0.0, %v2619
      %v2621 = vpop.f32.mrf.mxu0
      %v2622 = vpop.f32.mrf.mxu0
      %v2623 = vadd.f32 0.0, %v2622
      %v2624 = vpop.f32.mrf.mxu0
      %2625 = vmatprep.mubr.bf16.mxu0 0
      %2626 = vmatmul.mubr.bf16.gmra.mxu0 %v2485
      %v2627 = vpop.f32.mrf.mxu0
      %v2628 = vadd.f32 0.0, %v2627
      %v2629 = vpop.f32.mrf.mxu0
      %v2630 = vpop.f32.mrf.mxu0
      %v2631 = vadd.f32 0.0, %v2630
      %v2632 = vpop.f32.mrf.mxu0
      %2633 = vmatprep.mubr.bf16.mxu0 0
      %2634 = vmatmul.mubr.bf16.gmra.mxu0 %v2486
      %v2635 = vpop.f32.mrf.mxu0
      %v2636 = vadd.f32 0.0, %v2635
      %v2637 = vpop.f32.mrf.mxu0
      %v2638 = vpop.f32.mrf.mxu0
      %v2639 = vadd.f32 0.0, %v2638
      %v2640 = vpop.f32.mrf.mxu0
      %2641 = vmatprep.mubr.bf16.mxu0 0
      %2642 = vmatmul.mubr.bf16.gmra.mxu0 %v2487
      %v2643 = vpop.f32.mrf.mxu0
      %v2644 = vadd.f32 0.0, %v2643
      %v2645 = vpop.f32.mrf.mxu0
      %v2646 = vpop.f32.mrf.mxu0
      %v2647 = vadd.f32 0.0, %v2646
      %v2648 = vpop.f32.mrf.mxu0
      %2649 = vmatprep.mubr.bf16.mxu0 0
      %2650 = vmatmul.mubr.bf16.gmra.mxu0 %v2488
      %v2651 = vpop.f32.mrf.mxu0
      %v2652 = vadd.f32 0.0, %v2651
      %v2653 = vpop.f32.mrf.mxu0
      %v2654 = vpop.f32.mrf.mxu0
      %v2655 = vadd.f32 0.0, %v2654
      %v2656 = vpop.f32.mrf.mxu0
      %2657 = vmatprep.mubr.bf16.mxu0 0
      %2658 = vmatmul.mubr.bf16.gmra.mxu0 %v2489
      %v2659 = vpop.f32.mrf.mxu0
      %v2660 = vadd.f32 0.0, %v2659
      %v2661 = vpop.f32.mrf.mxu0
      %v2662 = vpop.f32.mrf.mxu0
      %v2663 = vadd.f32 0.0, %v2662
      %v2664 = vpop.f32.mrf.mxu0
      %2665 = vmatprep.mubr.bf16.mxu0 0
      %2666 = vmatmul.mubr.bf16.gmra.mxu0 %v2490
      %v2667 = vpop.f32.mrf.mxu0
      %v2668 = vadd.f32 0.0, %v2667
      %v2669 = vpop.f32.mrf.mxu0
      %v2670 = vpop.f32.mrf.mxu0
      %v2671 = vadd.f32 0.0, %v2670
      %v2672 = vpop.f32.mrf.mxu0
      %2673 = vmatprep.mubr.bf16.mxu0 0
      %2674 = vmatmul.mubr.bf16.gmra.mxu0 %v2491
      %v2675 = vpop.f32.mrf.mxu0
      %v2676 = vadd.f32 0.0, %v2675
      %v2677 = vpop.f32.mrf.mxu0
      %v2678 = vpop.f32.mrf.mxu0
      %v2679 = vadd.f32 0.0, %v2678
      %v2680 = vpop.f32.mrf.mxu0
      %2681 = vmatprep.mubr.bf16.mxu0 0
      %2682 = vmatmul.mubr.bf16.gmra.mxu0 %v2492
      %v2683 = vpop.f32.mrf.mxu0
      %v2684 = vadd.f32 0.0, %v2683
      %v2685 = vpop.f32.mrf.mxu0
      %v2686 = vpop.f32.mrf.mxu0
      %v2687 = vadd.f32 0.0, %v2686
      %v2688 = vpop.f32.mrf.mxu0
      %2689 = vmatprep.mubr.bf16.mxu0 0
      %2690 = vmatmul.mubr.bf16.gmra.mxu0 %v2493
      %v2691 = vpop.f32.mrf.mxu0
      %v2692 = vadd.f32 0.0, %v2691
      %v2693 = vpop.f32.mrf.mxu0
      %v2694 = vpop.f32.mrf.mxu0
      %v2695 = vadd.f32 0.0, %v2694
      %v2696 = vpop.f32.mrf.mxu0
      %2697 = vmatprep.mubr.bf16.mxu0 0
      %2698 = vmatmul.mubr.bf16.gmra.mxu0 %v2494
      %v2699 = vpop.f32.mrf.mxu0
      %v2700 = vadd.f32 0.0, %v2699
      %v2701 = vpop.f32.mrf.mxu0
      %v2702 = vpop.f32.mrf.mxu0
      %v2703 = vadd.f32 0.0, %v2702
      %v2704 = vpop.f32.mrf.mxu0
      %2705 = vmatprep.mubr.bf16.mxu0 0
      %2706 = vmatmul.mubr.bf16.gmra.mxu0 %v2495
      %v2707 = vpop.f32.mrf.mxu0
      %v2708 = vadd.f32 0.0, %v2707
      %v2709 = vpop.f32.mrf.mxu0
      %v2710 = vpop.f32.mrf.mxu0
      %v2711 = vadd.f32 0.0, %v2710
      %v2712 = vpop.f32.mrf.mxu0
      %2713 = vmatprep.mubr.bf16.mxu0 0
      %2714 = vmatmul.mubr.bf16.gmra.mxu0 %v2496
      %v2715 = vpop.f32.mrf.mxu0
      %v2716 = vadd.f32 0.0, %v2715
      %v2717 = vpop.f32.mrf.mxu0
      %v2718 = vpop.f32.mrf.mxu0
      %v2719 = vadd.f32 0.0, %v2718
      %v2720 = vpop.f32.mrf.mxu0
      %2721 = vdwg.mxu0
      %v2722 = vadd.f32 %v2243, %v2596
      %v2723 = vadd.f32 %v2246, %v2599
      %v2724 = vadd.f32 %v2251, %v2604
      %v2725 = vadd.f32 %v2254, %v2607
      %v2726 = vadd.f32 %v2259, %v2612
      %v2727 = vadd.f32 %v2262, %v2615
      %v2728 = vadd.f32 %v2267, %v2620
      %v2729 = vadd.f32 %v2270, %v2623
      %v2730 = vadd.f32 %v2275, %v2628
      %v2731 = vadd.f32 %v2278, %v2631
      %v2732 = vadd.f32 %v2283, %v2636
      %v2733 = vadd.f32 %v2286, %v2639
      %v2734 = vadd.f32 %v2291, %v2644
      %v2735 = vadd.f32 %v2294, %v2647
      %v2736 = vadd.f32 %v2299, %v2652
      %v2737 = vadd.f32 %v2302, %v2655
      %v2738 = vadd.f32 %v2307, %v2660
      %v2739 = vadd.f32 %v2310, %v2663
      %v2740 = vadd.f32 %v2315, %v2668
      %v2741 = vadd.f32 %v2318, %v2671
      %v2742 = vadd.f32 %v2323, %v2676
      %v2743 = vadd.f32 %v2326, %v2679
      %v2744 = vadd.f32 %v2331, %v2684
      %v2745 = vadd.f32 %v2334, %v2687
      %v2746 = vadd.f32 %v2339, %v2692
      %v2747 = vadd.f32 %v2342, %v2695
      %v2748 = vadd.f32 %v2347, %v2700
      %v2749 = vadd.f32 %v2350, %v2703
      %v2750 = vadd.f32 %v2355, %v2708
      %v2751 = vadd.f32 %v2358, %v2711
      %v2752 = vadd.f32 %v2363, %v2716
      %v2753 = vadd.f32 %v2366, %v2719
      %v2754 = vld [vmem:[%s958] sm:$0xf]
      %v2755 = vld [vmem:[%s958 + $0x4] sm:$0xf]
      %v2756 = vld [vmem:[%s958 + $0x8] sm:$0xf]
      %v2757 = vld [vmem:[%s958 + $0xc] sm:$0xf]
      %v2758 = vld [vmem:[%s958 + $0x10] sm:$0xf]
      %v2759 = vld [vmem:[%s958 + $0x14] sm:$0xf]
      %v2760 = vld [vmem:[%s958 + $0x18] sm:$0xf]
      %v2761 = vld [vmem:[%s958 + $0x1c] sm:$0xf]
      %v2762 = vld [vmem:[%s958 + $0x20] sm:$0xf]
      %v2763 = vld [vmem:[%s958 + $0x24] sm:$0xf]
      %v2764 = vld [vmem:[%s958 + $0x28] sm:$0xf]
      %v2765 = vld [vmem:[%s958 + $0x2c] sm:$0xf]
      %v2766 = vld [vmem:[%s958 + $0x30] sm:$0xf]
      %v2767 = vld [vmem:[%s958 + $0x34] sm:$0xf]
      %v2768 = vld [vmem:[%s958 + $0x38] sm:$0xf]
      %v2769 = vld [vmem:[%s958 + $0x3c] sm:$0xf]
      %v2770 = vld [vmem:[%s958 + $0x40] sm:$0xf]
      %v2771 = vld [vmem:[%s958 + $0x44] sm:$0xf]
      %v2772 = vld [vmem:[%s958 + $0x48] sm:$0xf]
      %v2773 = vld [vmem:[%s958 + $0x4c] sm:$0xf]
      %v2774 = vld [vmem:[%s958 + $0x50] sm:$0xf]
      %v2775 = vld [vmem:[%s958 + $0x54] sm:$0xf]
      %v2776 = vld [vmem:[%s958 + $0x58] sm:$0xf]
      %v2777 = vld [vmem:[%s958 + $0x5c] sm:$0xf]
      %v2778 = vld [vmem:[%s958 + $0x60] sm:$0xf]
      %v2779 = vld [vmem:[%s958 + $0x64] sm:$0xf]
      %v2780 = vld [vmem:[%s958 + $0x68] sm:$0xf]
      %v2781 = vld [vmem:[%s958 + $0x6c] sm:$0xf]
      %v2782 = vld [vmem:[%s958 + $0x70] sm:$0xf]
      %v2783 = vld [vmem:[%s958 + $0x74] sm:$0xf]
      %v2784 = vld [vmem:[%s958 + $0x78] sm:$0xf]
      %v2785 = vld [vmem:[%s958 + $0x7c] sm:$0xf]
      %v2786 = vld [vmem:[%s2 + $0xc0] sm:$0xf]
      %v2787 = vld [vmem:[%s2 + $0xc4] sm:$0xf]
      %v2788 = vld [vmem:[%s2 + $0xc8] sm:$0xf]
      %v2789 = vld [vmem:[%s2 + $0xcc] sm:$0xf]
      %v2790 = vld [vmem:[%s2 + $0xd0] sm:$0xf]
      %v2791 = vld [vmem:[%s2 + $0xd4] sm:$0xf]
      %v2792 = vld [vmem:[%s2 + $0xd8] sm:$0xf]
      %v2793 = vld [vmem:[%s2 + $0xdc] sm:$0xf]
      %v2794 = vld [vmem:[%s2 + $0xe0] sm:$0xf]
      %v2795 = vld [vmem:[%s2 + $0xe4] sm:$0xf]
      %v2796 = vld [vmem:[%s2 + $0xe8] sm:$0xf]
      %v2797 = vld [vmem:[%s2 + $0xec] sm:$0xf]
      %v2798 = vld [vmem:[%s2 + $0xf0] sm:$0xf]
      %v2799 = vld [vmem:[%s2 + $0xf4] sm:$0xf]
      %v2800 = vld [vmem:[%s2 + $0xf8] sm:$0xf]
      %v2801 = vld [vmem:[%s2 + $0xfc] sm:$0xf]
      %v2834 = vunpack.c.l.b16 %v2754
      %v2835 = vunpack.c.l.b16 %v2755
      %v2836 = vunpack.c.l.b16 %v2756
      %v2837 = vunpack.c.l.b16 %v2757
      %v2838 = vunpack.c.l.b16 %v2758
      %v2839 = vunpack.c.l.b16 %v2759
      %v2840 = vunpack.c.l.b16 %v2760
      %v2841 = vunpack.c.l.b16 %v2761
      %v2842 = vunpack.c.l.b16 %v2762
      %v2843 = vunpack.c.l.b16 %v2763
      %v2844 = vunpack.c.l.b16 %v2764
      %v2845 = vunpack.c.l.b16 %v2765
      %v2846 = vunpack.c.l.b16 %v2766
      %v2847 = vunpack.c.l.b16 %v2767
      %v2848 = vunpack.c.l.b16 %v2768
      %v2849 = vunpack.c.l.b16 %v2769
      %v2850 = vunpack.c.l.b16 %v2770
      %v2851 = vunpack.c.l.b16 %v2771
      %v2852 = vunpack.c.l.b16 %v2772
      %v2853 = vunpack.c.l.b16 %v2773
      %v2854 = vunpack.c.l.b16 %v2774
      %v2855 = vunpack.c.l.b16 %v2775
      %v2856 = vunpack.c.l.b16 %v2776
      %v2857 = vunpack.c.l.b16 %v2777
      %v2858 = vunpack.c.l.b16 %v2778
      %v2859 = vunpack.c.l.b16 %v2779
      %v2860 = vunpack.c.l.b16 %v2780
      %v2861 = vunpack.c.l.b16 %v2781
      %v2862 = vunpack.c.l.b16 %v2782
      %v2863 = vunpack.c.l.b16 %v2783
      %v2864 = vunpack.c.l.b16 %v2784
      %v2865 = vunpack.c.l.b16 %v2785
      %v2866 = vpack.c.b16 %v2835, %v2834
      %v2867 = vpack.c.b16 %v2837, %v2836
      %v2868 = vpack.c.b16 %v2839, %v2838
      %v2869 = vpack.c.b16 %v2841, %v2840
      %v2870 = vpack.c.b16 %v2843, %v2842
      %v2871 = vpack.c.b16 %v2845, %v2844
      %v2872 = vpack.c.b16 %v2847, %v2846
      %v2873 = vpack.c.b16 %v2849, %v2848
      %v2874 = vpack.c.b16 %v2851, %v2850
      %v2875 = vpack.c.b16 %v2853, %v2852
      %v2876 = vpack.c.b16 %v2855, %v2854
      %v2877 = vpack.c.b16 %v2857, %v2856
      %v2878 = vpack.c.b16 %v2859, %v2858
      %v2879 = vpack.c.b16 %v2861, %v2860
      %v2880 = vpack.c.b16 %v2863, %v2862
      %v2881 = vpack.c.b16 %v2865, %v2864
      %v2914 = vunpack.c.l.b16 %v2786
      %v2915 = vunpack.c.l.b16 %v2787
      %v2916 = vunpack.c.l.b16 %v2788
      %v2917 = vunpack.c.l.b16 %v2789
      %v2918 = vunpack.c.l.b16 %v2790
      %v2919 = vunpack.c.l.b16 %v2791
      %v2920 = vunpack.c.l.b16 %v2792
      %v2921 = vunpack.c.l.b16 %v2793
      %v2922 = vunpack.c.l.b16 %v2794
      %v2923 = vunpack.c.l.b16 %v2795
      %v2924 = vunpack.c.l.b16 %v2796
      %v2925 = vunpack.c.l.b16 %v2797
      %v2926 = vunpack.c.l.b16 %v2798
      %v2927 = vunpack.c.l.b16 %v2799
      %v2928 = vunpack.c.l.b16 %v2800
      %v2929 = vunpack.c.l.b16 %v2801
      %v2930 = vpack.c.b16 %v2915, %v2914
      %v2931 = vpack.c.b16 %v2917, %v2916
      %v2932 = vpack.c.b16 %v2919, %v2918
      %v2933 = vpack.c.b16 %v2921, %v2920
      %v2934 = vpack.c.b16 %v2923, %v2922
      %v2935 = vpack.c.b16 %v2925, %v2924
      %v2936 = vpack.c.b16 %v2927, %v2926
      %v2937 = vpack.c.b16 %v2929, %v2928
      %2946 = vmatprep.subr.bf16.mxu0 0
      %2947 = vmatpush1.bf16.msra.mxu0 %v2937
      %2948 = vmatprep.subr.bf16.mxu0 0
      %2949 = vmatpush1.bf16.msra.mxu0 %v2936
      %2950 = vmatprep.subr.bf16.mxu0 0
      %2951 = vmatpush1.bf16.msra.mxu0 %v2935
      %2952 = vmatprep.subr.bf16.mxu0 0
      %2953 = vmatpush1.bf16.msra.mxu0 %v2934
      %2954 = vmatprep.subr.bf16.mxu0 0
      %2955 = vmatpush1.bf16.msra.mxu0 %v2933
      %2956 = vmatprep.subr.bf16.mxu0 0
      %2957 = vmatpush1.bf16.msra.mxu0 %v2932
      %2958 = vmatprep.subr.bf16.mxu0 0
      %2959 = vmatpush1.bf16.msra.mxu0 %v2931
      %2960 = vmatprep.subr.bf16.mxu0 0
      %2961 = vmatpush1.bf16.msra.mxu0 %v2930
      %2962 = vmatprep.subr.bf16.mxu0 0
      %2963 = vmatpush2.bf16.msra.mxu0 0
      %2964 = vmatprep.subr.bf16.mxu0 0
      %2965 = vmatpush2.bf16.msra.mxu0 0
      %2966 = vmatprep.subr.bf16.mxu0 0
      %2967 = vmatpush2.bf16.msra.mxu0 0
      %2968 = vmatprep.subr.bf16.mxu0 0
      %2969 = vmatpush2.bf16.msra.mxu0 0
      %2970 = vmatprep.subr.bf16.mxu0 0
      %2971 = vmatpush2.bf16.msra.mxu0 0
      %2972 = vmatprep.subr.bf16.mxu0 0
      %2973 = vmatpush2.bf16.msra.mxu0 0
      %2974 = vmatprep.subr.bf16.mxu0 0
      %2975 = vmatpush2.bf16.msra.mxu0 0
      %2976 = vmatprep.subr.bf16.mxu0 0
      %2977 = vmatpush2.bf16.msra.mxu0 0
      %2978 = vmatprep.mubr.bf16.mxu0 0
      %2979 = vmatmul.mubr.bf16.gmra.mxu0 %v2866
      %v2980 = vpop.f32.mrf.mxu0
      %v2981 = vadd.f32 0.0, %v2980
      %v2982 = vpop.f32.mrf.mxu0
      %v2983 = vpop.f32.mrf.mxu0
      %v2984 = vadd.f32 0.0, %v2983
      %v2985 = vpop.f32.mrf.mxu0
      %2986 = vmatprep.mubr.bf16.mxu0 0
      %2987 = vmatmul.mubr.bf16.gmra.mxu0 %v2867
      %v2988 = vpop.f32.mrf.mxu0
      %v2989 = vadd.f32 0.0, %v2988
      %v2990 = vpop.f32.mrf.mxu0
      %v2991 = vpop.f32.mrf.mxu0
      %v2992 = vadd.f32 0.0, %v2991
      %v2993 = vpop.f32.mrf.mxu0
      %2994 = vmatprep.mubr.bf16.mxu0 0
      %2995 = vmatmul.mubr.bf16.gmra.mxu0 %v2868
      %v2996 = vpop.f32.mrf.mxu0
      %v2997 = vadd.f32 0.0, %v2996
      %v2998 = vpop.f32.mrf.mxu0
      %v2999 = vpop.f32.mrf.mxu0
      %v3000 = vadd.f32 0.0, %v2999
      %v3001 = vpop.f32.mrf.mxu0
      %3002 = vmatprep.mubr.bf16.mxu0 0
      %3003 = vmatmul.mubr.bf16.gmra.mxu0 %v2869
      %v3004 = vpop.f32.mrf.mxu0
      %v3005 = vadd.f32 0.0, %v3004
      %v3006 = vpop.f32.mrf.mxu0
      %v3007 = vpop.f32.mrf.mxu0
      %v3008 = vadd.f32 0.0, %v3007
      %v3009 = vpop.f32.mrf.mxu0
      %3010 = vmatprep.mubr.bf16.mxu0 0
      %3011 = vmatmul.mubr.bf16.gmra.mxu0 %v2870
      %v3012 = vpop.f32.mrf.mxu0
      %v3013 = vadd.f32 0.0, %v3012
      %v3014 = vpop.f32.mrf.mxu0
      %v3015 = vpop.f32.mrf.mxu0
      %v3016 = vadd.f32 0.0, %v3015
      %v3017 = vpop.f32.mrf.mxu0
      %3018 = vmatprep.mubr.bf16.mxu0 0
      %3019 = vmatmul.mubr.bf16.gmra.mxu0 %v2871
      %v3020 = vpop.f32.mrf.mxu0
      %v3021 = vadd.f32 0.0, %v3020
      %v3022 = vpop.f32.mrf.mxu0
      %v3023 = vpop.f32.mrf.mxu0
      %v3024 = vadd.f32 0.0, %v3023
      %v3025 = vpop.f32.mrf.mxu0
      %3026 = vmatprep.mubr.bf16.mxu0 0
      %3027 = vmatmul.mubr.bf16.gmra.mxu0 %v2872
      %v3028 = vpop.f32.mrf.mxu0
      %v3029 = vadd.f32 0.0, %v3028
      %v3030 = vpop.f32.mrf.mxu0
      %v3031 = vpop.f32.mrf.mxu0
      %v3032 = vadd.f32 0.0, %v3031
      %v3033 = vpop.f32.mrf.mxu0
      %3034 = vmatprep.mubr.bf16.mxu0 0
      %3035 = vmatmul.mubr.bf16.gmra.mxu0 %v2873
      %v3036 = vpop.f32.mrf.mxu0
      %v3037 = vadd.f32 0.0, %v3036
      %v3038 = vpop.f32.mrf.mxu0
      %v3039 = vpop.f32.mrf.mxu0
      %v3040 = vadd.f32 0.0, %v3039
      %v3041 = vpop.f32.mrf.mxu0
      %3042 = vmatprep.mubr.bf16.mxu0 0
      %3043 = vmatmul.mubr.bf16.gmra.mxu0 %v2874
      %v3044 = vpop.f32.mrf.mxu0
      %v3045 = vadd.f32 0.0, %v3044
      %v3046 = vpop.f32.mrf.mxu0
      %v3047 = vpop.f32.mrf.mxu0
      %v3048 = vadd.f32 0.0, %v3047
      %v3049 = vpop.f32.mrf.mxu0
      %3050 = vmatprep.mubr.bf16.mxu0 0
      %3051 = vmatmul.mubr.bf16.gmra.mxu0 %v2875
      %v3052 = vpop.f32.mrf.mxu0
      %v3053 = vadd.f32 0.0, %v3052
      %v3054 = vpop.f32.mrf.mxu0
      %v3055 = vpop.f32.mrf.mxu0
      %v3056 = vadd.f32 0.0, %v3055
      %v3057 = vpop.f32.mrf.mxu0
      %3058 = vmatprep.mubr.bf16.mxu0 0
      %3059 = vmatmul.mubr.bf16.gmra.mxu0 %v2876
      %v3060 = vpop.f32.mrf.mxu0
      %v3061 = vadd.f32 0.0, %v3060
      %v3062 = vpop.f32.mrf.mxu0
      %v3063 = vpop.f32.mrf.mxu0
      %v3064 = vadd.f32 0.0, %v3063
      %v3065 = vpop.f32.mrf.mxu0
      %3066 = vmatprep.mubr.bf16.mxu0 0
      %3067 = vmatmul.mubr.bf16.gmra.mxu0 %v2877
      %v3068 = vpop.f32.mrf.mxu0
      %v3069 = vadd.f32 0.0, %v3068
      %v3070 = vpop.f32.mrf.mxu0
      %v3071 = vpop.f32.mrf.mxu0
      %v3072 = vadd.f32 0.0, %v3071
      %v3073 = vpop.f32.mrf.mxu0
      %3074 = vmatprep.mubr.bf16.mxu0 0
      %3075 = vmatmul.mubr.bf16.gmra.mxu0 %v2878
      %v3076 = vpop.f32.mrf.mxu0
      %v3077 = vadd.f32 0.0, %v3076
      %v3078 = vpop.f32.mrf.mxu0
      %v3079 = vpop.f32.mrf.mxu0
      %v3080 = vadd.f32 0.0, %v3079
      %v3081 = vpop.f32.mrf.mxu0
      %3082 = vmatprep.mubr.bf16.mxu0 0
      %3083 = vmatmul.mubr.bf16.gmra.mxu0 %v2879
      %v3084 = vpop.f32.mrf.mxu0
      %v3085 = vadd.f32 0.0, %v3084
      %v3086 = vpop.f32.mrf.mxu0
      %v3087 = vpop.f32.mrf.mxu0
      %v3088 = vadd.f32 0.0, %v3087
      %v3089 = vpop.f32.mrf.mxu0
      %3090 = vmatprep.mubr.bf16.mxu0 0
      %3091 = vmatmul.mubr.bf16.gmra.mxu0 %v2880
      %v3092 = vpop.f32.mrf.mxu0
      %v3093 = vadd.f32 0.0, %v3092
      %v3094 = vpop.f32.mrf.mxu0
      %v3095 = vpop.f32.mrf.mxu0
      %v3096 = vadd.f32 0.0, %v3095
      %v3097 = vpop.f32.mrf.mxu0
      %3098 = vmatprep.mubr.bf16.mxu0 0
      %3099 = vmatmul.mubr.bf16.gmra.mxu0 %v2881
      %v3100 = vpop.f32.mrf.mxu0
      %v3101 = vadd.f32 0.0, %v3100
      %v3102 = vpop.f32.mrf.mxu0
      %v3103 = vpop.f32.mrf.mxu0
      %v3104 = vadd.f32 0.0, %v3103
      %v3105 = vpop.f32.mrf.mxu0
      %3106 = vdwg.mxu0
      %v3107 = vadd.f32 %v2722, %v2981
      %v3108 = vadd.f32 %v2723, %v2984
      %v3109 = vadd.f32 %v2724, %v2989
      %v3110 = vadd.f32 %v2725, %v2992
      %v3111 = vadd.f32 %v2726, %v2997
      %v3112 = vadd.f32 %v2727, %v3000
      %v3113 = vadd.f32 %v2728, %v3005
      %v3114 = vadd.f32 %v2729, %v3008
      %v3115 = vadd.f32 %v2730, %v3013
      %v3116 = vadd.f32 %v2731, %v3016
      %v3117 = vadd.f32 %v2732, %v3021
      %v3118 = vadd.f32 %v2733, %v3024
      %v3119 = vadd.f32 %v2734, %v3029
      %v3120 = vadd.f32 %v2735, %v3032
      %v3121 = vadd.f32 %v2736, %v3037
      %v3122 = vadd.f32 %v2737, %v3040
      %v3123 = vadd.f32 %v2738, %v3045
      %v3124 = vadd.f32 %v2739, %v3048
      %v3125 = vadd.f32 %v2740, %v3053
      %v3126 = vadd.f32 %v2741, %v3056
      %v3127 = vadd.f32 %v2742, %v3061
      %v3128 = vadd.f32 %v2743, %v3064
      %v3129 = vadd.f32 %v2744, %v3069
      %v3130 = vadd.f32 %v2745, %v3072
      %v3131 = vadd.f32 %v2746, %v3077
      %v3132 = vadd.f32 %v2747, %v3080
      %v3133 = vadd.f32 %v2748, %v3085
      %v3134 = vadd.f32 %v2749, %v3088
      %v3135 = vadd.f32 %v2750, %v3093
      %v3136 = vadd.f32 %v2751, %v3096
      %v3137 = vadd.f32 %v2752, %v3101
      %v3138 = vadd.f32 %v2753, %v3104
      %v3139 = vld [vmem:[%s925] sm:$0xf]
      %v3140 = vld [vmem:[%s925 + $0x4] sm:$0xf]
      %v3141 = vld [vmem:[%s925 + $0x8] sm:$0xf]
      %v3142 = vld [vmem:[%s925 + $0xc] sm:$0xf]
      %v3143 = vld [vmem:[%s925 + $0x10] sm:$0xf]
      %v3144 = vld [vmem:[%s925 + $0x14] sm:$0xf]
      %v3145 = vld [vmem:[%s925 + $0x18] sm:$0xf]
      %v3146 = vld [vmem:[%s925 + $0x1c] sm:$0xf]
      %v3147 = vld [vmem:[%s925 + $0x20] sm:$0xf]
      %v3148 = vld [vmem:[%s925 + $0x24] sm:$0xf]
      %v3149 = vld [vmem:[%s925 + $0x28] sm:$0xf]
      %v3150 = vld [vmem:[%s925 + $0x2c] sm:$0xf]
      %v3151 = vld [vmem:[%s925 + $0x30] sm:$0xf]
      %v3152 = vld [vmem:[%s925 + $0x34] sm:$0xf]
      %v3153 = vld [vmem:[%s925 + $0x38] sm:$0xf]
      %v3154 = vld [vmem:[%s925 + $0x3c] sm:$0xf]
      %v3155 = vld [vmem:[%s925 + $0x40] sm:$0xf]
      %v3156 = vld [vmem:[%s925 + $0x44] sm:$0xf]
      %v3157 = vld [vmem:[%s925 + $0x48] sm:$0xf]
      %v3158 = vld [vmem:[%s925 + $0x4c] sm:$0xf]
      %v3159 = vld [vmem:[%s925 + $0x50] sm:$0xf]
      %v3160 = vld [vmem:[%s925 + $0x54] sm:$0xf]
      %v3161 = vld [vmem:[%s925 + $0x58] sm:$0xf]
      %v3162 = vld [vmem:[%s925 + $0x5c] sm:$0xf]
      %v3163 = vld [vmem:[%s925 + $0x60] sm:$0xf]
      %v3164 = vld [vmem:[%s925 + $0x64] sm:$0xf]
      %v3165 = vld [vmem:[%s925 + $0x68] sm:$0xf]
      %v3166 = vld [vmem:[%s925 + $0x6c] sm:$0xf]
      %v3167 = vld [vmem:[%s925 + $0x70] sm:$0xf]
      %v3168 = vld [vmem:[%s925 + $0x74] sm:$0xf]
      %v3169 = vld [vmem:[%s925 + $0x78] sm:$0xf]
      %v3170 = vld [vmem:[%s925 + $0x7c] sm:$0xf]
      %v3171 = vld [vmem:[%s2 + $0x100] sm:$0xf]
      %v3172 = vld [vmem:[%s2 + $0x104] sm:$0xf]
      %v3173 = vld [vmem:[%s2 + $0x108] sm:$0xf]
      %v3174 = vld [vmem:[%s2 + $0x10c] sm:$0xf]
      %v3175 = vld [vmem:[%s2 + $0x110] sm:$0xf]
      %v3176 = vld [vmem:[%s2 + $0x114] sm:$0xf]
      %v3177 = vld [vmem:[%s2 + $0x118] sm:$0xf]
      %v3178 = vld [vmem:[%s2 + $0x11c] sm:$0xf]
      %v3179 = vld [vmem:[%s2 + $0x120] sm:$0xf]
      %v3180 = vld [vmem:[%s2 + $0x124] sm:$0xf]
      %v3181 = vld [vmem:[%s2 + $0x128] sm:$0xf]
      %v3182 = vld [vmem:[%s2 + $0x12c] sm:$0xf]
      %v3183 = vld [vmem:[%s2 + $0x130] sm:$0xf]
      %v3184 = vld [vmem:[%s2 + $0x134] sm:$0xf]
      %v3185 = vld [vmem:[%s2 + $0x138] sm:$0xf]
      %v3186 = vld [vmem:[%s2 + $0x13c] sm:$0xf]
      %v3219 = vunpack.c.l.b16 %v3139
      %v3220 = vunpack.c.l.b16 %v3140
      %v3221 = vunpack.c.l.b16 %v3141
      %v3222 = vunpack.c.l.b16 %v3142
      %v3223 = vunpack.c.l.b16 %v3143
      %v3224 = vunpack.c.l.b16 %v3144
      %v3225 = vunpack.c.l.b16 %v3145
      %v3226 = vunpack.c.l.b16 %v3146
      %v3227 = vunpack.c.l.b16 %v3147
      %v3228 = vunpack.c.l.b16 %v3148
      %v3229 = vunpack.c.l.b16 %v3149
      %v3230 = vunpack.c.l.b16 %v3150
      %v3231 = vunpack.c.l.b16 %v3151
      %v3232 = vunpack.c.l.b16 %v3152
      %v3233 = vunpack.c.l.b16 %v3153
      %v3234 = vunpack.c.l.b16 %v3154
      %v3235 = vunpack.c.l.b16 %v3155
      %v3236 = vunpack.c.l.b16 %v3156
      %v3237 = vunpack.c.l.b16 %v3157
      %v3238 = vunpack.c.l.b16 %v3158
      %v3239 = vunpack.c.l.b16 %v3159
      %v3240 = vunpack.c.l.b16 %v3160
      %v3241 = vunpack.c.l.b16 %v3161
      %v3242 = vunpack.c.l.b16 %v3162
      %v3243 = vunpack.c.l.b16 %v3163
      %v3244 = vunpack.c.l.b16 %v3164
      %v3245 = vunpack.c.l.b16 %v3165
      %v3246 = vunpack.c.l.b16 %v3166
      %v3247 = vunpack.c.l.b16 %v3167
      %v3248 = vunpack.c.l.b16 %v3168
      %v3249 = vunpack.c.l.b16 %v3169
      %v3250 = vunpack.c.l.b16 %v3170
      %v3251 = vpack.c.b16 %v3220, %v3219
      %v3252 = vpack.c.b16 %v3222, %v3221
      %v3253 = vpack.c.b16 %v3224, %v3223
      %v3254 = vpack.c.b16 %v3226, %v3225
      %v3255 = vpack.c.b16 %v3228, %v3227
      %v3256 = vpack.c.b16 %v3230, %v3229
      %v3257 = vpack.c.b16 %v3232, %v3231
      %v3258 = vpack.c.b16 %v3234, %v3233
      %v3259 = vpack.c.b16 %v3236, %v3235
      %v3260 = vpack.c.b16 %v3238, %v3237
      %v3261 = vpack.c.b16 %v3240, %v3239
      %v3262 = vpack.c.b16 %v3242, %v3241
      %v3263 = vpack.c.b16 %v3244, %v3243
      %v3264 = vpack.c.b16 %v3246, %v3245
      %v3265 = vpack.c.b16 %v3248, %v3247
      %v3266 = vpack.c.b16 %v3250, %v3249
      %v3299 = vunpack.c.l.b16 %v3171
      %v3300 = vunpack.c.l.b16 %v3172
      %v3301 = vunpack.c.l.b16 %v3173
      %v3302 = vunpack.c.l.b16 %v3174
      %v3303 = vunpack.c.l.b16 %v3175
      %v3304 = vunpack.c.l.b16 %v3176
      %v3305 = vunpack.c.l.b16 %v3177
      %v3306 = vunpack.c.l.b16 %v3178
      %v3307 = vunpack.c.l.b16 %v3179
      %v3308 = vunpack.c.l.b16 %v3180
      %v3309 = vunpack.c.l.b16 %v3181
      %v3310 = vunpack.c.l.b16 %v3182
      %v3311 = vunpack.c.l.b16 %v3183
      %v3312 = vunpack.c.l.b16 %v3184
      %v3313 = vunpack.c.l.b16 %v3185
      %v3314 = vunpack.c.l.b16 %v3186
      %v3315 = vpack.c.b16 %v3300, %v3299
      %v3316 = vpack.c.b16 %v3302, %v3301
      %v3317 = vpack.c.b16 %v3304, %v3303
      %v3318 = vpack.c.b16 %v3306, %v3305
      %v3319 = vpack.c.b16 %v3308, %v3307
      %v3320 = vpack.c.b16 %v3310, %v3309
      %v3321 = vpack.c.b16 %v3312, %v3311
      %v3322 = vpack.c.b16 %v3314, %v3313
      %3331 = vmatprep.subr.bf16.mxu0 0
      %3332 = vmatpush1.bf16.msra.mxu0 %v3322
      %3333 = vmatprep.subr.bf16.mxu0 0
      %3334 = vmatpush1.bf16.msra.mxu0 %v3321
      %3335 = vmatprep.subr.bf16.mxu0 0
      %3336 = vmatpush1.bf16.msra.mxu0 %v3320
      %3337 = vmatprep.subr.bf16.mxu0 0
      %3338 = vmatpush1.bf16.msra.mxu0 %v3319
      %3339 = vmatprep.subr.bf16.mxu0 0
      %3340 = vmatpush1.bf16.msra.mxu0 %v3318
      %3341 = vmatprep.subr.bf16.mxu0 0
      %3342 = vmatpush1.bf16.msra.mxu0 %v3317
      %3343 = vmatprep.subr.bf16.mxu0 0
      %3344 = vmatpush1.bf16.msra.mxu0 %v3316
      %3345 = vmatprep.subr.bf16.mxu0 0
      %3346 = vmatpush1.bf16.msra.mxu0 %v3315
      %3347 = vmatprep.subr.bf16.mxu0 0
      %3348 = vmatpush2.bf16.msra.mxu0 0
      %3349 = vmatprep.subr.bf16.mxu0 0
      %3350 = vmatpush2.bf16.msra.mxu0 0
      %3351 = vmatprep.subr.bf16.mxu0 0
      %3352 = vmatpush2.bf16.msra.mxu0 0
      %3353 = vmatprep.subr.bf16.mxu0 0
      %3354 = vmatpush2.bf16.msra.mxu0 0
      %3355 = vmatprep.subr.bf16.mxu0 0
      %3356 = vmatpush2.bf16.msra.mxu0 0
      %3357 = vmatprep.subr.bf16.mxu0 0
      %3358 = vmatpush2.bf16.msra.mxu0 0
      %3359 = vmatprep.subr.bf16.mxu0 0
      %3360 = vmatpush2.bf16.msra.mxu0 0
      %3361 = vmatprep.subr.bf16.mxu0 0
      %3362 = vmatpush2.bf16.msra.mxu0 0
      %3363 = vmatprep.mubr.bf16.mxu0 0
      %3364 = vmatmul.mubr.bf16.gmra.mxu0 %v3251
      %v3365 = vpop.f32.mrf.mxu0
      %v3366 = vadd.f32 0.0, %v3365
      %v3367 = vpop.f32.mrf.mxu0
      %v3368 = vpop.f32.mrf.mxu0
      %v3369 = vadd.f32 0.0, %v3368
      %v3370 = vpop.f32.mrf.mxu0
      %3371 = vmatprep.mubr.bf16.mxu0 0
      %3372 = vmatmul.mubr.bf16.gmra.mxu0 %v3252
      %v3373 = vpop.f32.mrf.mxu0
      %v3374 = vadd.f32 0.0, %v3373
      %v3375 = vpop.f32.mrf.mxu0
      %v3376 = vpop.f32.mrf.mxu0
      %v3377 = vadd.f32 0.0, %v3376
      %v3378 = vpop.f32.mrf.mxu0
      %3379 = vmatprep.mubr.bf16.mxu0 0
      %3380 = vmatmul.mubr.bf16.gmra.mxu0 %v3253
      %v3381 = vpop.f32.mrf.mxu0
      %v3382 = vadd.f32 0.0, %v3381
      %v3383 = vpop.f32.mrf.mxu0
      %v3384 = vpop.f32.mrf.mxu0
      %v3385 = vadd.f32 0.0, %v3384
      %v3386 = vpop.f32.mrf.mxu0
      %3387 = vmatprep.mubr.bf16.mxu0 0
      %3388 = vmatmul.mubr.bf16.gmra.mxu0 %v3254
      %v3389 = vpop.f32.mrf.mxu0
      %v3390 = vadd.f32 0.0, %v3389
      %v3391 = vpop.f32.mrf.mxu0
      %v3392 = vpop.f32.mrf.mxu0
      %v3393 = vadd.f32 0.0, %v3392
      %v3394 = vpop.f32.mrf.mxu0
      %3395 = vmatprep.mubr.bf16.mxu0 0
      %3396 = vmatmul.mubr.bf16.gmra.mxu0 %v3255
      %v3397 = vpop.f32.mrf.mxu0
      %v3398 = vadd.f32 0.0, %v3397
      %v3399 = vpop.f32.mrf.mxu0
      %v3400 = vpop.f32.mrf.mxu0
      %v3401 = vadd.f32 0.0, %v3400
      %v3402 = vpop.f32.mrf.mxu0
      %3403 = vmatprep.mubr.bf16.mxu0 0
      %3404 = vmatmul.mubr.bf16.gmra.mxu0 %v3256
      %v3405 = vpop.f32.mrf.mxu0
      %v3406 = vadd.f32 0.0, %v3405
      %v3407 = vpop.f32.mrf.mxu0
      %v3408 = vpop.f32.mrf.mxu0
      %v3409 = vadd.f32 0.0, %v3408
      %v3410 = vpop.f32.mrf.mxu0
      %3411 = vmatprep.mubr.bf16.mxu0 0
      %3412 = vmatmul.mubr.bf16.gmra.mxu0 %v3257
      %v3413 = vpop.f32.mrf.mxu0
      %v3414 = vadd.f32 0.0, %v3413
      %v3415 = vpop.f32.mrf.mxu0
      %v3416 = vpop.f32.mrf.mxu0
      %v3417 = vadd.f32 0.0, %v3416
      %v3418 = vpop.f32.mrf.mxu0
      %3419 = vmatprep.mubr.bf16.mxu0 0
      %3420 = vmatmul.mubr.bf16.gmra.mxu0 %v3258
      %v3421 = vpop.f32.mrf.mxu0
      %v3422 = vadd.f32 0.0, %v3421
      %v3423 = vpop.f32.mrf.mxu0
      %v3424 = vpop.f32.mrf.mxu0
      %v3425 = vadd.f32 0.0, %v3424
      %v3426 = vpop.f32.mrf.mxu0
      %3427 = vmatprep.mubr.bf16.mxu0 0
      %3428 = vmatmul.mubr.bf16.gmra.mxu0 %v3259
      %v3429 = vpop.f32.mrf.mxu0
      %v3430 = vadd.f32 0.0, %v3429
      %v3431 = vpop.f32.mrf.mxu0
      %v3432 = vpop.f32.mrf.mxu0
      %v3433 = vadd.f32 0.0, %v3432
      %v3434 = vpop.f32.mrf.mxu0
      %3435 = vmatprep.mubr.bf16.mxu0 0
      %3436 = vmatmul.mubr.bf16.gmra.mxu0 %v3260
      %v3437 = vpop.f32.mrf.mxu0
      %v3438 = vadd.f32 0.0, %v3437
      %v3439 = vpop.f32.mrf.mxu0
      %v3440 = vpop.f32.mrf.mxu0
      %v3441 = vadd.f32 0.0, %v3440
      %v3442 = vpop.f32.mrf.mxu0
      %3443 = vmatprep.mubr.bf16.mxu0 0
      %3444 = vmatmul.mubr.bf16.gmra.mxu0 %v3261
      %v3445 = vpop.f32.mrf.mxu0
      %v3446 = vadd.f32 0.0, %v3445
      %v3447 = vpop.f32.mrf.mxu0
      %v3448 = vpop.f32.mrf.mxu0
      %v3449 = vadd.f32 0.0, %v3448
      %v3450 = vpop.f32.mrf.mxu0
      %3451 = vmatprep.mubr.bf16.mxu0 0
      %3452 = vmatmul.mubr.bf16.gmra.mxu0 %v3262
      %v3453 = vpop.f32.mrf.mxu0
      %v3454 = vadd.f32 0.0, %v3453
      %v3455 = vpop.f32.mrf.mxu0
      %v3456 = vpop.f32.mrf.mxu0
      %v3457 = vadd.f32 0.0, %v3456
      %v3458 = vpop.f32.mrf.mxu0
      %3459 = vmatprep.mubr.bf16.mxu0 0
      %3460 = vmatmul.mubr.bf16.gmra.mxu0 %v3263
      %v3461 = vpop.f32.mrf.mxu0
      %v3462 = vadd.f32 0.0, %v3461
      %v3463 = vpop.f32.mrf.mxu0
      %v3464 = vpop.f32.mrf.mxu0
      %v3465 = vadd.f32 0.0, %v3464
      %v3466 = vpop.f32.mrf.mxu0
      %3467 = vmatprep.mubr.bf16.mxu0 0
      %3468 = vmatmul.mubr.bf16.gmra.mxu0 %v3264
      %v3469 = vpop.f32.mrf.mxu0
      %v3470 = vadd.f32 0.0, %v3469
      %v3471 = vpop.f32.mrf.mxu0
      %v3472 = vpop.f32.mrf.mxu0
      %v3473 = vadd.f32 0.0, %v3472
      %v3474 = vpop.f32.mrf.mxu0
      %3475 = vmatprep.mubr.bf16.mxu0 0
      %3476 = vmatmul.mubr.bf16.gmra.mxu0 %v3265
      %v3477 = vpop.f32.mrf.mxu0
      %v3478 = vadd.f32 0.0, %v3477
      %v3479 = vpop.f32.mrf.mxu0
      %v3480 = vpop.f32.mrf.mxu0
      %v3481 = vadd.f32 0.0, %v3480
      %v3482 = vpop.f32.mrf.mxu0
      %3483 = vmatprep.mubr.bf16.mxu0 0
      %3484 = vmatmul.mubr.bf16.gmra.mxu0 %v3266
      %v3485 = vpop.f32.mrf.mxu0
      %v3486 = vadd.f32 0.0, %v3485
      %v3487 = vpop.f32.mrf.mxu0
      %v3488 = vpop.f32.mrf.mxu0
      %v3489 = vadd.f32 0.0, %v3488
      %v3490 = vpop.f32.mrf.mxu0
      %3491 = vdwg.mxu0
      %v3492 = vadd.f32 %v3107, %v3366
      %v3493 = vadd.f32 %v3108, %v3369
      %v3494 = vadd.f32 %v3109, %v3374
      %v3495 = vadd.f32 %v3110, %v3377
      %v3496 = vadd.f32 %v3111, %v3382
      %v3497 = vadd.f32 %v3112, %v3385
      %v3498 = vadd.f32 %v3113, %v3390
      %v3499 = vadd.f32 %v3114, %v3393
      %v3500 = vadd.f32 %v3115, %v3398
      %v3501 = vadd.f32 %v3116, %v3401
      %v3502 = vadd.f32 %v3117, %v3406
      %v3503 = vadd.f32 %v3118, %v3409
      %v3504 = vadd.f32 %v3119, %v3414
      %v3505 = vadd.f32 %v3120, %v3417
      %v3506 = vadd.f32 %v3121, %v3422
      %v3507 = vadd.f32 %v3122, %v3425
      %v3508 = vadd.f32 %v3123, %v3430
      %v3509 = vadd.f32 %v3124, %v3433
      %v3510 = vadd.f32 %v3125, %v3438
      %v3511 = vadd.f32 %v3126, %v3441
      %v3512 = vadd.f32 %v3127, %v3446
      %v3513 = vadd.f32 %v3128, %v3449
      %v3514 = vadd.f32 %v3129, %v3454
      %v3515 = vadd.f32 %v3130, %v3457
      %v3516 = vadd.f32 %v3131, %v3462
      %v3517 = vadd.f32 %v3132, %v3465
      %v3518 = vadd.f32 %v3133, %v3470
      %v3519 = vadd.f32 %v3134, %v3473
      %v3520 = vadd.f32 %v3135, %v3478
      %v3521 = vadd.f32 %v3136, %v3481
      %v3522 = vadd.f32 %v3137, %v3486
      %v3523 = vadd.f32 %v3138, %v3489
      %v3524 = vld [vmem:[%s1367] sm:$0xf]
      %v3525 = vld [vmem:[%s1367 + $0x4] sm:$0xf]
      %v3526 = vld [vmem:[%s1367 + $0x8] sm:$0xf]
      %v3527 = vld [vmem:[%s1367 + $0xc] sm:$0xf]
      %v3528 = vld [vmem:[%s1367 + $0x10] sm:$0xf]
      %v3529 = vld [vmem:[%s1367 + $0x14] sm:$0xf]
      %v3530 = vld [vmem:[%s1367 + $0x18] sm:$0xf]
      %v3531 = vld [vmem:[%s1367 + $0x1c] sm:$0xf]
      %v3532 = vld [vmem:[%s1367 + $0x20] sm:$0xf]
      %v3533 = vld [vmem:[%s1367 + $0x24] sm:$0xf]
      %v3534 = vld [vmem:[%s1367 + $0x28] sm:$0xf]
      %v3535 = vld [vmem:[%s1367 + $0x2c] sm:$0xf]
      %v3536 = vld [vmem:[%s1367 + $0x30] sm:$0xf]
      %v3537 = vld [vmem:[%s1367 + $0x34] sm:$0xf]
      %v3538 = vld [vmem:[%s1367 + $0x38] sm:$0xf]
      %v3539 = vld [vmem:[%s1367 + $0x3c] sm:$0xf]
      %v3540 = vld [vmem:[%s1367 + $0x40] sm:$0xf]
      %v3541 = vld [vmem:[%s1367 + $0x44] sm:$0xf]
      %v3542 = vld [vmem:[%s1367 + $0x48] sm:$0xf]
      %v3543 = vld [vmem:[%s1367 + $0x4c] sm:$0xf]
      %v3544 = vld [vmem:[%s1367 + $0x50] sm:$0xf]
      %v3545 = vld [vmem:[%s1367 + $0x54] sm:$0xf]
      %v3546 = vld [vmem:[%s1367 + $0x58] sm:$0xf]
      %v3547 = vld [vmem:[%s1367 + $0x5c] sm:$0xf]
      %v3548 = vld [vmem:[%s1367 + $0x60] sm:$0xf]
      %v3549 = vld [vmem:[%s1367 + $0x64] sm:$0xf]
      %v3550 = vld [vmem:[%s1367 + $0x68] sm:$0xf]
      %v3551 = vld [vmem:[%s1367 + $0x6c] sm:$0xf]
      %v3552 = vld [vmem:[%s1367 + $0x70] sm:$0xf]
      %v3553 = vld [vmem:[%s1367 + $0x74] sm:$0xf]
      %v3554 = vld [vmem:[%s1367 + $0x78] sm:$0xf]
      %v3555 = vld [vmem:[%s1367 + $0x7c] sm:$0xf]
      %v3556 = vld [vmem:[%s2 + $0x140] sm:$0xf]
      %v3557 = vld [vmem:[%s2 + $0x144] sm:$0xf]
      %v3558 = vld [vmem:[%s2 + $0x148] sm:$0xf]
      %v3559 = vld [vmem:[%s2 + $0x14c] sm:$0xf]
      %v3560 = vld [vmem:[%s2 + $0x150] sm:$0xf]
      %v3561 = vld [vmem:[%s2 + $0x154] sm:$0xf]
      %v3562 = vld [vmem:[%s2 + $0x158] sm:$0xf]
      %v3563 = vld [vmem:[%s2 + $0x15c] sm:$0xf]
      %v3564 = vld [vmem:[%s2 + $0x160] sm:$0xf]
      %v3565 = vld [vmem:[%s2 + $0x164] sm:$0xf]
      %v3566 = vld [vmem:[%s2 + $0x168] sm:$0xf]
      %v3567 = vld [vmem:[%s2 + $0x16c] sm:$0xf]
      %v3568 = vld [vmem:[%s2 + $0x170] sm:$0xf]
      %v3569 = vld [vmem:[%s2 + $0x174] sm:$0xf]
      %v3570 = vld [vmem:[%s2 + $0x178] sm:$0xf]
      %v3571 = vld [vmem:[%s2 + $0x17c] sm:$0xf]
      %v3604 = vunpack.c.l.b16 %v3524
      %v3605 = vunpack.c.l.b16 %v3525
      %v3606 = vunpack.c.l.b16 %v3526
      %v3607 = vunpack.c.l.b16 %v3527
      %v3608 = vunpack.c.l.b16 %v3528
      %v3609 = vunpack.c.l.b16 %v3529
      %v3610 = vunpack.c.l.b16 %v3530
      %v3611 = vunpack.c.l.b16 %v3531
      %v3612 = vunpack.c.l.b16 %v3532
      %v3613 = vunpack.c.l.b16 %v3533
      %v3614 = vunpack.c.l.b16 %v3534
      %v3615 = vunpack.c.l.b16 %v3535
      %v3616 = vunpack.c.l.b16 %v3536
      %v3617 = vunpack.c.l.b16 %v3537
      %v3618 = vunpack.c.l.b16 %v3538
      %v3619 = vunpack.c.l.b16 %v3539
      %v3620 = vunpack.c.l.b16 %v3540
      %v3621 = vunpack.c.l.b16 %v3541
      %v3622 = vunpack.c.l.b16 %v3542
      %v3623 = vunpack.c.l.b16 %v3543
      %v3624 = vunpack.c.l.b16 %v3544
      %v3625 = vunpack.c.l.b16 %v3545
      %v3626 = vunpack.c.l.b16 %v3546
      %v3627 = vunpack.c.l.b16 %v3547
      %v3628 = vunpack.c.l.b16 %v3548
      %v3629 = vunpack.c.l.b16 %v3549
      %v3630 = vunpack.c.l.b16 %v3550
      %v3631 = vunpack.c.l.b16 %v3551
      %v3632 = vunpack.c.l.b16 %v3552
      %v3633 = vunpack.c.l.b16 %v3553
      %v3634 = vunpack.c.l.b16 %v3554
      %v3635 = vunpack.c.l.b16 %v3555
      %v3636 = vpack.c.b16 %v3605, %v3604
      %v3637 = vpack.c.b16 %v3607, %v3606
      %v3638 = vpack.c.b16 %v3609, %v3608
      %v3639 = vpack.c.b16 %v3611, %v3610
      %v3640 = vpack.c.b16 %v3613, %v3612
      %v3641 = vpack.c.b16 %v3615, %v3614
      %v3642 = vpack.c.b16 %v3617, %v3616
      %v3643 = vpack.c.b16 %v3619, %v3618
      %v3644 = vpack.c.b16 %v3621, %v3620
      %v3645 = vpack.c.b16 %v3623, %v3622
      %v3646 = vpack.c.b16 %v3625, %v3624
      %v3647 = vpack.c.b16 %v3627, %v3626
      %v3648 = vpack.c.b16 %v3629, %v3628
      %v3649 = vpack.c.b16 %v3631, %v3630
      %v3650 = vpack.c.b16 %v3633, %v3632
      %v3651 = vpack.c.b16 %v3635, %v3634
      %v3684 = vunpack.c.l.b16 %v3556
      %v3685 = vunpack.c.l.b16 %v3557
      %v3686 = vunpack.c.l.b16 %v3558
      %v3687 = vunpack.c.l.b16 %v3559
      %v3688 = vunpack.c.l.b16 %v3560
      %v3689 = vunpack.c.l.b16 %v3561
      %v3690 = vunpack.c.l.b16 %v3562
      %v3691 = vunpack.c.l.b16 %v3563
      %v3692 = vunpack.c.l.b16 %v3564
      %v3693 = vunpack.c.l.b16 %v3565
      %v3694 = vunpack.c.l.b16 %v3566
      %v3695 = vunpack.c.l.b16 %v3567
      %v3696 = vunpack.c.l.b16 %v3568
      %v3697 = vunpack.c.l.b16 %v3569
      %v3698 = vunpack.c.l.b16 %v3570
      %v3699 = vunpack.c.l.b16 %v3571
      %v3700 = vpack.c.b16 %v3685, %v3684
      %v3701 = vpack.c.b16 %v3687, %v3686
      %v3702 = vpack.c.b16 %v3689, %v3688
      %v3703 = vpack.c.b16 %v3691, %v3690
      %v3704 = vpack.c.b16 %v3693, %v3692
      %v3705 = vpack.c.b16 %v3695, %v3694
      %v3706 = vpack.c.b16 %v3697, %v3696
      %v3707 = vpack.c.b16 %v3699, %v3698
      %3716 = vmatprep.subr.bf16.mxu0 0
      %3717 = vmatpush1.bf16.msra.mxu0 %v3707
      %3718 = vmatprep.subr.bf16.mxu0 0
      %3719 = vmatpush1.bf16.msra.mxu0 %v3706
      %3720 = vmatprep.subr.bf16.mxu0 0
      %3721 = vmatpush1.bf16.msra.mxu0 %v3705
      %3722 = vmatprep.subr.bf16.mxu0 0
      %3723 = vmatpush1.bf16.msra.mxu0 %v3704
      %3724 = vmatprep.subr.bf16.mxu0 0
      %3725 = vmatpush1.bf16.msra.mxu0 %v3703
      %3726 = vmatprep.subr.bf16.mxu0 0
      %3727 = vmatpush1.bf16.msra.mxu0 %v3702
      %3728 = vmatprep.subr.bf16.mxu0 0
      %3729 = vmatpush1.bf16.msra.mxu0 %v3701
      %3730 = vmatprep.subr.bf16.mxu0 0
      %3731 = vmatpush1.bf16.msra.mxu0 %v3700
      %3732 = vmatprep.subr.bf16.mxu0 0
      %3733 = vmatpush2.bf16.msra.mxu0 0
      %3734 = vmatprep.subr.bf16.mxu0 0
      %3735 = vmatpush2.bf16.msra.mxu0 0
      %3736 = vmatprep.subr.bf16.mxu0 0
      %3737 = vmatpush2.bf16.msra.mxu0 0
      %3738 = vmatprep.subr.bf16.mxu0 0
      %3739 = vmatpush2.bf16.msra.mxu0 0
      %3740 = vmatprep.subr.bf16.mxu0 0
      %3741 = vmatpush2.bf16.msra.mxu0 0
      %3742 = vmatprep.subr.bf16.mxu0 0
      %3743 = vmatpush2.bf16.msra.mxu0 0
      %3744 = vmatprep.subr.bf16.mxu0 0
      %3745 = vmatpush2.bf16.msra.mxu0 0
      %3746 = vmatprep.subr.bf16.mxu0 0
      %3747 = vmatpush2.bf16.msra.mxu0 0
      %3748 = vmatprep.mubr.bf16.mxu0 0
      %3749 = vmatmul.mubr.bf16.gmra.mxu0 %v3636
      %v3750 = vpop.f32.mrf.mxu0
      %v3751 = vadd.f32 0.0, %v3750
      %v3752 = vpop.f32.mrf.mxu0
      %v3753 = vpop.f32.mrf.mxu0
      %v3754 = vadd.f32 0.0, %v3753
      %v3755 = vpop.f32.mrf.mxu0
      %3756 = vmatprep.mubr.bf16.mxu0 0
      %3757 = vmatmul.mubr.bf16.gmra.mxu0 %v3637
      %v3758 = vpop.f32.mrf.mxu0
      %v3759 = vadd.f32 0.0, %v3758
      %v3760 = vpop.f32.mrf.mxu0
      %v3761 = vpop.f32.mrf.mxu0
      %v3762 = vadd.f32 0.0, %v3761
      %v3763 = vpop.f32.mrf.mxu0
      %3764 = vmatprep.mubr.bf16.mxu0 0
      %3765 = vmatmul.mubr.bf16.gmra.mxu0 %v3638
      %v3766 = vpop.f32.mrf.mxu0
      %v3767 = vadd.f32 0.0, %v3766
      %v3768 = vpop.f32.mrf.mxu0
      %v3769 = vpop.f32.mrf.mxu0
      %v3770 = vadd.f32 0.0, %v3769
      %v3771 = vpop.f32.mrf.mxu0
      %3772 = vmatprep.mubr.bf16.mxu0 0
      %3773 = vmatmul.mubr.bf16.gmra.mxu0 %v3639
      %v3774 = vpop.f32.mrf.mxu0
      %v3775 = vadd.f32 0.0, %v3774
      %v3776 = vpop.f32.mrf.mxu0
      %v3777 = vpop.f32.mrf.mxu0
      %v3778 = vadd.f32 0.0, %v3777
      %v3779 = vpop.f32.mrf.mxu0
      %3780 = vmatprep.mubr.bf16.mxu0 0
      %3781 = vmatmul.mubr.bf16.gmra.mxu0 %v3640
      %v3782 = vpop.f32.mrf.mxu0
      %v3783 = vadd.f32 0.0, %v3782
      %v3784 = vpop.f32.mrf.mxu0
      %v3785 = vpop.f32.mrf.mxu0
      %v3786 = vadd.f32 0.0, %v3785
      %v3787 = vpop.f32.mrf.mxu0
      %3788 = vmatprep.mubr.bf16.mxu0 0
      %3789 = vmatmul.mubr.bf16.gmra.mxu0 %v3641
      %v3790 = vpop.f32.mrf.mxu0
      %v3791 = vadd.f32 0.0, %v3790
      %v3792 = vpop.f32.mrf.mxu0
      %v3793 = vpop.f32.mrf.mxu0
      %v3794 = vadd.f32 0.0, %v3793
      %v3795 = vpop.f32.mrf.mxu0
      %3796 = vmatprep.mubr.bf16.mxu0 0
      %3797 = vmatmul.mubr.bf16.gmra.mxu0 %v3642
      %v3798 = vpop.f32.mrf.mxu0
      %v3799 = vadd.f32 0.0, %v3798
      %v3800 = vpop.f32.mrf.mxu0
      %v3801 = vpop.f32.mrf.mxu0
      %v3802 = vadd.f32 0.0, %v3801
      %v3803 = vpop.f32.mrf.mxu0
      %3804 = vmatprep.mubr.bf16.mxu0 0
      %3805 = vmatmul.mubr.bf16.gmra.mxu0 %v3643
      %v3806 = vpop.f32.mrf.mxu0
      %v3807 = vadd.f32 0.0, %v3806
      %v3808 = vpop.f32.mrf.mxu0
      %v3809 = vpop.f32.mrf.mxu0
      %v3810 = vadd.f32 0.0, %v3809
      %v3811 = vpop.f32.mrf.mxu0
      %3812 = vmatprep.mubr.bf16.mxu0 0
      %3813 = vmatmul.mubr.bf16.gmra.mxu0 %v3644
      %v3814 = vpop.f32.mrf.mxu0
      %v3815 = vadd.f32 0.0, %v3814
      %v3816 = vpop.f32.mrf.mxu0
      %v3817 = vpop.f32.mrf.mxu0
      %v3818 = vadd.f32 0.0, %v3817
      %v3819 = vpop.f32.mrf.mxu0
      %3820 = vmatprep.mubr.bf16.mxu0 0
      %3821 = vmatmul.mubr.bf16.gmra.mxu0 %v3645
      %v3822 = vpop.f32.mrf.mxu0
      %v3823 = vadd.f32 0.0, %v3822
      %v3824 = vpop.f32.mrf.mxu0
      %v3825 = vpop.f32.mrf.mxu0
      %v3826 = vadd.f32 0.0, %v3825
      %v3827 = vpop.f32.mrf.mxu0
      %3828 = vmatprep.mubr.bf16.mxu0 0
      %3829 = vmatmul.mubr.bf16.gmra.mxu0 %v3646
      %v3830 = vpop.f32.mrf.mxu0
      %v3831 = vadd.f32 0.0, %v3830
      %v3832 = vpop.f32.mrf.mxu0
      %v3833 = vpop.f32.mrf.mxu0
      %v3834 = vadd.f32 0.0, %v3833
      %v3835 = vpop.f32.mrf.mxu0
      %3836 = vmatprep.mubr.bf16.mxu0 0
      %3837 = vmatmul.mubr.bf16.gmra.mxu0 %v3647
      %v3838 = vpop.f32.mrf.mxu0
      %v3839 = vadd.f32 0.0, %v3838
      %v3840 = vpop.f32.mrf.mxu0
      %v3841 = vpop.f32.mrf.mxu0
      %v3842 = vadd.f32 0.0, %v3841
      %v3843 = vpop.f32.mrf.mxu0
      %3844 = vmatprep.mubr.bf16.mxu0 0
      %3845 = vmatmul.mubr.bf16.gmra.mxu0 %v3648
      %v3846 = vpop.f32.mrf.mxu0
      %v3847 = vadd.f32 0.0, %v3846
      %v3848 = vpop.f32.mrf.mxu0
      %v3849 = vpop.f32.mrf.mxu0
      %v3850 = vadd.f32 0.0, %v3849
      %v3851 = vpop.f32.mrf.mxu0
      %3852 = vmatprep.mubr.bf16.mxu0 0
      %3853 = vmatmul.mubr.bf16.gmra.mxu0 %v3649
      %v3854 = vpop.f32.mrf.mxu0
      %v3855 = vadd.f32 0.0, %v3854
      %v3856 = vpop.f32.mrf.mxu0
      %v3857 = vpop.f32.mrf.mxu0
      %v3858 = vadd.f32 0.0, %v3857
      %v3859 = vpop.f32.mrf.mxu0
      %3860 = vmatprep.mubr.bf16.mxu0 0
      %3861 = vmatmul.mubr.bf16.gmra.mxu0 %v3650
      %v3862 = vpop.f32.mrf.mxu0
      %v3863 = vadd.f32 0.0, %v3862
      %v3864 = vpop.f32.mrf.mxu0
      %v3865 = vpop.f32.mrf.mxu0
      %v3866 = vadd.f32 0.0, %v3865
      %v3867 = vpop.f32.mrf.mxu0
      %3868 = vmatprep.mubr.bf16.mxu0 0
      %3869 = vmatmul.mubr.bf16.gmra.mxu0 %v3651
      %v3870 = vpop.f32.mrf.mxu0
      %v3871 = vadd.f32 0.0, %v3870
      %v3872 = vpop.f32.mrf.mxu0
      %v3873 = vpop.f32.mrf.mxu0
      %v3874 = vadd.f32 0.0, %v3873
      %v3875 = vpop.f32.mrf.mxu0
      %3876 = vdwg.mxu0
      %v3877 = vadd.f32 %v3492, %v3751
      %v3878 = vadd.f32 %v3493, %v3754
      %v3879 = vadd.f32 %v3494, %v3759
      %v3880 = vadd.f32 %v3495, %v3762
      %v3881 = vadd.f32 %v3496, %v3767
      %v3882 = vadd.f32 %v3497, %v3770
      %v3883 = vadd.f32 %v3498, %v3775
      %v3884 = vadd.f32 %v3499, %v3778
      %v3885 = vadd.f32 %v3500, %v3783
      %v3886 = vadd.f32 %v3501, %v3786
      %v3887 = vadd.f32 %v3502, %v3791
      %v3888 = vadd.f32 %v3503, %v3794
      %v3889 = vadd.f32 %v3504, %v3799
      %v3890 = vadd.f32 %v3505, %v3802
      %v3891 = vadd.f32 %v3506, %v3807
      %v3892 = vadd.f32 %v3507, %v3810
      %v3893 = vadd.f32 %v3508, %v3815
      %v3894 = vadd.f32 %v3509, %v3818
      %v3895 = vadd.f32 %v3510, %v3823
      %v3896 = vadd.f32 %v3511, %v3826
      %v3897 = vadd.f32 %v3512, %v3831
      %v3898 = vadd.f32 %v3513, %v3834
      %v3899 = vadd.f32 %v3514, %v3839
      %v3900 = vadd.f32 %v3515, %v3842
      %v3901 = vadd.f32 %v3516, %v3847
      %v3902 = vadd.f32 %v3517, %v3850
      %v3903 = vadd.f32 %v3518, %v3855
      %v3904 = vadd.f32 %v3519, %v3858
      %v3905 = vadd.f32 %v3520, %v3863
      %v3906 = vadd.f32 %v3521, %v3866
      %v3907 = vadd.f32 %v3522, %v3871
      %v3908 = vadd.f32 %v3523, %v3874
      %s3909 = scalar_lea.vmem [#allocation2], 16
      %v3910 = vld [vmem:[%s3909] sm:$0xf]
      %v3911 = vld [vmem:[%s3909 + $0x4] sm:$0xf]
      %v3912 = vld [vmem:[%s3909 + $0x8] sm:$0xf]
      %v3913 = vld [vmem:[%s3909 + $0xc] sm:$0xf]
      %v3914 = vld [vmem:[%s3909 + $0x10] sm:$0xf]
      %v3915 = vld [vmem:[%s3909 + $0x14] sm:$0xf]
      %v3916 = vld [vmem:[%s3909 + $0x18] sm:$0xf]
      %v3917 = vld [vmem:[%s3909 + $0x1c] sm:$0xf]
      %v3918 = vld [vmem:[%s3909 + $0x20] sm:$0xf]
      %v3919 = vld [vmem:[%s3909 + $0x24] sm:$0xf]
      %v3920 = vld [vmem:[%s3909 + $0x28] sm:$0xf]
      %v3921 = vld [vmem:[%s3909 + $0x2c] sm:$0xf]
      %v3922 = vld [vmem:[%s3909 + $0x30] sm:$0xf]
      %v3923 = vld [vmem:[%s3909 + $0x34] sm:$0xf]
      %v3924 = vld [vmem:[%s3909 + $0x38] sm:$0xf]
      %v3925 = vld [vmem:[%s3909 + $0x3c] sm:$0xf]
      %v3926 = vld [vmem:[%s3909 + $0x40] sm:$0xf]
      %v3927 = vld [vmem:[%s3909 + $0x44] sm:$0xf]
      %v3928 = vld [vmem:[%s3909 + $0x48] sm:$0xf]
      %v3929 = vld [vmem:[%s3909 + $0x4c] sm:$0xf]
      %v3930 = vld [vmem:[%s3909 + $0x50] sm:$0xf]
      %v3931 = vld [vmem:[%s3909 + $0x54] sm:$0xf]
      %v3932 = vld [vmem:[%s3909 + $0x58] sm:$0xf]
      %v3933 = vld [vmem:[%s3909 + $0x5c] sm:$0xf]
      %v3934 = vld [vmem:[%s3909 + $0x60] sm:$0xf]
      %v3935 = vld [vmem:[%s3909 + $0x64] sm:$0xf]
      %v3936 = vld [vmem:[%s3909 + $0x68] sm:$0xf]
      %v3937 = vld [vmem:[%s3909 + $0x6c] sm:$0xf]
      %v3938 = vld [vmem:[%s3909 + $0x70] sm:$0xf]
      %v3939 = vld [vmem:[%s3909 + $0x74] sm:$0xf]
      %v3940 = vld [vmem:[%s3909 + $0x78] sm:$0xf]
      %v3941 = vld [vmem:[%s3909 + $0x7c] sm:$0xf]
      %v3942 = vld [vmem:[%s2 + $0x180] sm:$0xf]
      %v3943 = vld [vmem:[%s2 + $0x184] sm:$0xf]
      %v3944 = vld [vmem:[%s2 + $0x188] sm:$0xf]
      %v3945 = vld [vmem:[%s2 + $0x18c] sm:$0xf]
      %v3946 = vld [vmem:[%s2 + $0x190] sm:$0xf]
      %v3947 = vld [vmem:[%s2 + $0x194] sm:$0xf]
      %v3948 = vld [vmem:[%s2 + $0x198] sm:$0xf]
      %v3949 = vld [vmem:[%s2 + $0x19c] sm:$0xf]
      %v3950 = vld [vmem:[%s2 + $0x1a0] sm:$0xf]
      %v3951 = vld [vmem:[%s2 + $0x1a4] sm:$0xf]
      %v3952 = vld [vmem:[%s2 + $0x1a8] sm:$0xf]
      %v3953 = vld [vmem:[%s2 + $0x1ac] sm:$0xf]
      %v3954 = vld [vmem:[%s2 + $0x1b0] sm:$0xf]
      %v3955 = vld [vmem:[%s2 + $0x1b4] sm:$0xf]
      %v3956 = vld [vmem:[%s2 + $0x1b8] sm:$0xf]
      %v3957 = vld [vmem:[%s2 + $0x1bc] sm:$0xf]
      %v3990 = vunpack.c.l.b16 %v3910
      %v3991 = vunpack.c.l.b16 %v3911
      %v3992 = vunpack.c.l.b16 %v3912
      %v3993 = vunpack.c.l.b16 %v3913
      %v3994 = vunpack.c.l.b16 %v3914
      %v3995 = vunpack.c.l.b16 %v3915
      %v3996 = vunpack.c.l.b16 %v3916
      %v3997 = vunpack.c.l.b16 %v3917
      %v3998 = vunpack.c.l.b16 %v3918
      %v3999 = vunpack.c.l.b16 %v3919
      %v4000 = vunpack.c.l.b16 %v3920
      %v4001 = vunpack.c.l.b16 %v3921
      %v4002 = vunpack.c.l.b16 %v3922
      %v4003 = vunpack.c.l.b16 %v3923
      %v4004 = vunpack.c.l.b16 %v3924
      %v4005 = vunpack.c.l.b16 %v3925
      %v4006 = vunpack.c.l.b16 %v3926
      %v4007 = vunpack.c.l.b16 %v3927
      %v4008 = vunpack.c.l.b16 %v3928
      %v4009 = vunpack.c.l.b16 %v3929
      %v4010 = vunpack.c.l.b16 %v3930
      %v4011 = vunpack.c.l.b16 %v3931
      %v4012 = vunpack.c.l.b16 %v3932
      %v4013 = vunpack.c.l.b16 %v3933
      %v4014 = vunpack.c.l.b16 %v3934
      %v4015 = vunpack.c.l.b16 %v3935
      %v4016 = vunpack.c.l.b16 %v3936
      %v4017 = vunpack.c.l.b16 %v3937
      %v4018 = vunpack.c.l.b16 %v3938
      %v4019 = vunpack.c.l.b16 %v3939
      %v4020 = vunpack.c.l.b16 %v3940
      %v4021 = vunpack.c.l.b16 %v3941
      %v4022 = vpack.c.b16 %v3991, %v3990
      %v4023 = vpack.c.b16 %v3993, %v3992
      %v4024 = vpack.c.b16 %v3995, %v3994
      %v4025 = vpack.c.b16 %v3997, %v3996
      %v4026 = vpack.c.b16 %v3999, %v3998
      %v4027 = vpack.c.b16 %v4001, %v4000
      %v4028 = vpack.c.b16 %v4003, %v4002
      %v4029 = vpack.c.b16 %v4005, %v4004
      %v4030 = vpack.c.b16 %v4007, %v4006
      %v4031 = vpack.c.b16 %v4009, %v4008
      %v4032 = vpack.c.b16 %v4011, %v4010
      %v4033 = vpack.c.b16 %v4013, %v4012
      %v4034 = vpack.c.b16 %v4015, %v4014
      %v4035 = vpack.c.b16 %v4017, %v4016
      %v4036 = vpack.c.b16 %v4019, %v4018
      %v4037 = vpack.c.b16 %v4021, %v4020
      %v4070 = vunpack.c.l.b16 %v3942
      %v4071 = vunpack.c.l.b16 %v3943
      %v4072 = vunpack.c.l.b16 %v3944
      %v4073 = vunpack.c.l.b16 %v3945
      %v4074 = vunpack.c.l.b16 %v3946
      %v4075 = vunpack.c.l.b16 %v3947
      %v4076 = vunpack.c.l.b16 %v3948
      %v4077 = vunpack.c.l.b16 %v3949
      %v4078 = vunpack.c.l.b16 %v3950
      %v4079 = vunpack.c.l.b16 %v3951
      %v4080 = vunpack.c.l.b16 %v3952
      %v4081 = vunpack.c.l.b16 %v3953
      %v4082 = vunpack.c.l.b16 %v3954
      %v4083 = vunpack.c.l.b16 %v3955
      %v4084 = vunpack.c.l.b16 %v3956
      %v4085 = vunpack.c.l.b16 %v3957
      %v4086 = vpack.c.b16 %v4071, %v4070
      %v4087 = vpack.c.b16 %v4073, %v4072
      %v4088 = vpack.c.b16 %v4075, %v4074
      %v4089 = vpack.c.b16 %v4077, %v4076
      %v4090 = vpack.c.b16 %v4079, %v4078
      %v4091 = vpack.c.b16 %v4081, %v4080
      %v4092 = vpack.c.b16 %v4083, %v4082
      %v4093 = vpack.c.b16 %v4085, %v4084
      %4102 = vmatprep.subr.bf16.mxu0 0
      %4103 = vmatpush1.bf16.msra.mxu0 %v4093
      %4104 = vmatprep.subr.bf16.mxu0 0
      %4105 = vmatpush1.bf16.msra.mxu0 %v4092
      %4106 = vmatprep.subr.bf16.mxu0 0
      %4107 = vmatpush1.bf16.msra.mxu0 %v4091
      %4108 = vmatprep.subr.bf16.mxu0 0
      %4109 = vmatpush1.bf16.msra.mxu0 %v4090
      %4110 = vmatprep.subr.bf16.mxu0 0
      %4111 = vmatpush1.bf16.msra.mxu0 %v4089
      %4112 = vmatprep.subr.bf16.mxu0 0
      %4113 = vmatpush1.bf16.msra.mxu0 %v4088
      %4114 = vmatprep.subr.bf16.mxu0 0
      %4115 = vmatpush1.bf16.msra.mxu0 %v4087
      %4116 = vmatprep.subr.bf16.mxu0 0
      %4117 = vmatpush1.bf16.msra.mxu0 %v4086
      %4118 = vmatprep.subr.bf16.mxu0 0
      %4119 = vmatpush2.bf16.msra.mxu0 0
      %4120 = vmatprep.subr.bf16.mxu0 0
      %4121 = vmatpush2.bf16.msra.mxu0 0
      %4122 = vmatprep.subr.bf16.mxu0 0
      %4123 = vmatpush2.bf16.msra.mxu0 0
      %4124 = vmatprep.subr.bf16.mxu0 0
      %4125 = vmatpush2.bf16.msra.mxu0 0
      %4126 = vmatprep.subr.bf16.mxu0 0
      %4127 = vmatpush2.bf16.msra.mxu0 0
      %4128 = vmatprep.subr.bf16.mxu0 0
      %4129 = vmatpush2.bf16.msra.mxu0 0
      %4130 = vmatprep.subr.bf16.mxu0 0
      %4131 = vmatpush2.bf16.msra.mxu0 0
      %4132 = vmatprep.subr.bf16.mxu0 0
      %4133 = vmatpush2.bf16.msra.mxu0 0
      %4134 = vmatprep.mubr.bf16.mxu0 0
      %4135 = vmatmul.mubr.bf16.gmra.mxu0 %v4022
      %v4136 = vpop.f32.mrf.mxu0
      %v4137 = vadd.f32 0.0, %v4136
      %v4138 = vpop.f32.mrf.mxu0
      %v4139 = vpop.f32.mrf.mxu0
      %v4140 = vadd.f32 0.0, %v4139
      %v4141 = vpop.f32.mrf.mxu0
      %4142 = vmatprep.mubr.bf16.mxu0 0
      %4143 = vmatmul.mubr.bf16.gmra.mxu0 %v4023
      %v4144 = vpop.f32.mrf.mxu0
      %v4145 = vadd.f32 0.0, %v4144
      %v4146 = vpop.f32.mrf.mxu0
      %v4147 = vpop.f32.mrf.mxu0
      %v4148 = vadd.f32 0.0, %v4147
      %v4149 = vpop.f32.mrf.mxu0
      %4150 = vmatprep.mubr.bf16.mxu0 0
      %4151 = vmatmul.mubr.bf16.gmra.mxu0 %v4024
      %v4152 = vpop.f32.mrf.mxu0
      %v4153 = vadd.f32 0.0, %v4152
      %v4154 = vpop.f32.mrf.mxu0
      %v4155 = vpop.f32.mrf.mxu0
      %v4156 = vadd.f32 0.0, %v4155
      %v4157 = vpop.f32.mrf.mxu0
      %4158 = vmatprep.mubr.bf16.mxu0 0
      %4159 = vmatmul.mubr.bf16.gmra.mxu0 %v4025
      %v4160 = vpop.f32.mrf.mxu0
      %v4161 = vadd.f32 0.0, %v4160
      %v4162 = vpop.f32.mrf.mxu0
      %v4163 = vpop.f32.mrf.mxu0
      %v4164 = vadd.f32 0.0, %v4163
      %v4165 = vpop.f32.mrf.mxu0
      %4166 = vmatprep.mubr.bf16.mxu0 0
      %4167 = vmatmul.mubr.bf16.gmra.mxu0 %v4026
      %v4168 = vpop.f32.mrf.mxu0
      %v4169 = vadd.f32 0.0, %v4168
      %v4170 = vpop.f32.mrf.mxu0
      %v4171 = vpop.f32.mrf.mxu0
      %v4172 = vadd.f32 0.0, %v4171
      %v4173 = vpop.f32.mrf.mxu0
      %4174 = vmatprep.mubr.bf16.mxu0 0
      %4175 = vmatmul.mubr.bf16.gmra.mxu0 %v4027
      %v4176 = vpop.f32.mrf.mxu0
      %v4177 = vadd.f32 0.0, %v4176
      %v4178 = vpop.f32.mrf.mxu0
      %v4179 = vpop.f32.mrf.mxu0
      %v4180 = vadd.f32 0.0, %v4179
      %v4181 = vpop.f32.mrf.mxu0
      %4182 = vmatprep.mubr.bf16.mxu0 0
      %4183 = vmatmul.mubr.bf16.gmra.mxu0 %v4028
      %v4184 = vpop.f32.mrf.mxu0
      %v4185 = vadd.f32 0.0, %v4184
      %v4186 = vpop.f32.mrf.mxu0
      %v4187 = vpop.f32.mrf.mxu0
      %v4188 = vadd.f32 0.0, %v4187
      %v4189 = vpop.f32.mrf.mxu0
      %4190 = vmatprep.mubr.bf16.mxu0 0
      %4191 = vmatmul.mubr.bf16.gmra.mxu0 %v4029
      %v4192 = vpop.f32.mrf.mxu0
      %v4193 = vadd.f32 0.0, %v4192
      %v4194 = vpop.f32.mrf.mxu0
      %v4195 = vpop.f32.mrf.mxu0
      %v4196 = vadd.f32 0.0, %v4195
      %v4197 = vpop.f32.mrf.mxu0
      %4198 = vmatprep.mubr.bf16.mxu0 0
      %4199 = vmatmul.mubr.bf16.gmra.mxu0 %v4030
      %v4200 = vpop.f32.mrf.mxu0
      %v4201 = vadd.f32 0.0, %v4200
      %v4202 = vpop.f32.mrf.mxu0
      %v4203 = vpop.f32.mrf.mxu0
      %v4204 = vadd.f32 0.0, %v4203
      %v4205 = vpop.f32.mrf.mxu0
      %4206 = vmatprep.mubr.bf16.mxu0 0
      %4207 = vmatmul.mubr.bf16.gmra.mxu0 %v4031
      %v4208 = vpop.f32.mrf.mxu0
      %v4209 = vadd.f32 0.0, %v4208
      %v4210 = vpop.f32.mrf.mxu0
      %v4211 = vpop.f32.mrf.mxu0
      %v4212 = vadd.f32 0.0, %v4211
      %v4213 = vpop.f32.mrf.mxu0
      %4214 = vmatprep.mubr.bf16.mxu0 0
      %4215 = vmatmul.mubr.bf16.gmra.mxu0 %v4032
      %v4216 = vpop.f32.mrf.mxu0
      %v4217 = vadd.f32 0.0, %v4216
      %v4218 = vpop.f32.mrf.mxu0
      %v4219 = vpop.f32.mrf.mxu0
      %v4220 = vadd.f32 0.0, %v4219
      %v4221 = vpop.f32.mrf.mxu0
      %4222 = vmatprep.mubr.bf16.mxu0 0
      %4223 = vmatmul.mubr.bf16.gmra.mxu0 %v4033
      %v4224 = vpop.f32.mrf.mxu0
      %v4225 = vadd.f32 0.0, %v4224
      %v4226 = vpop.f32.mrf.mxu0
      %v4227 = vpop.f32.mrf.mxu0
      %v4228 = vadd.f32 0.0, %v4227
      %v4229 = vpop.f32.mrf.mxu0
      %4230 = vmatprep.mubr.bf16.mxu0 0
      %4231 = vmatmul.mubr.bf16.gmra.mxu0 %v4034
      %v4232 = vpop.f32.mrf.mxu0
      %v4233 = vadd.f32 0.0, %v4232
      %v4234 = vpop.f32.mrf.mxu0
      %v4235 = vpop.f32.mrf.mxu0
      %v4236 = vadd.f32 0.0, %v4235
      %v4237 = vpop.f32.mrf.mxu0
      %4238 = vmatprep.mubr.bf16.mxu0 0
      %4239 = vmatmul.mubr.bf16.gmra.mxu0 %v4035
      %v4240 = vpop.f32.mrf.mxu0
      %v4241 = vadd.f32 0.0, %v4240
      %v4242 = vpop.f32.mrf.mxu0
      %v4243 = vpop.f32.mrf.mxu0
      %v4244 = vadd.f32 0.0, %v4243
      %v4245 = vpop.f32.mrf.mxu0
      %4246 = vmatprep.mubr.bf16.mxu0 0
      %4247 = vmatmul.mubr.bf16.gmra.mxu0 %v4036
      %v4248 = vpop.f32.mrf.mxu0
      %v4249 = vadd.f32 0.0, %v4248
      %v4250 = vpop.f32.mrf.mxu0
      %v4251 = vpop.f32.mrf.mxu0
      %v4252 = vadd.f32 0.0, %v4251
      %v4253 = vpop.f32.mrf.mxu0
      %4254 = vmatprep.mubr.bf16.mxu0 0
      %4255 = vmatmul.mubr.bf16.gmra.mxu0 %v4037
      %v4256 = vpop.f32.mrf.mxu0
      %v4257 = vadd.f32 0.0, %v4256
      %v4258 = vpop.f32.mrf.mxu0
      %v4259 = vpop.f32.mrf.mxu0
      %v4260 = vadd.f32 0.0, %v4259
      %v4261 = vpop.f32.mrf.mxu0
      %4262 = vdwg.mxu0
      %v4263 = vadd.f32 %v3877, %v4137
      %v4264 = vadd.f32 %v3878, %v4140
      %v4265 = vadd.f32 %v3879, %v4145
      %v4266 = vadd.f32 %v3880, %v4148
      %v4267 = vadd.f32 %v3881, %v4153
      %v4268 = vadd.f32 %v3882, %v4156
      %v4269 = vadd.f32 %v3883, %v4161
      %v4270 = vadd.f32 %v3884, %v4164
      %v4271 = vadd.f32 %v3885, %v4169
      %v4272 = vadd.f32 %v3886, %v4172
      %v4273 = vadd.f32 %v3887, %v4177
      %v4274 = vadd.f32 %v3888, %v4180
      %v4275 = vadd.f32 %v3889, %v4185
      %v4276 = vadd.f32 %v3890, %v4188
      %v4277 = vadd.f32 %v3891, %v4193
      %v4278 = vadd.f32 %v3892, %v4196
      %v4279 = vadd.f32 %v3893, %v4201
      %v4280 = vadd.f32 %v3894, %v4204
      %v4281 = vadd.f32 %v3895, %v4209
      %v4282 = vadd.f32 %v3896, %v4212
      %v4283 = vadd.f32 %v3897, %v4217
      %v4284 = vadd.f32 %v3898, %v4220
      %v4285 = vadd.f32 %v3899, %v4225
      %v4286 = vadd.f32 %v3900, %v4228
      %v4287 = vadd.f32 %v3901, %v4233
      %v4288 = vadd.f32 %v3902, %v4236
      %v4289 = vadd.f32 %v3903, %v4241
      %v4290 = vadd.f32 %v3904, %v4244
      %v4291 = vadd.f32 %v3905, %v4249
      %v4292 = vadd.f32 %v3906, %v4252
      %v4293 = vadd.f32 %v3907, %v4257
      %v4294 = vadd.f32 %v3908, %v4260
      %s4295 = scalar_lea.vmem [#allocation2], 160
      %v4296 = vld [vmem:[%s4295] sm:$0xf]
      %v4297 = vld [vmem:[%s4295 + $0x4] sm:$0xf]
      %v4298 = vld [vmem:[%s4295 + $0x8] sm:$0xf]
      %v4299 = vld [vmem:[%s4295 + $0xc] sm:$0xf]
      %v4300 = vld [vmem:[%s4295 + $0x10] sm:$0xf]
      %v4301 = vld [vmem:[%s4295 + $0x14] sm:$0xf]
      %v4302 = vld [vmem:[%s4295 + $0x18] sm:$0xf]
      %v4303 = vld [vmem:[%s4295 + $0x1c] sm:$0xf]
      %v4304 = vld [vmem:[%s4295 + $0x20] sm:$0xf]
      %v4305 = vld [vmem:[%s4295 + $0x24] sm:$0xf]
      %v4306 = vld [vmem:[%s4295 + $0x28] sm:$0xf]
      %v4307 = vld [vmem:[%s4295 + $0x2c] sm:$0xf]
      %v4308 = vld [vmem:[%s4295 + $0x30] sm:$0xf]
      %v4309 = vld [vmem:[%s4295 + $0x34] sm:$0xf]
      %v4310 = vld [vmem:[%s4295 + $0x38] sm:$0xf]
      %v4311 = vld [vmem:[%s4295 + $0x3c] sm:$0xf]
      %v4312 = vld [vmem:[%s4295 + $0x40] sm:$0xf]
      %v4313 = vld [vmem:[%s4295 + $0x44] sm:$0xf]
      %v4314 = vld [vmem:[%s4295 + $0x48] sm:$0xf]
      %v4315 = vld [vmem:[%s4295 + $0x4c] sm:$0xf]
      %v4316 = vld [vmem:[%s4295 + $0x50] sm:$0xf]
      %v4317 = vld [vmem:[%s4295 + $0x54] sm:$0xf]
      %v4318 = vld [vmem:[%s4295 + $0x58] sm:$0xf]
      %v4319 = vld [vmem:[%s4295 + $0x5c] sm:$0xf]
      %v4320 = vld [vmem:[%s4295 + $0x60] sm:$0xf]
      %v4321 = vld [vmem:[%s4295 + $0x64] sm:$0xf]
      %v4322 = vld [vmem:[%s4295 + $0x68] sm:$0xf]
      %v4323 = vld [vmem:[%s4295 + $0x6c] sm:$0xf]
      %v4324 = vld [vmem:[%s4295 + $0x70] sm:$0xf]
      %v4325 = vld [vmem:[%s4295 + $0x74] sm:$0xf]
      %v4326 = vld [vmem:[%s4295 + $0x78] sm:$0xf]
      %v4327 = vld [vmem:[%s4295 + $0x7c] sm:$0xf]
      %v4328 = vld [vmem:[%s2 + $0x1c0] sm:$0xf]
      %v4329 = vld [vmem:[%s2 + $0x1c4] sm:$0xf]
      %v4330 = vld [vmem:[%s2 + $0x1c8] sm:$0xf]
      %v4331 = vld [vmem:[%s2 + $0x1cc] sm:$0xf]
      %v4332 = vld [vmem:[%s2 + $0x1d0] sm:$0xf]
      %v4333 = vld [vmem:[%s2 + $0x1d4] sm:$0xf]
      %v4334 = vld [vmem:[%s2 + $0x1d8] sm:$0xf]
      %v4335 = vld [vmem:[%s2 + $0x1dc] sm:$0xf]
      %v4336 = vld [vmem:[%s2 + $0x1e0] sm:$0xf]
      %v4337 = vld [vmem:[%s2 + $0x1e4] sm:$0xf]
      %v4338 = vld [vmem:[%s2 + $0x1e8] sm:$0xf]
      %v4339 = vld [vmem:[%s2 + $0x1ec] sm:$0xf]
      %v4340 = vld [vmem:[%s2 + $0x1f0] sm:$0xf]
      %v4341 = vld [vmem:[%s2 + $0x1f4] sm:$0xf]
      %v4342 = vld [vmem:[%s2 + $0x1f8] sm:$0xf]
      %v4343 = vld [vmem:[%s2 + $0x1fc] sm:$0xf]
      %v4376 = vunpack.c.l.b16 %v4296
      %v4377 = vunpack.c.l.b16 %v4297
      %v4378 = vunpack.c.l.b16 %v4298
      %v4379 = vunpack.c.l.b16 %v4299
      %v4380 = vunpack.c.l.b16 %v4300
      %v4381 = vunpack.c.l.b16 %v4301
      %v4382 = vunpack.c.l.b16 %v4302
      %v4383 = vunpack.c.l.b16 %v4303
      %v4384 = vunpack.c.l.b16 %v4304
      %v4385 = vunpack.c.l.b16 %v4305
      %v4386 = vunpack.c.l.b16 %v4306
      %v4387 = vunpack.c.l.b16 %v4307
      %v4388 = vunpack.c.l.b16 %v4308
      %v4389 = vunpack.c.l.b16 %v4309
      %v4390 = vunpack.c.l.b16 %v4310
      %v4391 = vunpack.c.l.b16 %v4311
      %v4392 = vunpack.c.l.b16 %v4312
      %v4393 = vunpack.c.l.b16 %v4313
      %v4394 = vunpack.c.l.b16 %v4314
      %v4395 = vunpack.c.l.b16 %v4315
      %v4396 = vunpack.c.l.b16 %v4316
      %v4397 = vunpack.c.l.b16 %v4317
      %v4398 = vunpack.c.l.b16 %v4318
      %v4399 = vunpack.c.l.b16 %v4319
      %v4400 = vunpack.c.l.b16 %v4320
      %v4401 = vunpack.c.l.b16 %v4321
      %v4402 = vunpack.c.l.b16 %v4322
      %v4403 = vunpack.c.l.b16 %v4323
      %v4404 = vunpack.c.l.b16 %v4324
      %v4405 = vunpack.c.l.b16 %v4325
      %v4406 = vunpack.c.l.b16 %v4326
      %v4407 = vunpack.c.l.b16 %v4327
      %v4408 = vpack.c.b16 %v4377, %v4376
      %v4409 = vpack.c.b16 %v4379, %v4378
      %v4410 = vpack.c.b16 %v4381, %v4380
      %v4411 = vpack.c.b16 %v4383, %v4382
      %v4412 = vpack.c.b16 %v4385, %v4384
      %v4413 = vpack.c.b16 %v4387, %v4386
      %v4414 = vpack.c.b16 %v4389, %v4388
      %v4415 = vpack.c.b16 %v4391, %v4390
      %v4416 = vpack.c.b16 %v4393, %v4392
      %v4417 = vpack.c.b16 %v4395, %v4394
      %v4418 = vpack.c.b16 %v4397, %v4396
      %v4419 = vpack.c.b16 %v4399, %v4398
      %v4420 = vpack.c.b16 %v4401, %v4400
      %v4421 = vpack.c.b16 %v4403, %v4402
      %v4422 = vpack.c.b16 %v4405, %v4404
      %v4423 = vpack.c.b16 %v4407, %v4406
      %v4456 = vunpack.c.l.b16 %v4328
      %v4457 = vunpack.c.l.b16 %v4329
      %v4458 = vunpack.c.l.b16 %v4330
      %v4459 = vunpack.c.l.b16 %v4331
      %v4460 = vunpack.c.l.b16 %v4332
      %v4461 = vunpack.c.l.b16 %v4333
      %v4462 = vunpack.c.l.b16 %v4334
      %v4463 = vunpack.c.l.b16 %v4335
      %v4464 = vunpack.c.l.b16 %v4336
      %v4465 = vunpack.c.l.b16 %v4337
      %v4466 = vunpack.c.l.b16 %v4338
      %v4467 = vunpack.c.l.b16 %v4339
      %v4468 = vunpack.c.l.b16 %v4340
      %v4469 = vunpack.c.l.b16 %v4341
      %v4470 = vunpack.c.l.b16 %v4342
      %v4471 = vunpack.c.l.b16 %v4343
      %v4472 = vpack.c.b16 %v4457, %v4456
      %v4473 = vpack.c.b16 %v4459, %v4458
      %v4474 = vpack.c.b16 %v4461, %v4460
      %v4475 = vpack.c.b16 %v4463, %v4462
      %v4476 = vpack.c.b16 %v4465, %v4464
      %v4477 = vpack.c.b16 %v4467, %v4466
      %v4478 = vpack.c.b16 %v4469, %v4468
      %v4479 = vpack.c.b16 %v4471, %v4470
      %4488 = vmatprep.subr.bf16.mxu0 0
      %4489 = vmatpush1.bf16.msra.mxu0 %v4479
      %4490 = vmatprep.subr.bf16.mxu0 0
      %4491 = vmatpush1.bf16.msra.mxu0 %v4478
      %4492 = vmatprep.subr.bf16.mxu0 0
      %4493 = vmatpush1.bf16.msra.mxu0 %v4477
      %4494 = vmatprep.subr.bf16.mxu0 0
      %4495 = vmatpush1.bf16.msra.mxu0 %v4476
      %4496 = vmatprep.subr.bf16.mxu0 0
      %4497 = vmatpush1.bf16.msra.mxu0 %v4475
      %4498 = vmatprep.subr.bf16.mxu0 0
      %4499 = vmatpush1.bf16.msra.mxu0 %v4474
      %4500 = vmatprep.subr.bf16.mxu0 0
      %4501 = vmatpush1.bf16.msra.mxu0 %v4473
      %4502 = vmatprep.subr.bf16.mxu0 0
      %4503 = vmatpush1.bf16.msra.mxu0 %v4472
      %4504 = vmatprep.subr.bf16.mxu0 0
      %4505 = vmatpush2.bf16.msra.mxu0 0
      %4506 = vmatprep.subr.bf16.mxu0 0
      %4507 = vmatpush2.bf16.msra.mxu0 0
      %4508 = vmatprep.subr.bf16.mxu0 0
      %4509 = vmatpush2.bf16.msra.mxu0 0
      %4510 = vmatprep.subr.bf16.mxu0 0
      %4511 = vmatpush2.bf16.msra.mxu0 0
      %4512 = vmatprep.subr.bf16.mxu0 0
      %4513 = vmatpush2.bf16.msra.mxu0 0
      %4514 = vmatprep.subr.bf16.mxu0 0
      %4515 = vmatpush2.bf16.msra.mxu0 0
      %4516 = vmatprep.subr.bf16.mxu0 0
      %4517 = vmatpush2.bf16.msra.mxu0 0
      %4518 = vmatprep.subr.bf16.mxu0 0
      %4519 = vmatpush2.bf16.msra.mxu0 0
      %4520 = vmatprep.mubr.bf16.mxu0 0
      %4521 = vmatmul.mubr.bf16.gmra.mxu0 %v4408
      %v4522 = vpop.f32.mrf.mxu0
      %v4523 = vadd.f32 0.0, %v4522
      %v4524 = vpop.f32.mrf.mxu0
      %v4525 = vpop.f32.mrf.mxu0
      %v4526 = vadd.f32 0.0, %v4525
      %v4527 = vpop.f32.mrf.mxu0
      %4528 = vmatprep.mubr.bf16.mxu0 0
      %4529 = vmatmul.mubr.bf16.gmra.mxu0 %v4409
      %v4530 = vpop.f32.mrf.mxu0
      %v4531 = vadd.f32 0.0, %v4530
      %v4532 = vpop.f32.mrf.mxu0
      %v4533 = vpop.f32.mrf.mxu0
      %v4534 = vadd.f32 0.0, %v4533
      %v4535 = vpop.f32.mrf.mxu0
      %4536 = vmatprep.mubr.bf16.mxu0 0
      %4537 = vmatmul.mubr.bf16.gmra.mxu0 %v4410
      %v4538 = vpop.f32.mrf.mxu0
      %v4539 = vadd.f32 0.0, %v4538
      %v4540 = vpop.f32.mrf.mxu0
      %v4541 = vpop.f32.mrf.mxu0
      %v4542 = vadd.f32 0.0, %v4541
      %v4543 = vpop.f32.mrf.mxu0
      %4544 = vmatprep.mubr.bf16.mxu0 0
      %4545 = vmatmul.mubr.bf16.gmra.mxu0 %v4411
      %v4546 = vpop.f32.mrf.mxu0
      %v4547 = vadd.f32 0.0, %v4546
      %v4548 = vpop.f32.mrf.mxu0
      %v4549 = vpop.f32.mrf.mxu0
      %v4550 = vadd.f32 0.0, %v4549
      %v4551 = vpop.f32.mrf.mxu0
      %4552 = vmatprep.mubr.bf16.mxu0 0
      %4553 = vmatmul.mubr.bf16.gmra.mxu0 %v4412
      %v4554 = vpop.f32.mrf.mxu0
      %v4555 = vadd.f32 0.0, %v4554
      %v4556 = vpop.f32.mrf.mxu0
      %v4557 = vpop.f32.mrf.mxu0
      %v4558 = vadd.f32 0.0, %v4557
      %v4559 = vpop.f32.mrf.mxu0
      %4560 = vmatprep.mubr.bf16.mxu0 0
      %4561 = vmatmul.mubr.bf16.gmra.mxu0 %v4413
      %v4562 = vpop.f32.mrf.mxu0
      %v4563 = vadd.f32 0.0, %v4562
      %v4564 = vpop.f32.mrf.mxu0
      %v4565 = vpop.f32.mrf.mxu0
      %v4566 = vadd.f32 0.0, %v4565
      %v4567 = vpop.f32.mrf.mxu0
      %4568 = vmatprep.mubr.bf16.mxu0 0
      %4569 = vmatmul.mubr.bf16.gmra.mxu0 %v4414
      %v4570 = vpop.f32.mrf.mxu0
      %v4571 = vadd.f32 0.0, %v4570
      %v4572 = vpop.f32.mrf.mxu0
      %v4573 = vpop.f32.mrf.mxu0
      %v4574 = vadd.f32 0.0, %v4573
      %v4575 = vpop.f32.mrf.mxu0
      %4576 = vmatprep.mubr.bf16.mxu0 0
      %4577 = vmatmul.mubr.bf16.gmra.mxu0 %v4415
      %v4578 = vpop.f32.mrf.mxu0
      %v4579 = vadd.f32 0.0, %v4578
      %v4580 = vpop.f32.mrf.mxu0
      %v4581 = vpop.f32.mrf.mxu0
      %v4582 = vadd.f32 0.0, %v4581
      %v4583 = vpop.f32.mrf.mxu0
      %4584 = vmatprep.mubr.bf16.mxu0 0
      %4585 = vmatmul.mubr.bf16.gmra.mxu0 %v4416
      %v4586 = vpop.f32.mrf.mxu0
      %v4587 = vadd.f32 0.0, %v4586
      %v4588 = vpop.f32.mrf.mxu0
      %v4589 = vpop.f32.mrf.mxu0
      %v4590 = vadd.f32 0.0, %v4589
      %v4591 = vpop.f32.mrf.mxu0
      %4592 = vmatprep.mubr.bf16.mxu0 0
      %4593 = vmatmul.mubr.bf16.gmra.mxu0 %v4417
      %v4594 = vpop.f32.mrf.mxu0
      %v4595 = vadd.f32 0.0, %v4594
      %v4596 = vpop.f32.mrf.mxu0
      %v4597 = vpop.f32.mrf.mxu0
      %v4598 = vadd.f32 0.0, %v4597
      %v4599 = vpop.f32.mrf.mxu0
      %4600 = vmatprep.mubr.bf16.mxu0 0
      %4601 = vmatmul.mubr.bf16.gmra.mxu0 %v4418
      %v4602 = vpop.f32.mrf.mxu0
      %v4603 = vadd.f32 0.0, %v4602
      %v4604 = vpop.f32.mrf.mxu0
      %v4605 = vpop.f32.mrf.mxu0
      %v4606 = vadd.f32 0.0, %v4605
      %v4607 = vpop.f32.mrf.mxu0
      %4608 = vmatprep.mubr.bf16.mxu0 0
      %4609 = vmatmul.mubr.bf16.gmra.mxu0 %v4419
      %v4610 = vpop.f32.mrf.mxu0
      %v4611 = vadd.f32 0.0, %v4610
      %v4612 = vpop.f32.mrf.mxu0
      %v4613 = vpop.f32.mrf.mxu0
      %v4614 = vadd.f32 0.0, %v4613
      %v4615 = vpop.f32.mrf.mxu0
      %4616 = vmatprep.mubr.bf16.mxu0 0
      %4617 = vmatmul.mubr.bf16.gmra.mxu0 %v4420
      %v4618 = vpop.f32.mrf.mxu0
      %v4619 = vadd.f32 0.0, %v4618
      %v4620 = vpop.f32.mrf.mxu0
      %v4621 = vpop.f32.mrf.mxu0
      %v4622 = vadd.f32 0.0, %v4621
      %v4623 = vpop.f32.mrf.mxu0
      %4624 = vmatprep.mubr.bf16.mxu0 0
      %4625 = vmatmul.mubr.bf16.gmra.mxu0 %v4421
      %v4626 = vpop.f32.mrf.mxu0
      %v4627 = vadd.f32 0.0, %v4626
      %v4628 = vpop.f32.mrf.mxu0
      %v4629 = vpop.f32.mrf.mxu0
      %v4630 = vadd.f32 0.0, %v4629
      %v4631 = vpop.f32.mrf.mxu0
      %4632 = vmatprep.mubr.bf16.mxu0 0
      %4633 = vmatmul.mubr.bf16.gmra.mxu0 %v4422
      %v4634 = vpop.f32.mrf.mxu0
      %v4635 = vadd.f32 0.0, %v4634
      %v4636 = vpop.f32.mrf.mxu0
      %v4637 = vpop.f32.mrf.mxu0
      %v4638 = vadd.f32 0.0, %v4637
      %v4639 = vpop.f32.mrf.mxu0
      %4640 = vmatprep.mubr.bf16.mxu0 0
      %4641 = vmatmul.mubr.bf16.gmra.mxu0 %v4423
      %v4642 = vpop.f32.mrf.mxu0
      %v4643 = vadd.f32 0.0, %v4642
      %v4644 = vpop.f32.mrf.mxu0
      %v4645 = vpop.f32.mrf.mxu0
      %v4646 = vadd.f32 0.0, %v4645
      %v4647 = vpop.f32.mrf.mxu0
      %4648 = vdwg.mxu0
      %v4649 = vadd.f32 %v4263, %v4523
      %v4650 = vadd.f32 %v4264, %v4526
      %v4651 = vadd.f32 %v4265, %v4531
      %v4652 = vadd.f32 %v4266, %v4534
      %v4653 = vadd.f32 %v4267, %v4539
      %v4654 = vadd.f32 %v4268, %v4542
      %v4655 = vadd.f32 %v4269, %v4547
      %v4656 = vadd.f32 %v4270, %v4550
      %v4657 = vadd.f32 %v4271, %v4555
      %v4658 = vadd.f32 %v4272, %v4558
      %v4659 = vadd.f32 %v4273, %v4563
      %v4660 = vadd.f32 %v4274, %v4566
      %v4661 = vadd.f32 %v4275, %v4571
      %v4662 = vadd.f32 %v4276, %v4574
      %v4663 = vadd.f32 %v4277, %v4579
      %v4664 = vadd.f32 %v4278, %v4582
      %v4665 = vadd.f32 %v4279, %v4587
      %v4666 = vadd.f32 %v4280, %v4590
      %v4667 = vadd.f32 %v4281, %v4595
      %v4668 = vadd.f32 %v4282, %v4598
      %v4669 = vadd.f32 %v4283, %v4603
      %v4670 = vadd.f32 %v4284, %v4606
      %v4671 = vadd.f32 %v4285, %v4611
      %v4672 = vadd.f32 %v4286, %v4614
      %v4673 = vadd.f32 %v4287, %v4619
      %v4674 = vadd.f32 %v4288, %v4622
      %v4675 = vadd.f32 %v4289, %v4627
      %v4676 = vadd.f32 %v4290, %v4630
      %v4677 = vadd.f32 %v4291, %v4635
      %v4678 = vadd.f32 %v4292, %v4638
      %v4679 = vadd.f32 %v4293, %v4643
      %v4680 = vadd.f32 %v4294, %v4646
      %s4681 = scalar_lea.vmem [#allocation2], 304
      %v4682 = vld [vmem:[%s4681] sm:$0xf]
      %v4683 = vld [vmem:[%s4681 + $0x4] sm:$0xf]
      %v4684 = vld [vmem:[%s4681 + $0x8] sm:$0xf]
      %v4685 = vld [vmem:[%s4681 + $0xc] sm:$0xf]
      %v4686 = vld [vmem:[%s4681 + $0x10] sm:$0xf]
      %v4687 = vld [vmem:[%s4681 + $0x14] sm:$0xf]
      %v4688 = vld [vmem:[%s4681 + $0x18] sm:$0xf]
      %v4689 = vld [vmem:[%s4681 + $0x1c] sm:$0xf]
      %v4690 = vld [vmem:[%s4681 + $0x20] sm:$0xf]
      %v4691 = vld [vmem:[%s4681 + $0x24] sm:$0xf]
      %v4692 = vld [vmem:[%s4681 + $0x28] sm:$0xf]
      %v4693 = vld [vmem:[%s4681 + $0x2c] sm:$0xf]
      %v4694 = vld [vmem:[%s4681 + $0x30] sm:$0xf]
      %v4695 = vld [vmem:[%s4681 + $0x34] sm:$0xf]
      %v4696 = vld [vmem:[%s4681 + $0x38] sm:$0xf]
      %v4697 = vld [vmem:[%s4681 + $0x3c] sm:$0xf]
      %v4698 = vld [vmem:[%s4681 + $0x40] sm:$0xf]
      %v4699 = vld [vmem:[%s4681 + $0x44] sm:$0xf]
      %v4700 = vld [vmem:[%s4681 + $0x48] sm:$0xf]
      %v4701 = vld [vmem:[%s4681 + $0x4c] sm:$0xf]
      %v4702 = vld [vmem:[%s4681 + $0x50] sm:$0xf]
      %v4703 = vld [vmem:[%s4681 + $0x54] sm:$0xf]
      %v4704 = vld [vmem:[%s4681 + $0x58] sm:$0xf]
      %v4705 = vld [vmem:[%s4681 + $0x5c] sm:$0xf]
      %v4706 = vld [vmem:[%s4681 + $0x60] sm:$0xf]
      %v4707 = vld [vmem:[%s4681 + $0x64] sm:$0xf]
      %v4708 = vld [vmem:[%s4681 + $0x68] sm:$0xf]
      %v4709 = vld [vmem:[%s4681 + $0x6c] sm:$0xf]
      %v4710 = vld [vmem:[%s4681 + $0x70] sm:$0xf]
      %v4711 = vld [vmem:[%s4681 + $0x74] sm:$0xf]
      %v4712 = vld [vmem:[%s4681 + $0x78] sm:$0xf]
      %v4713 = vld [vmem:[%s4681 + $0x7c] sm:$0xf]
      %v4714 = vld [vmem:[%s2 + $0x200] sm:$0xf]
      %v4715 = vld [vmem:[%s2 + $0x204] sm:$0xf]
      %v4716 = vld [vmem:[%s2 + $0x208] sm:$0xf]
      %v4717 = vld [vmem:[%s2 + $0x20c] sm:$0xf]
      %v4718 = vld [vmem:[%s2 + $0x210] sm:$0xf]
      %v4719 = vld [vmem:[%s2 + $0x214] sm:$0xf]
      %v4720 = vld [vmem:[%s2 + $0x218] sm:$0xf]
      %v4721 = vld [vmem:[%s2 + $0x21c] sm:$0xf]
      %v4722 = vld [vmem:[%s2 + $0x220] sm:$0xf]
      %v4723 = vld [vmem:[%s2 + $0x224] sm:$0xf]
      %v4724 = vld [vmem:[%s2 + $0x228] sm:$0xf]
      %v4725 = vld [vmem:[%s2 + $0x22c] sm:$0xf]
      %v4726 = vld [vmem:[%s2 + $0x230] sm:$0xf]
      %v4727 = vld [vmem:[%s2 + $0x234] sm:$0xf]
      %v4728 = vld [vmem:[%s2 + $0x238] sm:$0xf]
      %v4729 = vld [vmem:[%s2 + $0x23c] sm:$0xf]
      %v4762 = vunpack.c.l.b16 %v4682
      %v4763 = vunpack.c.l.b16 %v4683
      %v4764 = vunpack.c.l.b16 %v4684
      %v4765 = vunpack.c.l.b16 %v4685
      %v4766 = vunpack.c.l.b16 %v4686
      %v4767 = vunpack.c.l.b16 %v4687
      %v4768 = vunpack.c.l.b16 %v4688
      %v4769 = vunpack.c.l.b16 %v4689
      %v4770 = vunpack.c.l.b16 %v4690
      %v4771 = vunpack.c.l.b16 %v4691
      %v4772 = vunpack.c.l.b16 %v4692
      %v4773 = vunpack.c.l.b16 %v4693
      %v4774 = vunpack.c.l.b16 %v4694
      %v4775 = vunpack.c.l.b16 %v4695
      %v4776 = vunpack.c.l.b16 %v4696
      %v4777 = vunpack.c.l.b16 %v4697
      %v4778 = vunpack.c.l.b16 %v4698
      %v4779 = vunpack.c.l.b16 %v4699
      %v4780 = vunpack.c.l.b16 %v4700
      %v4781 = vunpack.c.l.b16 %v4701
      %v4782 = vunpack.c.l.b16 %v4702
      %v4783 = vunpack.c.l.b16 %v4703
      %v4784 = vunpack.c.l.b16 %v4704
      %v4785 = vunpack.c.l.b16 %v4705
      %v4786 = vunpack.c.l.b16 %v4706
      %v4787 = vunpack.c.l.b16 %v4707
      %v4788 = vunpack.c.l.b16 %v4708
      %v4789 = vunpack.c.l.b16 %v4709
      %v4790 = vunpack.c.l.b16 %v4710
      %v4791 = vunpack.c.l.b16 %v4711
      %v4792 = vunpack.c.l.b16 %v4712
      %v4793 = vunpack.c.l.b16 %v4713
      %v4794 = vpack.c.b16 %v4763, %v4762
      %v4795 = vpack.c.b16 %v4765, %v4764
      %v4796 = vpack.c.b16 %v4767, %v4766
      %v4797 = vpack.c.b16 %v4769, %v4768
      %v4798 = vpack.c.b16 %v4771, %v4770
      %v4799 = vpack.c.b16 %v4773, %v4772
      %v4800 = vpack.c.b16 %v4775, %v4774
      %v4801 = vpack.c.b16 %v4777, %v4776
      %v4802 = vpack.c.b16 %v4779, %v4778
      %v4803 = vpack.c.b16 %v4781, %v4780
      %v4804 = vpack.c.b16 %v4783, %v4782
      %v4805 = vpack.c.b16 %v4785, %v4784
      %v4806 = vpack.c.b16 %v4787, %v4786
      %v4807 = vpack.c.b16 %v4789, %v4788
      %v4808 = vpack.c.b16 %v4791, %v4790
      %v4809 = vpack.c.b16 %v4793, %v4792
      %v4842 = vunpack.c.l.b16 %v4714
      %v4843 = vunpack.c.l.b16 %v4715
      %v4844 = vunpack.c.l.b16 %v4716
      %v4845 = vunpack.c.l.b16 %v4717
      %v4846 = vunpack.c.l.b16 %v4718
      %v4847 = vunpack.c.l.b16 %v4719
      %v4848 = vunpack.c.l.b16 %v4720
      %v4849 = vunpack.c.l.b16 %v4721
      %v4850 = vunpack.c.l.b16 %v4722
      %v4851 = vunpack.c.l.b16 %v4723
      %v4852 = vunpack.c.l.b16 %v4724
      %v4853 = vunpack.c.l.b16 %v4725
      %v4854 = vunpack.c.l.b16 %v4726
      %v4855 = vunpack.c.l.b16 %v4727
      %v4856 = vunpack.c.l.b16 %v4728
      %v4857 = vunpack.c.l.b16 %v4729
      %v4858 = vpack.c.b16 %v4843, %v4842
      %v4859 = vpack.c.b16 %v4845, %v4844
      %v4860 = vpack.c.b16 %v4847, %v4846
      %v4861 = vpack.c.b16 %v4849, %v4848
      %v4862 = vpack.c.b16 %v4851, %v4850
      %v4863 = vpack.c.b16 %v4853, %v4852
      %v4864 = vpack.c.b16 %v4855, %v4854
      %v4865 = vpack.c.b16 %v4857, %v4856
      %4874 = vmatprep.subr.bf16.mxu0 0
      %4875 = vmatpush1.bf16.msra.mxu0 %v4865
      %4876 = vmatprep.subr.bf16.mxu0 0
      %4877 = vmatpush1.bf16.msra.mxu0 %v4864
      %4878 = vmatprep.subr.bf16.mxu0 0
      %4879 = vmatpush1.bf16.msra.mxu0 %v4863
      %4880 = vmatprep.subr.bf16.mxu0 0
      %4881 = vmatpush1.bf16.msra.mxu0 %v4862
      %4882 = vmatprep.subr.bf16.mxu0 0
      %4883 = vmatpush1.bf16.msra.mxu0 %v4861
      %4884 = vmatprep.subr.bf16.mxu0 0
      %4885 = vmatpush1.bf16.msra.mxu0 %v4860
      %4886 = vmatprep.subr.bf16.mxu0 0
      %4887 = vmatpush1.bf16.msra.mxu0 %v4859
      %4888 = vmatprep.subr.bf16.mxu0 0
      %4889 = vmatpush1.bf16.msra.mxu0 %v4858
      %4890 = vmatprep.subr.bf16.mxu0 0
      %4891 = vmatpush2.bf16.msra.mxu0 0
      %4892 = vmatprep.subr.bf16.mxu0 0
      %4893 = vmatpush2.bf16.msra.mxu0 0
      %4894 = vmatprep.subr.bf16.mxu0 0
      %4895 = vmatpush2.bf16.msra.mxu0 0
      %4896 = vmatprep.subr.bf16.mxu0 0
      %4897 = vmatpush2.bf16.msra.mxu0 0
      %4898 = vmatprep.subr.bf16.mxu0 0
      %4899 = vmatpush2.bf16.msra.mxu0 0
      %4900 = vmatprep.subr.bf16.mxu0 0
      %4901 = vmatpush2.bf16.msra.mxu0 0
      %4902 = vmatprep.subr.bf16.mxu0 0
      %4903 = vmatpush2.bf16.msra.mxu0 0
      %4904 = vmatprep.subr.bf16.mxu0 0
      %4905 = vmatpush2.bf16.msra.mxu0 0
      %4906 = vmatprep.mubr.bf16.mxu0 0
      %4907 = vmatmul.mubr.bf16.gmra.mxu0 %v4794
      %v4908 = vpop.f32.mrf.mxu0
      %v4909 = vadd.f32 0.0, %v4908
      %v4910 = vpop.f32.mrf.mxu0
      %v4911 = vpop.f32.mrf.mxu0
      %v4912 = vadd.f32 0.0, %v4911
      %v4913 = vpop.f32.mrf.mxu0
      %4914 = vmatprep.mubr.bf16.mxu0 0
      %4915 = vmatmul.mubr.bf16.gmra.mxu0 %v4795
      %v4916 = vpop.f32.mrf.mxu0
      %v4917 = vadd.f32 0.0, %v4916
      %v4918 = vpop.f32.mrf.mxu0
      %v4919 = vpop.f32.mrf.mxu0
      %v4920 = vadd.f32 0.0, %v4919
      %v4921 = vpop.f32.mrf.mxu0
      %4922 = vmatprep.mubr.bf16.mxu0 0
      %4923 = vmatmul.mubr.bf16.gmra.mxu0 %v4796
      %v4924 = vpop.f32.mrf.mxu0
      %v4925 = vadd.f32 0.0, %v4924
      %v4926 = vpop.f32.mrf.mxu0
      %v4927 = vpop.f32.mrf.mxu0
      %v4928 = vadd.f32 0.0, %v4927
      %v4929 = vpop.f32.mrf.mxu0
      %4930 = vmatprep.mubr.bf16.mxu0 0
      %4931 = vmatmul.mubr.bf16.gmra.mxu0 %v4797
      %v4932 = vpop.f32.mrf.mxu0
      %v4933 = vadd.f32 0.0, %v4932
      %v4934 = vpop.f32.mrf.mxu0
      %v4935 = vpop.f32.mrf.mxu0
      %v4936 = vadd.f32 0.0, %v4935
      %v4937 = vpop.f32.mrf.mxu0
      %4938 = vmatprep.mubr.bf16.mxu0 0
      %4939 = vmatmul.mubr.bf16.gmra.mxu0 %v4798
      %v4940 = vpop.f32.mrf.mxu0
      %v4941 = vadd.f32 0.0, %v4940
      %v4942 = vpop.f32.mrf.mxu0
      %v4943 = vpop.f32.mrf.mxu0
      %v4944 = vadd.f32 0.0, %v4943
      %v4945 = vpop.f32.mrf.mxu0
      %4946 = vmatprep.mubr.bf16.mxu0 0
      %4947 = vmatmul.mubr.bf16.gmra.mxu0 %v4799
      %v4948 = vpop.f32.mrf.mxu0
      %v4949 = vadd.f32 0.0, %v4948
      %v4950 = vpop.f32.mrf.mxu0
      %v4951 = vpop.f32.mrf.mxu0
      %v4952 = vadd.f32 0.0, %v4951
      %v4953 = vpop.f32.mrf.mxu0
      %4954 = vmatprep.mubr.bf16.mxu0 0
      %4955 = vmatmul.mubr.bf16.gmra.mxu0 %v4800
      %v4956 = vpop.f32.mrf.mxu0
      %v4957 = vadd.f32 0.0, %v4956
      %v4958 = vpop.f32.mrf.mxu0
      %v4959 = vpop.f32.mrf.mxu0
      %v4960 = vadd.f32 0.0, %v4959
      %v4961 = vpop.f32.mrf.mxu0
      %4962 = vmatprep.mubr.bf16.mxu0 0
      %4963 = vmatmul.mubr.bf16.gmra.mxu0 %v4801
      %v4964 = vpop.f32.mrf.mxu0
      %v4965 = vadd.f32 0.0, %v4964
      %v4966 = vpop.f32.mrf.mxu0
      %v4967 = vpop.f32.mrf.mxu0
      %v4968 = vadd.f32 0.0, %v4967
      %v4969 = vpop.f32.mrf.mxu0
      %4970 = vmatprep.mubr.bf16.mxu0 0
      %4971 = vmatmul.mubr.bf16.gmra.mxu0 %v4802
      %v4972 = vpop.f32.mrf.mxu0
      %v4973 = vadd.f32 0.0, %v4972
      %v4974 = vpop.f32.mrf.mxu0
      %v4975 = vpop.f32.mrf.mxu0
      %v4976 = vadd.f32 0.0, %v4975
      %v4977 = vpop.f32.mrf.mxu0
      %4978 = vmatprep.mubr.bf16.mxu0 0
      %4979 = vmatmul.mubr.bf16.gmra.mxu0 %v4803
      %v4980 = vpop.f32.mrf.mxu0
      %v4981 = vadd.f32 0.0, %v4980
      %v4982 = vpop.f32.mrf.mxu0
      %v4983 = vpop.f32.mrf.mxu0
      %v4984 = vadd.f32 0.0, %v4983
      %v4985 = vpop.f32.mrf.mxu0
      %4986 = vmatprep.mubr.bf16.mxu0 0
      %4987 = vmatmul.mubr.bf16.gmra.mxu0 %v4804
      %v4988 = vpop.f32.mrf.mxu0
      %v4989 = vadd.f32 0.0, %v4988
      %v4990 = vpop.f32.mrf.mxu0
      %v4991 = vpop.f32.mrf.mxu0
      %v4992 = vadd.f32 0.0, %v4991
      %v4993 = vpop.f32.mrf.mxu0
      %4994 = vmatprep.mubr.bf16.mxu0 0
      %4995 = vmatmul.mubr.bf16.gmra.mxu0 %v4805
      %v4996 = vpop.f32.mrf.mxu0
      %v4997 = vadd.f32 0.0, %v4996
      %v4998 = vpop.f32.mrf.mxu0
      %v4999 = vpop.f32.mrf.mxu0
      %v5000 = vadd.f32 0.0, %v4999
      %v5001 = vpop.f32.mrf.mxu0
      %5002 = vmatprep.mubr.bf16.mxu0 0
      %5003 = vmatmul.mubr.bf16.gmra.mxu0 %v4806
      %v5004 = vpop.f32.mrf.mxu0
      %v5005 = vadd.f32 0.0, %v5004
      %v5006 = vpop.f32.mrf.mxu0
      %v5007 = vpop.f32.mrf.mxu0
      %v5008 = vadd.f32 0.0, %v5007
      %v5009 = vpop.f32.mrf.mxu0
      %5010 = vmatprep.mubr.bf16.mxu0 0
      %5011 = vmatmul.mubr.bf16.gmra.mxu0 %v4807
      %v5012 = vpop.f32.mrf.mxu0
      %v5013 = vadd.f32 0.0, %v5012
      %v5014 = vpop.f32.mrf.mxu0
      %v5015 = vpop.f32.mrf.mxu0
      %v5016 = vadd.f32 0.0, %v5015
      %v5017 = vpop.f32.mrf.mxu0
      %5018 = vmatprep.mubr.bf16.mxu0 0
      %5019 = vmatmul.mubr.bf16.gmra.mxu0 %v4808
      %v5020 = vpop.f32.mrf.mxu0
      %v5021 = vadd.f32 0.0, %v5020
      %v5022 = vpop.f32.mrf.mxu0
      %v5023 = vpop.f32.mrf.mxu0
      %v5024 = vadd.f32 0.0, %v5023
      %v5025 = vpop.f32.mrf.mxu0
      %5026 = vmatprep.mubr.bf16.mxu0 0
      %5027 = vmatmul.mubr.bf16.gmra.mxu0 %v4809
      %v5028 = vpop.f32.mrf.mxu0
      %v5029 = vadd.f32 0.0, %v5028
      %v5030 = vpop.f32.mrf.mxu0
      %v5031 = vpop.f32.mrf.mxu0
      %v5032 = vadd.f32 0.0, %v5031
      %v5033 = vpop.f32.mrf.mxu0
      %5034 = vdwg.mxu0
      %v5035 = vadd.f32 %v4649, %v4909
      %v5036 = vadd.f32 %v4650, %v4912
      %v5037 = vadd.f32 %v4651, %v4917
      %v5038 = vadd.f32 %v4652, %v4920
      %v5039 = vadd.f32 %v4653, %v4925
      %v5040 = vadd.f32 %v4654, %v4928
      %v5041 = vadd.f32 %v4655, %v4933
      %v5042 = vadd.f32 %v4656, %v4936
      %v5043 = vadd.f32 %v4657, %v4941
      %v5044 = vadd.f32 %v4658, %v4944
      %v5045 = vadd.f32 %v4659, %v4949
      %v5046 = vadd.f32 %v4660, %v4952
      %v5047 = vadd.f32 %v4661, %v4957
      %v5048 = vadd.f32 %v4662, %v4960
      %v5049 = vadd.f32 %v4663, %v4965
      %v5050 = vadd.f32 %v4664, %v4968
      %v5051 = vadd.f32 %v4665, %v4973
      %v5052 = vadd.f32 %v4666, %v4976
      %v5053 = vadd.f32 %v4667, %v4981
      %v5054 = vadd.f32 %v4668, %v4984
      %v5055 = vadd.f32 %v4669, %v4989
      %v5056 = vadd.f32 %v4670, %v4992
      %v5057 = vadd.f32 %v4671, %v4997
      %v5058 = vadd.f32 %v4672, %v5000
      %v5059 = vadd.f32 %v4673, %v5005
      %v5060 = vadd.f32 %v4674, %v5008
      %v5061 = vadd.f32 %v4675, %v5013
      %v5062 = vadd.f32 %v4676, %v5016
      %v5063 = vadd.f32 %v4677, %v5021
      %v5064 = vadd.f32 %v4678, %v5024
      %v5065 = vadd.f32 %v4679, %v5029
      %v5066 = vadd.f32 %v4680, %v5032
      %v5067 = vld [vmem:[%s7] sm:$0xff]
      %v5068 = vld [vmem:[%s7 + $0x8] sm:$0xff]
      %v5069 = vld [vmem:[%s7 + $0x10] sm:$0xff]
      %v5070 = vld [vmem:[%s7 + $0x18] sm:$0xff]
      %v5071 = vld [vmem:[%s7 + $0x20] sm:$0xf]
      %v5073 = vsel %vm441, %v5071, 0
      %5075 = vmatprep.subr.mxu0 0.0
      %5076 = vmatpush1.msra.mxu0 0.0
      %5077 = vmatprep.subr.mxu0 0.0
      %5078 = vmatpush1.msra.mxu0 0.0
      %5079 = vmatprep.subr.mxu0 0.0
      %5080 = vmatpush1.msra.mxu0 0.0
      %5081 = vmatprep.subr.mxu0 0.0
      %5082 = vmatpush1.msra.mxu0 0.0
      %5083 = vmatprep.subr.mxu0 0.0
      %5084 = vmatpush1.msra.mxu0 0.0
      %5085 = vmatprep.subr.mxu0 0.0
      %5086 = vmatpush1.msra.mxu0 0.0
      %5087 = vmatprep.subr.mxu0 0.0
      %5088 = vmatpush1.msra.mxu0 0.0
      %5089 = vmatprep.subr.mxu0 0.0
      %5090 = vmatpush1.msra.mxu0 0.0
      %5091 = vmatprep.subr.mxu0 0.0
      %5092 = vmatpush1.msra.mxu0 0.0
      %5093 = vmatprep.subr.mxu0 0.0
      %5094 = vmatpush1.msra.mxu0 0.0
      %5095 = vmatprep.subr.mxu0 0.0
      %5096 = vmatpush1.msra.mxu0 0.0
      %5097 = vmatprep.subr.mxu0 0.0
      %5098 = vmatpush1.msra.mxu0 %v5073
      %5099 = vmatprep.subr.mxu0 0.0
      %5100 = vmatpush1.msra.mxu0 %v5070
      %5101 = vmatprep.subr.mxu0 0.0
      %5102 = vmatpush1.msra.mxu0 %v5069
      %5103 = vmatprep.subr.mxu0 0.0
      %5104 = vmatpush1.msra.mxu0 %v5068
      %5105 = vmatprep.subr.mxu0 0.0
      %5106 = vmatpush1.msra.mxu0 %v5067
      %5107 = vmatprep.subr.mxu0 0.0
      %5108 = vmatpush2.msra.mxu0 0.0
      %5109 = vmatprep.subr.mxu0 0.0
      %5110 = vmatpush2.msra.mxu0 0.0
      %5111 = vmatprep.subr.mxu0 0.0
      %5112 = vmatpush2.msra.mxu0 0.0
      %5113 = vmatprep.subr.mxu0 0.0
      %5114 = vmatpush2.msra.mxu0 0.0
      %5115 = vmatprep.subr.mxu0 0.0
      %5116 = vmatpush2.msra.mxu0 0.0
      %5117 = vmatprep.subr.mxu0 0.0
      %5118 = vmatpush2.msra.mxu0 0.0
      %5119 = vmatprep.subr.mxu0 0.0
      %5120 = vmatpush2.msra.mxu0 0.0
      %5121 = vmatprep.subr.mxu0 0.0
      %5122 = vmatpush2.msra.mxu0 0.0
      %5123 = vmatprep.subr.mxu0 0.0
      %5124 = vmatpush2.msra.mxu0 0.0
      %5125 = vmatprep.subr.mxu0 0.0
      %5126 = vmatpush2.msra.mxu0 0.0
      %5127 = vmatprep.subr.mxu0 0.0
      %5128 = vmatpush2.msra.mxu0 0.0
      %5129 = vmatprep.subr.mxu0 0.0
      %5130 = vmatpush2.msra.mxu0 0.0
      %5131 = vmatprep.subr.mxu0 0.0
      %5132 = vmatpush2.msra.mxu0 0.0
      %5133 = vmatprep.subr.mxu0 0.0
      %5134 = vmatpush2.msra.mxu0 0.0
      %5135 = vmatprep.subr.mxu0 0.0
      %5136 = vmatpush2.msra.mxu0 0.0
      %5137 = vmatprep.subr.mxu0 0.0
      %5138 = vmatpush2.msra.mxu0 0.0
      %5139 = vmatprep.mubr.f32.mxu0 0.0
      %5140 = vmatmul.mubr.f32.gmra.mxu0 %v346
      %v5141 = vpop.f32.mrf.mxu0
      %v5142 = vadd.f32 0.0, %v5141
      %v5143 = vpop.f32.mrf.mxu0
      %5144 = vmatprep.mubr.f32.mxu0 0.0
      %5145 = vmatmul.mubr.f32.gmra.mxu0 %v349
      %v5146 = vpop.f32.mrf.mxu0
      %v5147 = vadd.f32 0.0, %v5146
      %v5148 = vpop.f32.mrf.mxu0
      %5149 = vmatprep.mubr.f32.mxu0 0.0
      %5150 = vmatmul.mubr.f32.gmra.mxu0 %v352
      %v5151 = vpop.f32.mrf.mxu0
      %v5152 = vadd.f32 0.0, %v5151
      %v5153 = vpop.f32.mrf.mxu0
      %5154 = vmatprep.mubr.f32.mxu0 0.0
      %5155 = vmatmul.mubr.f32.gmra.mxu0 %v355
      %v5156 = vpop.f32.mrf.mxu0
      %v5157 = vadd.f32 0.0, %v5156
      %v5158 = vpop.f32.mrf.mxu0
      %5159 = vmatprep.mubr.f32.mxu0 0.0
      %5160 = vmatmul.mubr.f32.gmra.mxu0 %v358
      %v5161 = vpop.f32.mrf.mxu0
      %v5162 = vadd.f32 0.0, %v5161
      %v5163 = vpop.f32.mrf.mxu0
      %5164 = vmatprep.mubr.f32.mxu0 0.0
      %5165 = vmatmul.mubr.f32.gmra.mxu0 %v361
      %v5166 = vpop.f32.mrf.mxu0
      %v5167 = vadd.f32 0.0, %v5166
      %v5168 = vpop.f32.mrf.mxu0
      %5169 = vmatprep.mubr.f32.mxu0 0.0
      %5170 = vmatmul.mubr.f32.gmra.mxu0 %v364
      %v5171 = vpop.f32.mrf.mxu0
      %v5172 = vadd.f32 0.0, %v5171
      %v5173 = vpop.f32.mrf.mxu0
      %5174 = vmatprep.mubr.f32.mxu0 0.0
      %5175 = vmatmul.mubr.f32.gmra.mxu0 %v367
      %v5176 = vpop.f32.mrf.mxu0
      %v5177 = vadd.f32 0.0, %v5176
      %v5178 = vpop.f32.mrf.mxu0
      %5179 = vmatprep.mubr.f32.mxu0 0.0
      %5180 = vmatmul.mubr.f32.gmra.mxu0 %v370
      %v5181 = vpop.f32.mrf.mxu0
      %v5182 = vadd.f32 0.0, %v5181
      %v5183 = vpop.f32.mrf.mxu0
      %5184 = vmatprep.mubr.f32.mxu0 0.0
      %5185 = vmatmul.mubr.f32.gmra.mxu0 %v373
      %v5186 = vpop.f32.mrf.mxu0
      %v5187 = vadd.f32 0.0, %v5186
      %v5188 = vpop.f32.mrf.mxu0
      %5189 = vmatprep.mubr.f32.mxu0 0.0
      %5190 = vmatmul.mubr.f32.gmra.mxu0 %v376
      %v5191 = vpop.f32.mrf.mxu0
      %v5192 = vadd.f32 0.0, %v5191
      %v5193 = vpop.f32.mrf.mxu0
      %5194 = vmatprep.mubr.f32.mxu0 0.0
      %5195 = vmatmul.mubr.f32.gmra.mxu0 %v379
      %v5196 = vpop.f32.mrf.mxu0
      %v5197 = vadd.f32 0.0, %v5196
      %v5198 = vpop.f32.mrf.mxu0
      %5199 = vmatprep.mubr.f32.mxu0 0.0
      %5200 = vmatmul.mubr.f32.gmra.mxu0 %v382
      %v5201 = vpop.f32.mrf.mxu0
      %v5202 = vadd.f32 0.0, %v5201
      %v5203 = vpop.f32.mrf.mxu0
      %5204 = vmatprep.mubr.f32.mxu0 0.0
      %5205 = vmatmul.mubr.f32.gmra.mxu0 %v385
      %v5206 = vpop.f32.mrf.mxu0
      %v5207 = vadd.f32 0.0, %v5206
      %v5208 = vpop.f32.mrf.mxu0
      %5209 = vmatprep.mubr.f32.mxu0 0.0
      %5210 = vmatmul.mubr.f32.gmra.mxu0 %v388
      %v5211 = vpop.f32.mrf.mxu0
      %v5212 = vadd.f32 0.0, %v5211
      %v5213 = vpop.f32.mrf.mxu0
      %5214 = vmatprep.mubr.f32.mxu0 0.0
      %5215 = vmatmul.mubr.f32.gmra.mxu0 %v391
      %v5216 = vpop.f32.mrf.mxu0
      %v5217 = vadd.f32 0.0, %v5216
      %v5218 = vpop.f32.mrf.mxu0
      %5219 = vmatprep.mubr.f32.mxu0 0.0
      %5220 = vmatmul.mubr.f32.gmra.mxu0 %v394
      %v5221 = vpop.f32.mrf.mxu0
      %v5222 = vadd.f32 0.0, %v5221
      %v5223 = vpop.f32.mrf.mxu0
      %5224 = vmatprep.mubr.f32.mxu0 0.0
      %5225 = vmatmul.mubr.f32.gmra.mxu0 %v397
      %v5226 = vpop.f32.mrf.mxu0
      %v5227 = vadd.f32 0.0, %v5226
      %v5228 = vpop.f32.mrf.mxu0
      %5229 = vmatprep.mubr.f32.mxu0 0.0
      %5230 = vmatmul.mubr.f32.gmra.mxu0 %v400
      %v5231 = vpop.f32.mrf.mxu0
      %v5232 = vadd.f32 0.0, %v5231
      %v5233 = vpop.f32.mrf.mxu0
      %5234 = vmatprep.mubr.f32.mxu0 0.0
      %5235 = vmatmul.mubr.f32.gmra.mxu0 %v403
      %v5236 = vpop.f32.mrf.mxu0
      %v5237 = vadd.f32 0.0, %v5236
      %v5238 = vpop.f32.mrf.mxu0
      %5239 = vmatprep.mubr.f32.mxu0 0.0
      %5240 = vmatmul.mubr.f32.gmra.mxu0 %v406
      %v5241 = vpop.f32.mrf.mxu0
      %v5242 = vadd.f32 0.0, %v5241
      %v5243 = vpop.f32.mrf.mxu0
      %5244 = vmatprep.mubr.f32.mxu0 0.0
      %5245 = vmatmul.mubr.f32.gmra.mxu0 %v409
      %v5246 = vpop.f32.mrf.mxu0
      %v5247 = vadd.f32 0.0, %v5246
      %v5248 = vpop.f32.mrf.mxu0
      %5249 = vmatprep.mubr.f32.mxu0 0.0
      %5250 = vmatmul.mubr.f32.gmra.mxu0 %v412
      %v5251 = vpop.f32.mrf.mxu0
      %v5252 = vadd.f32 0.0, %v5251
      %v5253 = vpop.f32.mrf.mxu0
      %5254 = vmatprep.mubr.f32.mxu0 0.0
      %5255 = vmatmul.mubr.f32.gmra.mxu0 %v415
      %v5256 = vpop.f32.mrf.mxu0
      %v5257 = vadd.f32 0.0, %v5256
      %v5258 = vpop.f32.mrf.mxu0
      %5259 = vmatprep.mubr.f32.mxu0 0.0
      %5260 = vmatmul.mubr.f32.gmra.mxu0 %v418
      %v5261 = vpop.f32.mrf.mxu0
      %v5262 = vadd.f32 0.0, %v5261
      %v5263 = vpop.f32.mrf.mxu0
      %5264 = vmatprep.mubr.f32.mxu0 0.0
      %5265 = vmatmul.mubr.f32.gmra.mxu0 %v421
      %v5266 = vpop.f32.mrf.mxu0
      %v5267 = vadd.f32 0.0, %v5266
      %v5268 = vpop.f32.mrf.mxu0
      %5269 = vmatprep.mubr.f32.mxu0 0.0
      %5270 = vmatmul.mubr.f32.gmra.mxu0 %v424
      %v5271 = vpop.f32.mrf.mxu0
      %v5272 = vadd.f32 0.0, %v5271
      %v5273 = vpop.f32.mrf.mxu0
      %5274 = vmatprep.mubr.f32.mxu0 0.0
      %5275 = vmatmul.mubr.f32.gmra.mxu0 %v427
      %v5276 = vpop.f32.mrf.mxu0
      %v5277 = vadd.f32 0.0, %v5276
      %v5278 = vpop.f32.mrf.mxu0
      %5279 = vmatprep.mubr.f32.mxu0 0.0
      %5280 = vmatmul.mubr.f32.gmra.mxu0 %v430
      %v5281 = vpop.f32.mrf.mxu0
      %v5282 = vadd.f32 0.0, %v5281
      %v5283 = vpop.f32.mrf.mxu0
      %5284 = vmatprep.mubr.f32.mxu0 0.0
      %5285 = vmatmul.mubr.f32.gmra.mxu0 %v433
      %v5286 = vpop.f32.mrf.mxu0
      %v5287 = vadd.f32 0.0, %v5286
      %v5288 = vpop.f32.mrf.mxu0
      %5289 = vmatprep.mubr.f32.mxu0 0.0
      %5290 = vmatmul.mubr.f32.gmra.mxu0 %v436
      %v5291 = vpop.f32.mrf.mxu0
      %v5292 = vadd.f32 0.0, %v5291
      %v5293 = vpop.f32.mrf.mxu0
      %5294 = vmatprep.mubr.f32.mxu0 0.0
      %5295 = vmatmul.mubr.f32.gmra.mxu0 %v439
      %v5296 = vpop.f32.mrf.mxu0
      %v5297 = vadd.f32 0.0, %v5296
      %v5298 = vpop.f32.mrf.mxu0
      %5299 = vdwg.mxu0
      %v5300 = vld [vmem:[%s5] sm:$0x1]
      %v5302 = vlaneseq
      %v5303 = vshrl.u32 %v5302, 7
      %v5304 = vsub.s32 0, %v5303
      %v5305 = vrot.slane %v5300, %v5304
      %v5307 = vmul.f32 %v5035, %v5305
      %v5308 = vmul.f32 %v5036, %v5305
      %v5309 = vmul.f32 %v5037, %v5305
      %v5310 = vmul.f32 %v5038, %v5305
      %v5311 = vmul.f32 %v5039, %v5305
      %v5312 = vmul.f32 %v5040, %v5305
      %v5313 = vmul.f32 %v5041, %v5305
      %v5314 = vmul.f32 %v5042, %v5305
      %v5315 = vmul.f32 %v5043, %v5305
      %v5316 = vmul.f32 %v5044, %v5305
      %v5317 = vmul.f32 %v5045, %v5305
      %v5318 = vmul.f32 %v5046, %v5305
      %v5319 = vmul.f32 %v5047, %v5305
      %v5320 = vmul.f32 %v5048, %v5305
      %v5321 = vmul.f32 %v5049, %v5305
      %v5322 = vmul.f32 %v5050, %v5305
      %v5323 = vmul.f32 %v5051, %v5305
      %v5324 = vmul.f32 %v5052, %v5305
      %v5325 = vmul.f32 %v5053, %v5305
      %v5326 = vmul.f32 %v5054, %v5305
      %v5327 = vmul.f32 %v5055, %v5305
      %v5328 = vmul.f32 %v5056, %v5305
      %v5329 = vmul.f32 %v5057, %v5305
      %v5330 = vmul.f32 %v5058, %v5305
      %v5331 = vmul.f32 %v5059, %v5305
      %v5332 = vmul.f32 %v5060, %v5305
      %v5333 = vmul.f32 %v5061, %v5305
      %v5334 = vmul.f32 %v5062, %v5305
      %v5335 = vmul.f32 %v5063, %v5305
      %v5336 = vmul.f32 %v5064, %v5305
      %v5337 = vmul.f32 %v5065, %v5305
      %v5338 = vmul.f32 %v5066, %v5305
      %v5339 = vld [vmem:[%s6] sm:$0x1]
      %v5341 = vlaneseq
      %v5342 = vshrl.u32 %v5341, 7
      %v5343 = vsub.s32 0, %v5342
      %v5344 = vrot.slane %v5339, %v5343
      %v5346 = vadd.f32 %v5307, %v5344
      %v5347 = vadd.f32 %v5308, %v5344
      %v5348 = vadd.f32 %v5309, %v5344
      %v5349 = vadd.f32 %v5310, %v5344
      %v5350 = vadd.f32 %v5311, %v5344
      %v5351 = vadd.f32 %v5312, %v5344
      %v5352 = vadd.f32 %v5313, %v5344
      %v5353 = vadd.f32 %v5314, %v5344
      %v5354 = vadd.f32 %v5315, %v5344
      %v5355 = vadd.f32 %v5316, %v5344
      %v5356 = vadd.f32 %v5317, %v5344
      %v5357 = vadd.f32 %v5318, %v5344
      %v5358 = vadd.f32 %v5319, %v5344
      %v5359 = vadd.f32 %v5320, %v5344
      %v5360 = vadd.f32 %v5321, %v5344
      %v5361 = vadd.f32 %v5322, %v5344
      %v5362 = vadd.f32 %v5323, %v5344
      %v5363 = vadd.f32 %v5324, %v5344
      %v5364 = vadd.f32 %v5325, %v5344
      %v5365 = vadd.f32 %v5326, %v5344
      %v5366 = vadd.f32 %v5327, %v5344
      %v5367 = vadd.f32 %v5328, %v5344
      %v5368 = vadd.f32 %v5329, %v5344
      %v5369 = vadd.f32 %v5330, %v5344
      %v5370 = vadd.f32 %v5331, %v5344
      %v5371 = vadd.f32 %v5332, %v5344
      %v5372 = vadd.f32 %v5333, %v5344
      %v5373 = vadd.f32 %v5334, %v5344
      %v5374 = vadd.f32 %v5335, %v5344
      %v5375 = vadd.f32 %v5336, %v5344
      %v5376 = vadd.f32 %v5337, %v5344
      %v5377 = vadd.f32 %v5338, %v5344
      %v5378 = vadd.f32 %v5346, %v5142
      %v5379 = vadd.f32 %v5347, %v5147
      %v5380 = vadd.f32 %v5348, %v5152
      %v5381 = vadd.f32 %v5349, %v5157
      %v5382 = vadd.f32 %v5350, %v5162
      %v5383 = vadd.f32 %v5351, %v5167
      %v5384 = vadd.f32 %v5352, %v5172
      %v5385 = vadd.f32 %v5353, %v5177
      %v5386 = vadd.f32 %v5354, %v5182
      %v5387 = vadd.f32 %v5355, %v5187
      %v5388 = vadd.f32 %v5356, %v5192
      %v5389 = vadd.f32 %v5357, %v5197
      %v5390 = vadd.f32 %v5358, %v5202
      %v5391 = vadd.f32 %v5359, %v5207
      %v5392 = vadd.f32 %v5360, %v5212
      %v5393 = vadd.f32 %v5361, %v5217
      %v5394 = vadd.f32 %v5362, %v5222
      %v5395 = vadd.f32 %v5363, %v5227
      %v5396 = vadd.f32 %v5364, %v5232
      %v5397 = vadd.f32 %v5365, %v5237
      %v5398 = vadd.f32 %v5366, %v5242
      %v5399 = vadd.f32 %v5367, %v5247
      %v5400 = vadd.f32 %v5368, %v5252
      %v5401 = vadd.f32 %v5369, %v5257
      %v5402 = vadd.f32 %v5370, %v5262
      %v5403 = vadd.f32 %v5371, %v5267
      %v5404 = vadd.f32 %v5372, %v5272
      %v5405 = vadd.f32 %v5373, %v5277
      %v5406 = vadd.f32 %v5374, %v5282
      %v5407 = vadd.f32 %v5375, %v5287
      %v5408 = vadd.f32 %v5376, %v5292
      %v5409 = vadd.f32 %v5377, %v5297
      %v5410 = vmax.f32 %v5378, 0.0
      %v5411 = vmax.f32 %v5379, 0.0
      %v5412 = vmax.f32 %v5380, 0.0
      %v5413 = vmax.f32 %v5381, 0.0
      %v5414 = vmax.f32 %v5382, 0.0
      %v5415 = vmax.f32 %v5383, 0.0
      %v5416 = vmax.f32 %v5384, 0.0
      %v5417 = vmax.f32 %v5385, 0.0
      %v5418 = vmax.f32 %v5386, 0.0
      %v5419 = vmax.f32 %v5387, 0.0
      %v5420 = vmax.f32 %v5388, 0.0
      %v5421 = vmax.f32 %v5389, 0.0
      %v5422 = vmax.f32 %v5390, 0.0
      %v5423 = vmax.f32 %v5391, 0.0
      %v5424 = vmax.f32 %v5392, 0.0
      %v5425 = vmax.f32 %v5393, 0.0
      %v5426 = vmax.f32 %v5394, 0.0
      %v5427 = vmax.f32 %v5395, 0.0
      %v5428 = vmax.f32 %v5396, 0.0
      %v5429 = vmax.f32 %v5397, 0.0
      %v5430 = vmax.f32 %v5398, 0.0
      %v5431 = vmax.f32 %v5399, 0.0
      %v5432 = vmax.f32 %v5400, 0.0
      %v5433 = vmax.f32 %v5401, 0.0
      %v5434 = vmax.f32 %v5402, 0.0
      %v5435 = vmax.f32 %v5403, 0.0
      %v5436 = vmax.f32 %v5404, 0.0
      %v5437 = vmax.f32 %v5405, 0.0
      %v5438 = vmax.f32 %v5406, 0.0
      %v5439 = vmax.f32 %v5407, 0.0
      %v5440 = vmax.f32 %v5408, 0.0
      %v5441 = vmax.f32 %v5409, 0.0
      %vm5442 = vcmask 64512
      %5443 = vst.msk [vmem:[%s305] sm:$0xff] %vm5442, %v5410
      %5444 = vst.msk [vmem:[%s305 + $0x8] sm:$0xff] %vm5442, %v5411
      %5445 = vst.msk [vmem:[%s305 + $0x10] sm:$0xff] %vm5442, %v5412
      %5446 = vst.msk [vmem:[%s305 + $0x18] sm:$0xff] %vm5442, %v5413
      %5447 = vst.msk [vmem:[%s305 + $0x20] sm:$0xff] %vm5442, %v5414
      %5448 = vst.msk [vmem:[%s305 + $0x28] sm:$0xff] %vm5442, %v5415
      %5449 = vst.msk [vmem:[%s305 + $0x30] sm:$0xff] %vm5442, %v5416
      %5450 = vst.msk [vmem:[%s305 + $0x38] sm:$0xff] %vm5442, %v5417
      %5451 = vst.msk [vmem:[%s305 + $0x40] sm:$0xff] %vm5442, %v5418
      %5452 = vst.msk [vmem:[%s305 + $0x48] sm:$0xff] %vm5442, %v5419
      %5453 = vst.msk [vmem:[%s305 + $0x50] sm:$0xff] %vm5442, %v5420
      %5454 = vst.msk [vmem:[%s305 + $0x58] sm:$0xff] %vm5442, %v5421
      %5455 = vst.msk [vmem:[%s305 + $0x60] sm:$0xff] %vm5442, %v5422
      %5456 = vst.msk [vmem:[%s305 + $0x68] sm:$0xff] %vm5442, %v5423
      %5457 = vst.msk [vmem:[%s305 + $0x70] sm:$0xff] %vm5442, %v5424
      %5458 = vst.msk [vmem:[%s305 + $0x78] sm:$0xff] %vm5442, %v5425
      %5459 = vst.msk [vmem:[%s305 + $0x80] sm:$0xff] %vm5442, %v5426
      %5460 = vst.msk [vmem:[%s305 + $0x88] sm:$0xff] %vm5442, %v5427
      %5461 = vst.msk [vmem:[%s305 + $0x90] sm:$0xff] %vm5442, %v5428
      %5462 = vst.msk [vmem:[%s305 + $0x98] sm:$0xff] %vm5442, %v5429
      %5463 = vst.msk [vmem:[%s305 + $0xa0] sm:$0xff] %vm5442, %v5430
      %5464 = vst.msk [vmem:[%s305 + $0xa8] sm:$0xff] %vm5442, %v5431
      %5465 = vst.msk [vmem:[%s305 + $0xb0] sm:$0xff] %vm5442, %v5432
      %5466 = vst.msk [vmem:[%s305 + $0xb8] sm:$0xff] %vm5442, %v5433
      %5467 = vst.msk [vmem:[%s305 + $0xc0] sm:$0xff] %vm5442, %v5434
      %5468 = vst.msk [vmem:[%s305 + $0xc8] sm:$0xff] %vm5442, %v5435
      %5469 = vst.msk [vmem:[%s305 + $0xd0] sm:$0xff] %vm5442, %v5436
      %5470 = vst.msk [vmem:[%s305 + $0xd8] sm:$0xff] %vm5442, %v5437
      %5471 = vst.msk [vmem:[%s305 + $0xe0] sm:$0xff] %vm5442, %v5438
      %5472 = vst.msk [vmem:[%s305 + $0xe8] sm:$0xff] %vm5442, %v5439
      %5473 = vst.msk [vmem:[%s305 + $0xf0] sm:$0xff] %vm5442, %v5440
      %5474 = vst.msk [vmem:[%s305 + $0xf8] sm:$0xff] %vm5442, %v5441
      %p5475 = scmp.lt.s32.totalorder %s19, 1
      %s5476 = scalar_select %p5475, %s19, 1
      %s5477 = smul.addr %s5476, 32
      %s5478 = smul.addr %s5477, 8
      %s5479 = scalar_lea.vmem %s8, %s5478
      // Predicated region
      $region53: #{basic_block_forward.1} parent=51 // pred_check
        %p5480 = pneg %p210
      $region54: #{basic_block_forward.1} parent=51 // pred_check_branch
        %5482 = sbr.rel (%p5480) target = $region56
      $region55: #{basic_block_forward.1} parent=51 // pred_region
        _
      $region56: #{basic_block_forward.1} parent=51 // pred_fallthru
        _
    $region52: #{basic_block_forward.1} parent=5 // pred_fallthru
      _
    %p5483 = scmp.le.s32.totalorder 2, %s14
    // Predicated region
    $region57: #{basic_block_forward.1} parent=5 // pred_check
      %p5484 = pneg %p5483
    $region58: #{basic_block_forward.1} parent=5 // pred_check_branch
      %5486 = sbr.rel (%p5484) target = $region60
    $region59: #{basic_block_forward.1} parent=5 // pred_region
      %s5487 = ssub.s32 %s14, 2
      // Predicated region
      $region61: #{basic_block_forward.1} parent=59 // pred_check
        %p5488 = pneg %p216
      $region62: #{basic_block_forward.1} parent=59 // pred_check_branch
        %5490 = sbr.rel (%p5488) target = $region64
      $region63: #{basic_block_forward.1} parent=59 // pred_region
        %p5491 = scmp.lt.s32.totalorder %s20, 1
        %s5492 = scalar_select %p5491, %s20, 1
        %s5493 = smul.addr %s5492, 32
        %s5494 = smul.addr %s5493, 8
        %s5495 = scalar_lea.vmem %s8, %s5494
      $region64: #{basic_block_forward.1} parent=59 // pred_fallthru
        _
    $region60: #{basic_block_forward.1} parent=5 // pred_fallthru
      _
  $region6: #{basic_block_forward.1} parent=0 // loop_footer
    %s18 = sadd.s32 1, %s14
  $region7: #{basic_block_forward.1} parent=0 // loop_footer_branch
    %13 = sbr.rel target = $region3
  $region8: #{basic_block_forward.1} parent=0 // loop_exit
    _

</llo_original>
